<compile_context>
chip_gen: v7x
topology: tpu7x:2x2x1
jax: 0.10.0
libtpu: 0.0.40
codegen_flags: <defaults>
</compile_context>

<pallas_src>
import functools

import jax
import jax.numpy as jnp
from jax.experimental import pallas as pl
from jax.experimental.pallas import tpu as pltpu

_INV_SQRT2 = 0.7071067811865476
_LN_EPS = 1e-5


# ----------------------------------------------------------------------------
# Small helpers
# ----------------------------------------------------------------------------
def _layer_norm(v, g, b, eps):
    mu = jnp.mean(v, axis=-1, keepdims=True)
    var = jnp.mean((v - mu) * (v - mu), axis=-1, keepdims=True)
    return (v - mu) * jax.lax.rsqrt(var + eps) * g + b


def _gelu(v):
    # Exact erf GELU, matching nn.GELU() default.
    return 0.5 * v * (1.0 + jax.lax.erf(v * _INV_SQRT2))


def _physical_vmem_bytes():
    # Narrow fallback only for environments where the device query is
    # unavailable (e.g. interpreter); 64 MiB is the smallest per-core VMEM
    # across v5e/v6e/v7x so the fallback is always safe.
    try:
        return int(pltpu.get_tpu_info().vmem_capacity_bytes)
    except Exception:
        return 64 * 1024 * 1024


# ----------------------------------------------------------------------------
# Pallas kernels
# ----------------------------------------------------------------------------
def _patch_embed_kernel(x_ref, w_ref, add_ref, o_ref):
    # x_ref: (1, n1, pd) bf16 (row 0 zeroed = cls slot); w_ref: (pd, d) bf16;
    # add_ref: (n1, d) f32 = [cls + pos[0] ; pos[1:] + linear_bias].
    emb = jnp.dot(x_ref[0], w_ref[...], preferred_element_type=jnp.float32)
    o_ref[0] = (emb + add_ref[...]).astype(o_ref.dtype)  # single aligned store


def _transformer_stack_kernel(
    x_ref, ln1_g, ln1_b, w_qkv, w_o, b_o, ln2_g, ln2_b, w1, b1, w2, b2,
    o_ref, carry, ctx_scr,
    *, batch_tile, heads, dim_head, eps, project_out, pool,
):
    # Grid = (batch_tiles, depth). B_TILE images per grid step; the depth axis
    # walks the layer stack with activations held in the VMEM `carry`.
    l = pl.program_id(1)
    inner = heads * dim_head

    @pl.when(l == 0)
    def _():
        carry[...] = x_ref[...].astype(jnp.float32)

    # Per-image 2-D matmuls; the layer weights (already in VMEM) are reused
    # across all `batch_tile` images of this grid step.
    for b in range(batch_tile):
        x = carry[b]                                               # (n1, d) f32

        # --- PreNorm + multi-head attention ---------------------------------
        xn = _layer_norm(x, ln1_g[0], ln1_b[0], eps).astype(jnp.bfloat16)
        qkv = jnp.dot(xn, w_qkv[0],                                # (n1, 3*inner)
                      preferred_element_type=jnp.float32)
        qkv = qkv.astype(jnp.bfloat16)

        attn_out = None
        for h in range(heads):
            # 1/sqrt(dim_head) is folded into the Q columns of w_qkv at init.
            q = qkv[:, h * dim_head:(h + 1) * dim_head]
            k = qkv[:, inner + h * dim_head: inner + (h + 1) * dim_head]
            v = qkv[:, 2 * inner + h * dim_head: 2 * inner + (h + 1) * dim_head]

            s = jax.lax.dot_general(                               # (n1, n1) f32
                q, k, (((1,), (1,)), ((), ())),
                preferred_element_type=jnp.float32)
            s = s - jnp.max(s, axis=-1, keepdims=True)
            p = jnp.exp(s)
            attn = p * pl.reciprocal(jnp.sum(p, axis=-1, keepdims=True),
                                     approx=True)
            ctx = jnp.dot(attn.astype(jnp.bfloat16), v,            # (n1, dh) f32
                          preferred_element_type=jnp.float32)
            if project_out:
                ctx_scr[:, h * dim_head:(h + 1) * dim_head] = ctx.astype(
                    jnp.bfloat16)
            else:
                # nn.Identity() path: heads == 1 and dim_head == dim.
                attn_out = ctx

        if project_out:
            # Single (n1, inner) @ (inner, d) projection (no per-head matmuls,
            # no H-way sum, no (H, n1, d) intermediate).
            attn_out = (jnp.dot(ctx_scr[...], w_o[0],
                                preferred_element_type=jnp.float32) + b_o[0])
        x = x + attn_out

        # --- PreNorm + FeedForward ------------------------------------------
        xn2 = _layer_norm(x, ln2_g[0], ln2_b[0], eps).astype(jnp.bfloat16)
        h1 = jnp.dot(xn2, w1[0], preferred_element_type=jnp.float32) + b1[0]
        h1 = _gelu(h1)
        ff = jnp.dot(h1.astype(jnp.bfloat16), w2[0],
                     preferred_element_type=jnp.float32) + b2[0]
        carry[b] = x + ff

    @pl.when(l == pl.num_programs(1) - 1)
    def _():
        # Emit only the pooled representation (saves the full-activation
        # HBM write + read-back + separate XLA pooling op).
        if pool == "mean":
            o_ref[...] = jnp.mean(carry[...], axis=1, keepdims=True)
        else:
            o_ref[...] = carry[:, 0:1, :]


def _head_kernel(x_ref, g_ref, b_ref, w_ref, bias_ref, o_ref, *, eps):
    xn = _layer_norm(x_ref[...], g_ref[...], b_ref[...], eps)
    o_ref[...] = (
        jnp.dot(xn.astype(jnp.bfloat16), w_ref[...],
                preferred_element_type=jnp.float32)
        + bias_ref[...]
    ).astype(o_ref.dtype)


# ----------------------------------------------------------------------------
# Pallas wrappers
# ----------------------------------------------------------------------------
def pallas_patch_embed(x1, w, add_tab):
    bsz, n1, pd = x1.shape
    d = w.shape[1]
    return pl.pallas_call(
        _patch_embed_kernel,
        out_shape=jax.ShapeDtypeStruct((bsz, n1, d), jnp.bfloat16),
        grid=(bsz,),
        in_specs=[
            pl.BlockSpec((1, n1, pd), lambda i: (i, 0, 0)),
            pl.BlockSpec((pd, d), lambda i: (0, 0)),     # grid-invariant
            pl.BlockSpec((n1, d), lambda i: (0, 0)),     # grid-invariant
        ],
        out_specs=pl.BlockSpec((1, n1, d), lambda i: (i, 0, 0)),
        compiler_params=pltpu.CompilerParams(dimension_semantics=("parallel",)),
    )(x1, w, add_tab)


def _stack_vmem_need(bt, n1, d, inner, mlp):
    """Rough per-call VMEM requirement (bytes) of the stack kernel."""
    bf16, f32 = 2, 4
    w_layer = (d * 3 * inner + inner * d + d * mlp + mlp * d) * bf16
    small = (6 * d + mlp) * f32
    weights = 2 * (w_layer + small)                   # double-buffered along depth
    io = 2 * bt * n1 * d * bf16 + 2 * bt * d * f32    # x in / pooled out blocks
    carry = bt * n1 * d * f32
    ctx = n1 * inner * bf16
    transients = f32 * (n1 * 3 * inner + 2 * n1 * n1 + n1 * mlp + 4 * n1 * d)
    return weights + io + carry + ctx + transients


def pallas_transformer_stack(x, lp, *, heads, dim_head, pool):
    bsz, n1, d = x.shape
    inner = heads * dim_head
    depth = lp["w_qkv"].shape[0]
    mlp = lp["w1"].shape[2]
    project_out = not (heads == 1 and dim_head == d)

    vmem_phys = _physical_vmem_bytes()
    vmem_cap = int(0.75 * vmem_phys)      # ~48 MiB on v7x, ~96 MiB on v5e/v6e

    # Batch tile: amortize the per-layer weight DMA over several images.
    bt = 8 if vmem_phys >= (100 << 20) else 4
    bt = max(1, min(bt, bsz))
    while bt > 1 and int(1.4 * _stack_vmem_need(bt, n1, d, inner, mlp)) > vmem_cap:
        bt -= 1
    # TODO(synk): if even bt==1 exceeds vmem_cap (very large mlp_dim), tile the
    # FF matmul over mlp_dim chunks inside the kernel.

    bsz_pad = ((bsz + bt - 1) // bt) * bt
    if bsz_pad != bsz:
        x = jnp.concatenate(
            [x, jnp.zeros((bsz_pad - bsz, n1, d), x.dtype)], axis=0)

    vmem_limit = min(
        max(int(1.4 * _stack_vmem_need(bt, n1, d, inner, mlp)), 24 * 1024 * 1024),
        vmem_cap)

    kernel = functools.partial(
        _transformer_stack_kernel,
        batch_tile=bt, heads=heads, dim_head=dim_head,
        eps=_LN_EPS, project_out=project_out, pool=pool,
    )

    def lspec(shape):
        nz = len(shape)
        return pl.BlockSpec(
            (1,) + tuple(shape), lambda i, l, _n=nz: (l,) + (0,) * _n)

    pooled = pl.pallas_call(
        kernel,
        out_shape=jax.ShapeDtypeStruct((bsz_pad, 1, d), jnp.float32),
        grid=(bsz_pad // bt, depth),
        in_specs=[
            pl.BlockSpec((bt, n1, d), lambda i, l: (i, 0, 0)),  # x (read at l==0)
            lspec((1, d)), lspec((1, d)),                       # ln1 gamma/beta
            lspec((d, 3 * inner)),                              # to_qkv (q cols pre-scaled)
            lspec((inner, d)), lspec((1, d)),                   # to_out W, b
            lspec((1, d)), lspec((1, d)),                       # ln2 gamma/beta
            lspec((d, mlp)), lspec((1, mlp)),                   # ff linear 1
            lspec((mlp, d)), lspec((1, d)),                     # ff linear 2
        ],
        out_specs=pl.BlockSpec((bt, 1, d), lambda i, l: (i, 0, 0)),
        scratch_shapes=[
            pltpu.VMEM((bt, n1, d), jnp.float32),               # activation carry
            pltpu.VMEM((n1, inner), jnp.bfloat16),              # per-image head ctx
        ],
        compiler_params=pltpu.CompilerParams(
            dimension_semantics=("parallel", "arbitrary"),
            vmem_limit_bytes=vmem_limit,
        ),
    )(
        x,
        lp["ln1_g"], lp["ln1_b"], lp["w_qkv"],
        lp["w_o"], lp["b_o"], lp["ln2_g"], lp["ln2_b"],
        lp["w1"], lp["b1"], lp["w2"], lp["b2"],
    )
    return pooled[:bsz, 0, :]


def pallas_mlp_head(x, g, beta, w_pad, bias_pad):
    b, d = x.shape
    c_pad = w_pad.shape[1]
    return pl.pallas_call(
        functools.partial(_head_kernel, eps=_LN_EPS),
        out_shape=jax.ShapeDtypeStruct((b, c_pad), jnp.float32),
        grid=(1,),
        in_specs=[
            pl.BlockSpec((b, d), lambda i: (0, 0)),
            pl.BlockSpec((1, d), lambda i: (0, 0)),
            pl.BlockSpec((1, d), lambda i: (0, 0)),
            pl.BlockSpec((d, c_pad), lambda i: (0, 0)),
            pl.BlockSpec((1, c_pad), lambda i: (0, 0)),
        ],
        out_specs=pl.BlockSpec((b, c_pad), lambda i: (0, 0)),
    )(x, g.reshape(1, d), beta.reshape(1, d), w_pad, bias_pad)


# ----------------------------------------------------------------------------
# ViT forward (glue in JAX, hot paths in Pallas)
# ----------------------------------------------------------------------------
def vit_forward(img, params, cfg):
    b, c, H, W = img.shape
    p = cfg["patch_size"]
    hh, ww = H // p, W // p
    n = hh * ww
    pd = p * p * c

    # Rearrange 'b c (h p1) (w p2) -> b (h w) (p1 p2 c)', prepend one zero row
    # per image (the cls slot — the fused patch kernel adds cls + pos there),
    # and cast to bf16 for the MXU.
    x = img.reshape(b, c, hh, p, ww, p)
    x = jnp.transpose(x, (0, 2, 4, 3, 5, 1)).reshape(b, n, pd)
    x = jnp.concatenate([jnp.zeros((b, 1, pd), x.dtype), x], axis=1)
    x = x.astype(jnp.bfloat16)

    # Patch embedding + cls token + positional embedding (one fused kernel).
    # (emb_dropout p = 0.0 -> identity.)
    x = pallas_patch_embed(x, params["patch_w"], params["patch_add"])  # bf16

    # Transformer stack + pooling fused in one batch-tiled Pallas call.
    pooled = pallas_transformer_stack(
        x, params["layers"], heads=cfg["heads"], dim_head=cfg["dim_head"],
        pool=cfg["pool"],
    )                                                                  # (b, dim) f32

    # mlp_head = LayerNorm + Linear (lane-padded classifier, padded at init).
    logits = pallas_mlp_head(
        pooled, params["head_ln_g"], params["head_ln_b"],
        params["head_w_pad"], params["head_b_pad"],
    )
    return logits[:, : cfg["num_classes"]]


# ----------------------------------------------------------------------------
# Deterministic parameter init (weights stored bf16; scale / pad folded in)
# ----------------------------------------------------------------------------
def init_params(key, cfg):
    c = cfg["channels"]
    p = cfg["patch_size"]
    dim, depth = cfg["dim"], cfg["depth"]
    heads, dim_head = cfg["heads"], cfg["dim_head"]
    mlp_dim, num_classes = cfg["mlp_dim"], cfg["num_classes"]
    nh = cfg["image_size"] // p
    num_patches = nh * nh
    patch_dim = c * p * p
    inner = heads * dim_head

    keys = iter(jax.random.split(key, 16))

    def rnd(shape, scale=0.02):
        return jax.random.normal(next(keys), shape, jnp.float32) * scale

    patch_w = rnd((patch_dim, dim))
    patch_b = jnp.zeros((dim,), jnp.float32)
    cls_token = rnd((1, 1, dim), 1.0)
    pos_embedding = rnd((1, num_patches + 1, dim), 1.0)

    # Fused additive table for the patch-embed kernel: row 0 (matching the
    # zero-padded cls input row) carries cls + pos[0] (no linear bias there);
    # rows 1..n carry pos[1:] + linear bias.
    pos = pos_embedding[0, : num_patches + 1]
    patch_add = jnp.concatenate(
        [cls_token[0] + pos[0:1], pos[1:] + patch_b[None, :]], axis=0)

    # to_qkv weight (dim, 3*inner) with the 1/sqrt(dim_head) attention scale
    # folded into the Q columns (free at init).
    w_qkv = rnd((depth, dim, 3 * inner))
    w_qkv = w_qkv.at[:, :, :inner].multiply(dim_head ** -0.5)

    # Classifier, lane-padded once to a multiple of 128 (hoisted out of fwd).
    head_w = rnd((dim, num_classes))
    head_b = jnp.zeros((num_classes,), jnp.float32)
    c_pad = ((num_classes + 127) // 128) * 128
    head_w_pad = jnp.pad(head_w, ((0, 0), (0, c_pad - num_classes)))
    head_b_pad = jnp.pad(head_b, ((0, c_pad - num_classes),)).reshape(1, c_pad)

    params = {
        "patch_w": patch_w.astype(jnp.bfloat16),
        "patch_add": patch_add,                               # (n+1, dim) f32
        "head_ln_g": jnp.ones((dim,), jnp.float32),
        "head_ln_b": jnp.zeros((dim,), jnp.float32),
        "head_w_pad": head_w_pad.astype(jnp.bfloat16),
        "head_b_pad": head_b_pad,
        "layers": {
            "ln1_g": jnp.ones((depth, 1, dim), jnp.float32),
            "ln1_b": jnp.zeros((depth, 1, dim), jnp.float32),
            "w_qkv": w_qkv.astype(jnp.bfloat16),
            "w_o": rnd((depth, inner, dim)).astype(jnp.bfloat16),
            "b_o": jnp.zeros((depth, 1, dim), jnp.float32),
            "ln2_g": jnp.ones((depth, 1, dim), jnp.float32),
            "ln2_b": jnp.zeros((depth, 1, dim), jnp.float32),
            "w1": rnd((depth, dim, mlp_dim)).astype(jnp.bfloat16),
            "b1": jnp.zeros((depth, 1, mlp_dim), jnp.float32),
            "w2": rnd((depth, mlp_dim, dim)).astype(jnp.bfloat16),
            "b2": jnp.zeros((depth, 1, dim), jnp.float32),
        },
    }
    return params


if __name__ == "__main__":
    cfg = dict(
        image_size=16, patch_size=8, num_classes=10, dim=32, depth=2,
        heads=2, dim_head=16, mlp_dim=64, channels=4, pool="cls",
    )
    key = jax.random.PRNGKey(0)
    k_img, k_par = jax.random.split(key)
    img = jax.random.normal(
        k_img, (2, cfg["channels"], cfg["image_size"], cfg["image_size"]),
        jnp.float32,
    )
    params = init_params(k_par, cfg)

    fwd = jax.jit(lambda im, pr: vit_forward(im, pr, cfg))
    logits = fwd(img, params)
    jax.block_until_ready(logits)
    assert logits.shape == (2, cfg["num_classes"])
    print("KERNEL_OK")
</pallas_src>

<mosaic_0001>
module attributes {stable_mosaic.version = 11 : i64} {
  func.func @_patch_embed_kernel(%arg0: i32, %arg1: memref<1x5x256xbf16, #tpu.memory_space<vmem>>, %arg2: memref<256x32xbf16, #tpu.memory_space<vmem>>, %arg3: memref<5x32xf32, #tpu.memory_space<vmem>>, %arg4: memref<1x5x32xbf16, #tpu.memory_space<vmem>>) attributes {dimension_semantics = [#tpu.dimension_semantics<parallel>], iteration_bounds = array<i64: 2>, scalar_prefetch = 0 : i64, scratch_operands = 0 : i64, tpu.core_type = #tpu.core_type<tc>, window_params = [{transform_indices = @transform_0, window_bounds = array<i64: 1, 5, 256>}, {pipeline_mode = #tpu.pipeline_mode<synchronous>, transform_indices = @transform_1, window_bounds = array<i64: 256, 32>}, {pipeline_mode = #tpu.pipeline_mode<synchronous>, transform_indices = @transform_2, window_bounds = array<i64: 5, 32>}, {transform_indices = @transform_3, window_bounds = array<i64: 1, 5, 32>}]} {
    %c0 = arith.constant 0 : index
    %c0_0 = arith.constant 0 : index
    %c0_1 = arith.constant 0 : index
    %0 = vector.load %arg1[%c0, %c0_0, %c0_1] : memref<1x5x256xbf16, #tpu.memory_space<vmem>>, vector<1x5x256xbf16>
    %1 = vector.shape_cast %0 : vector<1x5x256xbf16> to vector<5x256xbf16>
    %c0_2 = arith.constant 0 : index
    %c0_3 = arith.constant 0 : index
    %2 = vector.load %arg2[%c0_2, %c0_3] : memref<256x32xbf16, #tpu.memory_space<vmem>>, vector<256x32xbf16>
    %cst = arith.constant dense<0.000000e+00> : vector<5x32xf32>
    %3 = tpu.matmul %1, %2, %cst {dimension_numbers = #tpu.dot_dimension_numbers<[1], [0], [0], [1], [0, 0, 1, 1], [], []>} : vector<5x256xbf16>, vector<256x32xbf16>, vector<5x32xf32> -> vector<5x32xf32>
    %c0_4 = arith.constant 0 : index
    %c0_5 = arith.constant 0 : index
    %4 = vector.load %arg3[%c0_4, %c0_5] : memref<5x32xf32, #tpu.memory_space<vmem>>, vector<5x32xf32>
    %5 = arith.addf %3, %4 : vector<5x32xf32>
    %6 = arith.truncf %5 : vector<5x32xf32> to vector<5x32xbf16>
    %c0_6 = arith.constant 0 : index
    %c0_7 = arith.constant 0 : index
    %c0_8 = arith.constant 0 : index
    %7 = vector.load %arg4[%c0_6, %c0_7, %c0_8] : memref<1x5x32xbf16, #tpu.memory_space<vmem>>, vector<1x5x32xbf16>
    %8 = vector.shape_cast %7 : vector<1x5x32xbf16> to vector<5x32xbf16>
    %9 = vector.shape_cast %6 : vector<5x32xbf16> to vector<1x5x32xbf16>
    tpu.vector_store %arg4[%c0_6, %c0_7, %c0_8], %9 {strides = array<i32>} : memref<1x5x32xbf16, #tpu.memory_space<vmem>>, vector<1x5x32xbf16>,
    return
  }
  func.func @transform_0(%arg0: i32) -> (i32, i32, i32) {
    %c0_i32 = arith.constant 0 : i32
    %c0_i32_0 = arith.constant 0 : i32
    %c0_i32_1 = arith.constant 0 : i32
    return %arg0, %c0_i32, %c0_i32_0 : i32, i32, i32
  }
  func.func @transform_1(%arg0: i32) -> (i32, i32) {
    %c0_i32 = arith.constant 0 : i32
    %c0_i32_0 = arith.constant 0 : i32
    %c0_i32_1 = arith.constant 0 : i32
    return %c0_i32, %c0_i32_0 : i32, i32
  }
  func.func @transform_2(%arg0: i32) -> (i32, i32) {
    %c0_i32 = arith.constant 0 : i32
    %c0_i32_0 = arith.constant 0 : i32
    %c0_i32_1 = arith.constant 0 : i32
    return %c0_i32, %c0_i32_0 : i32, i32
  }
  func.func @transform_3(%arg0: i32) -> (i32, i32, i32) {
    %c0_i32 = arith.constant 0 : i32
    %c0_i32_0 = arith.constant 0 : i32
    %c0_i32_1 = arith.constant 0 : i32
    return %arg0, %c0_i32, %c0_i32_0 : i32, i32, i32
  }
}

module attributes {stable_mosaic.version = 11 : i64} {
  func.func @_head_kernel(%arg0: i32, %arg1: memref<2x32xf32, #tpu.memory_space<vmem>>, %arg2: memref<1x32xf32, #tpu.memory_space<vmem>>, %arg3: memref<1x32xf32, #tpu.memory_space<vmem>>, %arg4: memref<32x128xbf16, #tpu.memory_space<vmem>>, %arg5: memref<1x128xf32, #tpu.memory_space<vmem>>, %arg6: memref<2x128xf32, #tpu.memory_space<vmem>>) attributes {dimension_semantics = [#tpu.dimension_semantics<arbitrary>], iteration_bounds = array<i64: 1>, scalar_prefetch = 0 : i64, scratch_operands = 0 : i64, tpu.core_type = #tpu.core_type<tc>, window_params = [{pipeline_mode = #tpu.pipeline_mode<synchronous>, transform_indices = @transform_0, window_bounds = array<i64: 2, 32>}, {pipeline_mode = #tpu.pipeline_mode<synchronous>, transform_indices = @transform_1, window_bounds = array<i64: 1, 32>}, {pipeline_mode = #tpu.pipeline_mode<synchronous>, transform_indices = @transform_2, window_bounds = array<i64: 1, 32>}, {pipeline_mode = #tpu.pipeline_mode<synchronous>, transform_indices = @transform_3, window_bounds = array<i64: 32, 128>}, {pipeline_mode = #tpu.pipeline_mode<synchronous>, transform_indices = @transform_4, window_bounds = array<i64: 1, 128>}, {pipeline_mode = #tpu.pipeline_mode<synchronous>, transform_indices = @transform_5, window_bounds = array<i64: 2, 128>}]} {
    %c0 = arith.constant 0 : index
    %c0_0 = arith.constant 0 : index
    %0 = vector.load %arg1[%c0, %c0_0] : memref<2x32xf32, #tpu.memory_space<vmem>>, vector<2x32xf32>
    %c0_1 = arith.constant 0 : index
    %c0_2 = arith.constant 0 : index
    %1 = vector.load %arg2[%c0_1, %c0_2] : memref<1x32xf32, #tpu.memory_space<vmem>>, vector<1x32xf32>
    %c0_3 = arith.constant 0 : index
    %c0_4 = arith.constant 0 : index
    %2 = vector.load %arg3[%c0_3, %c0_4] : memref<1x32xf32, #tpu.memory_space<vmem>>, vector<1x32xf32>
    %cst = arith.constant dense<0.000000e+00> : vector<2xf32>
    %3 = vector.multi_reduction <add>, %0, %cst [1] : vector<2x32xf32> to vector<2xf32>
    %4 = vector.shape_cast %3 : vector<2xf32> to vector<2x1xf32>
    %cst_5 = arith.constant 3.200000e+01 : f32
    %5 = vector.broadcast %cst_5 : f32 to vector<2x1xf32>
    %6 = arith.divf %4, %5 : vector<2x1xf32>
    %7 = vector.broadcast %6 : vector<2x1xf32> to vector<2x32xf32>
    %8 = arith.subf %0, %7 : vector<2x32xf32>
    %9 = vector.broadcast %6 : vector<2x1xf32> to vector<2x32xf32>
    %10 = arith.subf %0, %9 : vector<2x32xf32>
    %11 = arith.mulf %8, %10 : vector<2x32xf32>
    %cst_6 = arith.constant dense<0.000000e+00> : vector<2xf32>
    %12 = vector.multi_reduction <add>, %11, %cst_6 [1] : vector<2x32xf32> to vector<2xf32>
    %13 = vector.shape_cast %12 : vector<2xf32> to vector<2x1xf32>
    %cst_7 = arith.constant 3.200000e+01 : f32
    %14 = vector.broadcast %cst_7 : f32 to vector<2x1xf32>
    %15 = arith.divf %13, %14 : vector<2x1xf32>
    %16 = vector.broadcast %6 : vector<2x1xf32> to vector<2x32xf32>
    %17 = arith.subf %0, %16 : vector<2x32xf32>
    %cst_8 = arith.constant 9.99999974E-6 : f32
    %18 = vector.broadcast %cst_8 : f32 to vector<2x1xf32>
    %19 = arith.addf %15, %18 : vector<2x1xf32>
    %20 = math.rsqrt %19 : vector<2x1xf32>
    %21 = vector.broadcast %20 : vector<2x1xf32> to vector<2x32xf32>
    %22 = arith.mulf %17, %21 : vector<2x32xf32>
    %23 = vector.broadcast %1 : vector<1x32xf32> to vector<2x32xf32>
    %24 = arith.mulf %22, %23 : vector<2x32xf32>
    %25 = vector.broadcast %2 : vector<1x32xf32> to vector<2x32xf32>
    %26 = arith.addf %24, %25 : vector<2x32xf32>
    %27 = arith.truncf %26 : vector<2x32xf32> to vector<2x32xbf16>
    %c0_9 = arith.constant 0 : index
    %c0_10 = arith.constant 0 : index
    %28 = vector.load %arg4[%c0_9, %c0_10] : memref<32x128xbf16, #tpu.memory_space<vmem>>, vector<32x128xbf16>
    %cst_11 = arith.constant dense<0.000000e+00> : vector<2x128xf32>
    %29 = tpu.matmul %27, %28, %cst_11 {dimension_numbers = #tpu.dot_dimension_numbers<[1], [0], [0], [1], [0, 0, 1, 1], [], []>} : vector<2x32xbf16>, vector<32x128xbf16>, vector<2x128xf32> -> vector<2x128xf32>
    %c0_12 = arith.constant 0 : index
    %c0_13 = arith.constant 0 : index
    %30 = vector.load %arg5[%c0_12, %c0_13] : memref<1x128xf32, #tpu.memory_space<vmem>>, vector<1x128xf32>
    %31 = vector.broadcast %30 : vector<1x128xf32> to vector<2x128xf32>
    %32 = arith.addf %29, %31 : vector<2x128xf32>
    %c0_14 = arith.constant 0 : index
    %c0_15 = arith.constant 0 : index
    %33 = vector.load %arg6[%c0_14, %c0_15] : memref<2x128xf32, #tpu.memory_space<vmem>>, vector<2x128xf32>
    tpu.vector_store %arg6[%c0_14, %c0_15], %32 {strides = array<i32>} : memref<2x128xf32, #tpu.memory_space<vmem>>, vector<2x128xf32>,
    return
  }
  func.func @transform_0(%arg0: i32) -> (i32, i32) {
    %c0_i32 = arith.constant 0 : i32
    %c0_i32_0 = arith.constant 0 : i32
    %c0_i32_1 = arith.constant 0 : i32
    return %c0_i32, %c0_i32_0 : i32, i32
  }
  func.func @transform_1(%arg0: i32) -> (i32, i32) {
    %c0_i32 = arith.constant 0 : i32
    %c0_i32_0 = arith.constant 0 : i32
    %c0_i32_1 = arith.constant 0 : i32
    return %c0_i32, %c0_i32_0 : i32, i32
  }
  func.func @transform_2(%arg0: i32) -> (i32, i32) {
    %c0_i32 = arith.constant 0 : i32
    %c0_i32_0 = arith.constant 0 : i32
    %c0_i32_1 = arith.constant 0 : i32
    return %c0_i32, %c0_i32_0 : i32, i32
  }
  func.func @transform_3(%arg0: i32) -> (i32, i32) {
    %c0_i32 = arith.constant 0 : i32
    %c0_i32_0 = arith.constant 0 : i32
    %c0_i32_1 = arith.constant 0 : i32
    return %c0_i32, %c0_i32_0 : i32, i32
  }
  func.func @transform_4(%arg0: i32) -> (i32, i32) {
    %c0_i32 = arith.constant 0 : i32
    %c0_i32_0 = arith.constant 0 : i32
    %c0_i32_1 = arith.constant 0 : i32
    return %c0_i32, %c0_i32_0 : i32, i32
  }
  func.func @transform_5(%arg0: i32) -> (i32, i32) {
    %c0_i32 = arith.constant 0 : i32
    %c0_i32_0 = arith.constant 0 : i32
    %c0_i32_1 = arith.constant 0 : i32
    return %c0_i32, %c0_i32_0 : i32, i32
  }
}

module attributes {stable_mosaic.version = 11 : i64} {
  func.func @_transformer_stack_kernel(%arg0: i32, %arg1: i32, %arg2: memref<2x5x32xbf16, #tpu.memory_space<vmem>>, %arg3: memref<1x1x32xf32, #tpu.memory_space<vmem>>, %arg4: memref<1x1x32xf32, #tpu.memory_space<vmem>>, %arg5: memref<1x32x96xbf16, #tpu.memory_space<vmem>>, %arg6: memref<1x32x32xbf16, #tpu.memory_space<vmem>>, %arg7: memref<1x1x32xf32, #tpu.memory_space<vmem>>, %arg8: memref<1x1x32xf32, #tpu.memory_space<vmem>>, %arg9: memref<1x1x32xf32, #tpu.memory_space<vmem>>, %arg10: memref<1x32x64xbf16, #tpu.memory_space<vmem>>, %arg11: memref<1x1x64xf32, #tpu.memory_space<vmem>>, %arg12: memref<1x64x32xbf16, #tpu.memory_space<vmem>>, %arg13: memref<1x1x32xf32, #tpu.memory_space<vmem>>, %arg14: memref<2x1x32xf32, #tpu.memory_space<vmem>>, %arg15: memref<2x5x32xf32, #tpu.memory_space<vmem>>, %arg16: memref<5x32xbf16, #tpu.memory_space<vmem>>) attributes {dimension_semantics = [#tpu.dimension_semantics<parallel>, #tpu.dimension_semantics<arbitrary>], iteration_bounds = array<i64: 1, 2>, scalar_prefetch = 0 : i64, scratch_operands = 2 : i64, tpu.core_type = #tpu.core_type<tc>, window_params = [{transform_indices = @transform_0, window_bounds = array<i64: 2, 5, 32>}, {transform_indices = @transform_1, window_bounds = array<i64: 1, 1, 32>}, {transform_indices = @transform_2, window_bounds = array<i64: 1, 1, 32>}, {transform_indices = @transform_3, window_bounds = array<i64: 1, 32, 96>}, {transform_indices = @transform_4, window_bounds = array<i64: 1, 32, 32>}, {transform_indices = @transform_5, window_bounds = array<i64: 1, 1, 32>}, {transform_indices = @transform_6, window_bounds = array<i64: 1, 1, 32>}, {transform_indices = @transform_7, window_bounds = array<i64: 1, 1, 32>}, {transform_indices = @transform_8, window_bounds = array<i64: 1, 32, 64>}, {transform_indices = @transform_9, window_bounds = array<i64: 1, 1, 64>}, {transform_indices = @transform_10, window_bounds = array<i64: 1, 64, 32>}, {transform_indices = @transform_11, window_bounds = array<i64: 1, 1, 32>}, {transform_indices = @transform_12, window_bounds = array<i64: 2, 1, 32>}]} {
    %c0_i32 = arith.constant 0 : i32
    %0 = arith.cmpi eq, %arg1, %c0_i32 : i32
    %1 = arith.extui %0 : i1 to i32
    %c0_i32_0 = arith.constant 0 : i32
    %2 = arith.cmpi ne, %1, %c0_i32_0 : i32
    scf.if %2 {
      %c0_138 = arith.constant 0 : index
      %c0_139 = arith.constant 0 : index
      %c0_140 = arith.constant 0 : index
      %278 = vector.load %arg2[%c0_138, %c0_139, %c0_140] : memref<2x5x32xbf16, #tpu.memory_space<vmem>>, vector<2x5x32xbf16>
      %279 = arith.extf %278 : vector<2x5x32xbf16> to vector<2x5x32xf32>
      %c0_141 = arith.constant 0 : index
      %c0_142 = arith.constant 0 : index
      %c0_143 = arith.constant 0 : index
      %280 = vector.load %arg15[%c0_141, %c0_142, %c0_143] : memref<2x5x32xf32, #tpu.memory_space<vmem>>, vector<2x5x32xf32>
      tpu.vector_store %arg15[%c0_141, %c0_142, %c0_143], %279 {strides = array<i32>} : memref<2x5x32xf32, #tpu.memory_space<vmem>>, vector<2x5x32xf32>,
    } else {
    }
    %c0 = arith.constant 0 : index
    %c0_1 = arith.constant 0 : index
    %c0_2 = arith.constant 0 : index
    %3 = vector.load %arg15[%c0, %c0_1, %c0_2] : memref<2x5x32xf32, #tpu.memory_space<vmem>>, vector<1x5x32xf32>
    %4 = vector.shape_cast %3 : vector<1x5x32xf32> to vector<5x32xf32>
    %c0_3 = arith.constant 0 : index
    %c0_4 = arith.constant 0 : index
    %c0_5 = arith.constant 0 : index
    %5 = vector.load %arg3[%c0_3, %c0_4, %c0_5] : memref<1x1x32xf32, #tpu.memory_space<vmem>>, vector<1x1x32xf32>
    %6 = vector.shape_cast %5 : vector<1x1x32xf32> to vector<1x32xf32>
    %c0_6 = arith.constant 0 : index
    %c0_7 = arith.constant 0 : index
    %c0_8 = arith.constant 0 : index
    %7 = vector.load %arg4[%c0_6, %c0_7, %c0_8] : memref<1x1x32xf32, #tpu.memory_space<vmem>>, vector<1x1x32xf32>
    %8 = vector.shape_cast %7 : vector<1x1x32xf32> to vector<1x32xf32>
    %cst = arith.constant dense<0.000000e+00> : vector<5xf32>
    %9 = vector.multi_reduction <add>, %4, %cst [1] : vector<5x32xf32> to vector<5xf32>
    %10 = vector.shape_cast %9 : vector<5xf32> to vector<5x1xf32>
    %cst_9 = arith.constant 3.200000e+01 : f32
    %11 = vector.broadcast %cst_9 : f32 to vector<5x1xf32>
    %12 = arith.divf %10, %11 : vector<5x1xf32>
    %13 = vector.broadcast %12 : vector<5x1xf32> to vector<5x32xf32>
    %14 = arith.subf %4, %13 : vector<5x32xf32>
    %15 = vector.broadcast %12 : vector<5x1xf32> to vector<5x32xf32>
    %16 = arith.subf %4, %15 : vector<5x32xf32>
    %17 = arith.mulf %14, %16 : vector<5x32xf32>
    %cst_10 = arith.constant dense<0.000000e+00> : vector<5xf32>
    %18 = vector.multi_reduction <add>, %17, %cst_10 [1] : vector<5x32xf32> to vector<5xf32>
    %19 = vector.shape_cast %18 : vector<5xf32> to vector<5x1xf32>
    %cst_11 = arith.constant 3.200000e+01 : f32
    %20 = vector.broadcast %cst_11 : f32 to vector<5x1xf32>
    %21 = arith.divf %19, %20 : vector<5x1xf32>
    %22 = vector.broadcast %12 : vector<5x1xf32> to vector<5x32xf32>
    %23 = arith.subf %4, %22 : vector<5x32xf32>
    %cst_12 = arith.constant 9.99999974E-6 : f32
    %24 = vector.broadcast %cst_12 : f32 to vector<5x1xf32>
    %25 = arith.addf %21, %24 : vector<5x1xf32>
    %26 = math.rsqrt %25 : vector<5x1xf32>
    %27 = vector.broadcast %26 : vector<5x1xf32> to vector<5x32xf32>
    %28 = arith.mulf %23, %27 : vector<5x32xf32>
    %29 = vector.broadcast %6 : vector<1x32xf32> to vector<5x32xf32>
    %30 = arith.mulf %28, %29 : vector<5x32xf32>
    %31 = vector.broadcast %8 : vector<1x32xf32> to vector<5x32xf32>
    %32 = arith.addf %30, %31 : vector<5x32xf32>
    %33 = arith.truncf %32 : vector<5x32xf32> to vector<5x32xbf16>
    %c0_13 = arith.constant 0 : index
    %c0_14 = arith.constant 0 : index
    %c0_15 = arith.constant 0 : index
    %34 = vector.load %arg5[%c0_13, %c0_14, %c0_15] : memref<1x32x96xbf16, #tpu.memory_space<vmem>>, vector<1x32x96xbf16>
    %35 = vector.shape_cast %34 : vector<1x32x96xbf16> to vector<32x96xbf16>
    %cst_16 = arith.constant dense<0.000000e+00> : vector<5x96xf32>
    %36 = tpu.matmul %33, %35, %cst_16 {dimension_numbers = #tpu.dot_dimension_numbers<[1], [0], [0], [1], [0, 0, 1, 1], [], []>} : vector<5x32xbf16>, vector<32x96xbf16>, vector<5x96xf32> -> vector<5x96xf32>
    %37 = arith.truncf %36 : vector<5x96xf32> to vector<5x96xbf16>
    %38 = vector.extract_strided_slice %37 {offsets = [0, 0], sizes = [5, 16], strides = [1, 1]} : vector<5x96xbf16> to vector<5x16xbf16>
    %39 = vector.extract_strided_slice %37 {offsets = [0, 32], sizes = [5, 16], strides = [1, 1]} : vector<5x96xbf16> to vector<5x16xbf16>
    %40 = vector.extract_strided_slice %37 {offsets = [0, 64], sizes = [5, 16], strides = [1, 1]} : vector<5x96xbf16> to vector<5x16xbf16>
    %cst_17 = arith.constant dense<0.000000e+00> : vector<5x5xf32>
    %41 = tpu.matmul %38, %39, %cst_17 {dimension_numbers = #tpu.dot_dimension_numbers<[1], [1], [0], [0], [0, 0, 1, 0], [], []>} : vector<5x16xbf16>, vector<5x16xbf16>, vector<5x5xf32> -> vector<5x5xf32>
    %cst_18 = arith.constant dense<0xFF800000> : vector<5xf32>
    %42 = vector.multi_reduction <maximumf>, %41, %cst_18 [1] : vector<5x5xf32> to vector<5xf32>
    %43 = vector.shape_cast %42 : vector<5xf32> to vector<5x1xf32>
    %44 = vector.broadcast %43 : vector<5x1xf32> to vector<5x5xf32>
    %45 = arith.subf %41, %44 : vector<5x5xf32>
    %46 = math.exp %45 : vector<5x5xf32>
    %cst_19 = arith.constant dense<0.000000e+00> : vector<5xf32>
    %47 = vector.multi_reduction <add>, %46, %cst_19 [1] : vector<5x5xf32> to vector<5xf32>
    %48 = vector.shape_cast %47 : vector<5xf32> to vector<5x1xf32>
    %49 = tpu.reciprocal %48 {approx = true} : vector<5x1xf32> -> vector<5x1xf32>
    %50 = vector.broadcast %49 : vector<5x1xf32> to vector<5x5xf32>
    %51 = arith.mulf %46, %50 : vector<5x5xf32>
    %52 = arith.truncf %51 : vector<5x5xf32> to vector<5x5xbf16>
    %cst_20 = arith.constant dense<0.000000e+00> : vector<5x16xf32>
    %53 = tpu.matmul %52, %40, %cst_20 {dimension_numbers = #tpu.dot_dimension_numbers<[1], [0], [0], [1], [0, 0, 1, 1], [], []>} : vector<5x5xbf16>, vector<5x16xbf16>, vector<5x16xf32> -> vector<5x16xf32>
    %54 = arith.truncf %53 : vector<5x16xf32> to vector<5x16xbf16>
    %c0_21 = arith.constant 0 : index
    %c0_22 = arith.constant 0 : index
    %55 = vector.load %arg16[%c0_21, %c0_22] : memref<5x32xbf16, #tpu.memory_space<vmem>>, vector<5x16xbf16>
    tpu.vector_store %arg16[%c0_21, %c0_22], %54 {strides = array<i32>} : memref<5x32xbf16, #tpu.memory_space<vmem>>, vector<5x16xbf16>,
    %56 = vector.extract_strided_slice %37 {offsets = [0, 16], sizes = [5, 16], strides = [1, 1]} : vector<5x96xbf16> to vector<5x16xbf16>
    %57 = vector.extract_strided_slice %37 {offsets = [0, 48], sizes = [5, 16], strides = [1, 1]} : vector<5x96xbf16> to vector<5x16xbf16>
    %58 = vector.extract_strided_slice %37 {offsets = [0, 80], sizes = [5, 16], strides = [1, 1]} : vector<5x96xbf16> to vector<5x16xbf16>
    %cst_23 = arith.constant dense<0.000000e+00> : vector<5x5xf32>
    %59 = tpu.matmul %56, %57, %cst_23 {dimension_numbers = #tpu.dot_dimension_numbers<[1], [1], [0], [0], [0, 0, 1, 0], [], []>} : vector<5x16xbf16>, vector<5x16xbf16>, vector<5x5xf32> -> vector<5x5xf32>
    %cst_24 = arith.constant dense<0xFF800000> : vector<5xf32>
    %60 = vector.multi_reduction <maximumf>, %59, %cst_24 [1] : vector<5x5xf32> to vector<5xf32>
    %61 = vector.shape_cast %60 : vector<5xf32> to vector<5x1xf32>
    %62 = vector.broadcast %61 : vector<5x1xf32> to vector<5x5xf32>
    %63 = arith.subf %59, %62 : vector<5x5xf32>
    %64 = math.exp %63 : vector<5x5xf32>
    %cst_25 = arith.constant dense<0.000000e+00> : vector<5xf32>
    %65 = vector.multi_reduction <add>, %64, %cst_25 [1] : vector<5x5xf32> to vector<5xf32>
    %66 = vector.shape_cast %65 : vector<5xf32> to vector<5x1xf32>
    %67 = tpu.reciprocal %66 {approx = true} : vector<5x1xf32> -> vector<5x1xf32>
    %68 = vector.broadcast %67 : vector<5x1xf32> to vector<5x5xf32>
    %69 = arith.mulf %64, %68 : vector<5x5xf32>
    %70 = arith.truncf %69 : vector<5x5xf32> to vector<5x5xbf16>
    %cst_26 = arith.constant dense<0.000000e+00> : vector<5x16xf32>
    %71 = tpu.matmul %70, %58, %cst_26 {dimension_numbers = #tpu.dot_dimension_numbers<[1], [0], [0], [1], [0, 0, 1, 1], [], []>} : vector<5x5xbf16>, vector<5x16xbf16>, vector<5x16xf32> -> vector<5x16xf32>
    %72 = arith.truncf %71 : vector<5x16xf32> to vector<5x16xbf16>
    %c0_27 = arith.constant 0 : index
    %c16 = arith.constant 16 : index
    %73 = vector.load %arg16[%c0_27, %c16] : memref<5x32xbf16, #tpu.memory_space<vmem>>, vector<5x16xbf16>
    tpu.vector_store %arg16[%c0_27, %c16], %72 {strides = array<i32>} : memref<5x32xbf16, #tpu.memory_space<vmem>>, vector<5x16xbf16>,
    %c0_28 = arith.constant 0 : index
    %c0_29 = arith.constant 0 : index
    %74 = vector.load %arg16[%c0_28, %c0_29] : memref<5x32xbf16, #tpu.memory_space<vmem>>, vector<5x32xbf16>
    %c0_30 = arith.constant 0 : index
    %c0_31 = arith.constant 0 : index
    %c0_32 = arith.constant 0 : index
    %75 = vector.load %arg6[%c0_30, %c0_31, %c0_32] : memref<1x32x32xbf16, #tpu.memory_space<vmem>>, vector<1x32x32xbf16>
    %76 = vector.shape_cast %75 : vector<1x32x32xbf16> to vector<32x32xbf16>
    %cst_33 = arith.constant dense<0.000000e+00> : vector<5x32xf32>
    %77 = tpu.matmul %74, %76, %cst_33 {dimension_numbers = #tpu.dot_dimension_numbers<[1], [0], [0], [1], [0, 0, 1, 1], [], []>} : vector<5x32xbf16>, vector<32x32xbf16>, vector<5x32xf32> -> vector<5x32xf32>
    %c0_34 = arith.constant 0 : index
    %c0_35 = arith.constant 0 : index
    %c0_36 = arith.constant 0 : index
    %78 = vector.load %arg7[%c0_34, %c0_35, %c0_36] : memref<1x1x32xf32, #tpu.memory_space<vmem>>, vector<1x1x32xf32>
    %79 = vector.shape_cast %78 : vector<1x1x32xf32> to vector<1x32xf32>
    %80 = vector.broadcast %79 : vector<1x32xf32> to vector<5x32xf32>
    %81 = arith.addf %77, %80 : vector<5x32xf32>
    %82 = arith.addf %4, %81 : vector<5x32xf32>
    %c0_37 = arith.constant 0 : index
    %c0_38 = arith.constant 0 : index
    %c0_39 = arith.constant 0 : index
    %83 = vector.load %arg8[%c0_37, %c0_38, %c0_39] : memref<1x1x32xf32, #tpu.memory_space<vmem>>, vector<1x1x32xf32>
    %84 = vector.shape_cast %83 : vector<1x1x32xf32> to vector<1x32xf32>
    %c0_40 = arith.constant 0 : index
    %c0_41 = arith.constant 0 : index
    %c0_42 = arith.constant 0 : index
    %85 = vector.load %arg9[%c0_40, %c0_41, %c0_42] : memref<1x1x32xf32, #tpu.memory_space<vmem>>, vector<1x1x32xf32>
    %86 = vector.shape_cast %85 : vector<1x1x32xf32> to vector<1x32xf32>
    %cst_43 = arith.constant dense<0.000000e+00> : vector<5xf32>
    %87 = vector.multi_reduction <add>, %82, %cst_43 [1] : vector<5x32xf32> to vector<5xf32>
    %88 = vector.shape_cast %87 : vector<5xf32> to vector<5x1xf32>
    %cst_44 = arith.constant 3.200000e+01 : f32
    %89 = vector.broadcast %cst_44 : f32 to vector<5x1xf32>
    %90 = arith.divf %88, %89 : vector<5x1xf32>
    %91 = vector.broadcast %90 : vector<5x1xf32> to vector<5x32xf32>
    %92 = arith.subf %82, %91 : vector<5x32xf32>
    %93 = vector.broadcast %90 : vector<5x1xf32> to vector<5x32xf32>
    %94 = arith.subf %82, %93 : vector<5x32xf32>
    %95 = arith.mulf %92, %94 : vector<5x32xf32>
    %cst_45 = arith.constant dense<0.000000e+00> : vector<5xf32>
    %96 = vector.multi_reduction <add>, %95, %cst_45 [1] : vector<5x32xf32> to vector<5xf32>
    %97 = vector.shape_cast %96 : vector<5xf32> to vector<5x1xf32>
    %cst_46 = arith.constant 3.200000e+01 : f32
    %98 = vector.broadcast %cst_46 : f32 to vector<5x1xf32>
    %99 = arith.divf %97, %98 : vector<5x1xf32>
    %100 = vector.broadcast %90 : vector<5x1xf32> to vector<5x32xf32>
    %101 = arith.subf %82, %100 : vector<5x32xf32>
    %cst_47 = arith.constant 9.99999974E-6 : f32
    %102 = vector.broadcast %cst_47 : f32 to vector<5x1xf32>
    %103 = arith.addf %99, %102 : vector<5x1xf32>
    %104 = math.rsqrt %103 : vector<5x1xf32>
    %105 = vector.broadcast %104 : vector<5x1xf32> to vector<5x32xf32>
    %106 = arith.mulf %101, %105 : vector<5x32xf32>
    %107 = vector.broadcast %84 : vector<1x32xf32> to vector<5x32xf32>
    %108 = arith.mulf %106, %107 : vector<5x32xf32>
    %109 = vector.broadcast %86 : vector<1x32xf32> to vector<5x32xf32>
    %110 = arith.addf %108, %109 : vector<5x32xf32>
    %111 = arith.truncf %110 : vector<5x32xf32> to vector<5x32xbf16>
    %c0_48 = arith.constant 0 : index
    %c0_49 = arith.constant 0 : index
    %c0_50 = arith.constant 0 : index
    %112 = vector.load %arg10[%c0_48, %c0_49, %c0_50] : memref<1x32x64xbf16, #tpu.memory_space<vmem>>, vector<1x32x64xbf16>
    %113 = vector.shape_cast %112 : vector<1x32x64xbf16> to vector<32x64xbf16>
    %cst_51 = arith.constant dense<0.000000e+00> : vector<5x64xf32>
    %114 = tpu.matmul %111, %113, %cst_51 {dimension_numbers = #tpu.dot_dimension_numbers<[1], [0], [0], [1], [0, 0, 1, 1], [], []>} : vector<5x32xbf16>, vector<32x64xbf16>, vector<5x64xf32> -> vector<5x64xf32>
    %c0_52 = arith.constant 0 : index
    %c0_53 = arith.constant 0 : index
    %c0_54 = arith.constant 0 : index
    %115 = vector.load %arg11[%c0_52, %c0_53, %c0_54] : memref<1x1x64xf32, #tpu.memory_space<vmem>>, vector<1x1x64xf32>
    %116 = vector.shape_cast %115 : vector<1x1x64xf32> to vector<1x64xf32>
    %117 = vector.broadcast %116 : vector<1x64xf32> to vector<5x64xf32>
    %118 = arith.addf %114, %117 : vector<5x64xf32>
    %cst_55 = arith.constant 5.000000e-01 : f32
    %119 = vector.broadcast %cst_55 : f32 to vector<5x64xf32>
    %120 = arith.mulf %119, %118 : vector<5x64xf32>
    %cst_56 = arith.constant 0.707106769 : f32
    %121 = vector.broadcast %cst_56 : f32 to vector<5x64xf32>
    %122 = arith.mulf %118, %121 : vector<5x64xf32>
    %123 = math.erf %122 : vector<5x64xf32>
    %cst_57 = arith.constant 1.000000e+00 : f32
    %124 = vector.broadcast %cst_57 : f32 to vector<5x64xf32>
    %125 = arith.addf %124, %123 : vector<5x64xf32>
    %126 = arith.mulf %120, %125 : vector<5x64xf32>
    %127 = arith.truncf %126 : vector<5x64xf32> to vector<5x64xbf16>
    %c0_58 = arith.constant 0 : index
    %c0_59 = arith.constant 0 : index
    %c0_60 = arith.constant 0 : index
    %128 = vector.load %arg12[%c0_58, %c0_59, %c0_60] : memref<1x64x32xbf16, #tpu.memory_space<vmem>>, vector<1x64x32xbf16>
    %129 = vector.shape_cast %128 : vector<1x64x32xbf16> to vector<64x32xbf16>
    %cst_61 = arith.constant dense<0.000000e+00> : vector<5x32xf32>
    %130 = tpu.matmul %127, %129, %cst_61 {dimension_numbers = #tpu.dot_dimension_numbers<[1], [0], [0], [1], [0, 0, 1, 1], [], []>} : vector<5x64xbf16>, vector<64x32xbf16>, vector<5x32xf32> -> vector<5x32xf32>
    %c0_62 = arith.constant 0 : index
    %c0_63 = arith.constant 0 : index
    %c0_64 = arith.constant 0 : index
    %131 = vector.load %arg13[%c0_62, %c0_63, %c0_64] : memref<1x1x32xf32, #tpu.memory_space<vmem>>, vector<1x1x32xf32>
    %132 = vector.shape_cast %131 : vector<1x1x32xf32> to vector<1x32xf32>
    %133 = vector.broadcast %132 : vector<1x32xf32> to vector<5x32xf32>
    %134 = arith.addf %130, %133 : vector<5x32xf32>
    %135 = arith.addf %82, %134 : vector<5x32xf32>
    %c0_65 = arith.constant 0 : index
    %c0_66 = arith.constant 0 : index
    %c0_67 = arith.constant 0 : index
    %136 = vector.load %arg15[%c0_65, %c0_66, %c0_67] : memref<2x5x32xf32, #tpu.memory_space<vmem>>, vector<1x5x32xf32>
    %137 = vector.shape_cast %136 : vector<1x5x32xf32> to vector<5x32xf32>
    %138 = vector.shape_cast %135 : vector<5x32xf32> to vector<1x5x32xf32>
    tpu.vector_store %arg15[%c0_65, %c0_66, %c0_67], %138 {strides = array<i32>} : memref<2x5x32xf32, #tpu.memory_space<vmem>>, vector<1x5x32xf32>,
    %c1 = arith.constant 1 : index
    %c0_68 = arith.constant 0 : index
    %c0_69 = arith.constant 0 : index
    %139 = vector.load %arg15[%c1, %c0_68, %c0_69] : memref<2x5x32xf32, #tpu.memory_space<vmem>>, vector<1x5x32xf32>
    %140 = vector.shape_cast %139 : vector<1x5x32xf32> to vector<5x32xf32>
    %c0_70 = arith.constant 0 : index
    %c0_71 = arith.constant 0 : index
    %c0_72 = arith.constant 0 : index
    %141 = vector.load %arg3[%c0_70, %c0_71, %c0_72] : memref<1x1x32xf32, #tpu.memory_space<vmem>>, vector<1x1x32xf32>
    %142 = vector.shape_cast %141 : vector<1x1x32xf32> to vector<1x32xf32>
    %c0_73 = arith.constant 0 : index
    %c0_74 = arith.constant 0 : index
    %c0_75 = arith.constant 0 : index
    %143 = vector.load %arg4[%c0_73, %c0_74, %c0_75] : memref<1x1x32xf32, #tpu.memory_space<vmem>>, vector<1x1x32xf32>
    %144 = vector.shape_cast %143 : vector<1x1x32xf32> to vector<1x32xf32>
    %cst_76 = arith.constant dense<0.000000e+00> : vector<5xf32>
    %145 = vector.multi_reduction <add>, %140, %cst_76 [1] : vector<5x32xf32> to vector<5xf32>
    %146 = vector.shape_cast %145 : vector<5xf32> to vector<5x1xf32>
    %cst_77 = arith.constant 3.200000e+01 : f32
    %147 = vector.broadcast %cst_77 : f32 to vector<5x1xf32>
    %148 = arith.divf %146, %147 : vector<5x1xf32>
    %149 = vector.broadcast %148 : vector<5x1xf32> to vector<5x32xf32>
    %150 = arith.subf %140, %149 : vector<5x32xf32>
    %151 = vector.broadcast %148 : vector<5x1xf32> to vector<5x32xf32>
    %152 = arith.subf %140, %151 : vector<5x32xf32>
    %153 = arith.mulf %150, %152 : vector<5x32xf32>
    %cst_78 = arith.constant dense<0.000000e+00> : vector<5xf32>
    %154 = vector.multi_reduction <add>, %153, %cst_78 [1] : vector<5x32xf32> to vector<5xf32>
    %155 = vector.shape_cast %154 : vector<5xf32> to vector<5x1xf32>
    %cst_79 = arith.constant 3.200000e+01 : f32
    %156 = vector.broadcast %cst_79 : f32 to vector<5x1xf32>
    %157 = arith.divf %155, %156 : vector<5x1xf32>
    %158 = vector.broadcast %148 : vector<5x1xf32> to vector<5x32xf32>
    %159 = arith.subf %140, %158 : vector<5x32xf32>
    %cst_80 = arith.constant 9.99999974E-6 : f32
    %160 = vector.broadcast %cst_80 : f32 to vector<5x1xf32>
    %161 = arith.addf %157, %160 : vector<5x1xf32>
    %162 = math.rsqrt %161 : vector<5x1xf32>
    %163 = vector.broadcast %162 : vector<5x1xf32> to vector<5x32xf32>
    %164 = arith.mulf %159, %163 : vector<5x32xf32>
    %165 = vector.broadcast %142 : vector<1x32xf32> to vector<5x32xf32>
    %166 = arith.mulf %164, %165 : vector<5x32xf32>
    %167 = vector.broadcast %144 : vector<1x32xf32> to vector<5x32xf32>
    %168 = arith.addf %166, %167 : vector<5x32xf32>
    %169 = arith.truncf %168 : vector<5x32xf32> to vector<5x32xbf16>
    %c0_81 = arith.constant 0 : index
    %c0_82 = arith.constant 0 : index
    %c0_83 = arith.constant 0 : index
    %170 = vector.load %arg5[%c0_81, %c0_82, %c0_83] : memref<1x32x96xbf16, #tpu.memory_space<vmem>>, vector<1x32x96xbf16>
    %171 = vector.shape_cast %170 : vector<1x32x96xbf16> to vector<32x96xbf16>
    %cst_84 = arith.constant dense<0.000000e+00> : vector<5x96xf32>
    %172 = tpu.matmul %169, %171, %cst_84 {dimension_numbers = #tpu.dot_dimension_numbers<[1], [0], [0], [1], [0, 0, 1, 1], [], []>} : vector<5x32xbf16>, vector<32x96xbf16>, vector<5x96xf32> -> vector<5x96xf32>
    %173 = arith.truncf %172 : vector<5x96xf32> to vector<5x96xbf16>
    %174 = vector.extract_strided_slice %173 {offsets = [0, 0], sizes = [5, 16], strides = [1, 1]} : vector<5x96xbf16> to vector<5x16xbf16>
    %175 = vector.extract_strided_slice %173 {offsets = [0, 32], sizes = [5, 16], strides = [1, 1]} : vector<5x96xbf16> to vector<5x16xbf16>
    %176 = vector.extract_strided_slice %173 {offsets = [0, 64], sizes = [5, 16], strides = [1, 1]} : vector<5x96xbf16> to vector<5x16xbf16>
    %cst_85 = arith.constant dense<0.000000e+00> : vector<5x5xf32>
    %177 = tpu.matmul %174, %175, %cst_85 {dimension_numbers = #tpu.dot_dimension_numbers<[1], [1], [0], [0], [0, 0, 1, 0], [], []>} : vector<5x16xbf16>, vector<5x16xbf16>, vector<5x5xf32> -> vector<5x5xf32>
    %cst_86 = arith.constant dense<0xFF800000> : vector<5xf32>
    %178 = vector.multi_reduction <maximumf>, %177, %cst_86 [1] : vector<5x5xf32> to vector<5xf32>
    %179 = vector.shape_cast %178 : vector<5xf32> to vector<5x1xf32>
    %180 = vector.broadcast %179 : vector<5x1xf32> to vector<5x5xf32>
    %181 = arith.subf %177, %180 : vector<5x5xf32>
    %182 = math.exp %181 : vector<5x5xf32>
    %cst_87 = arith.constant dense<0.000000e+00> : vector<5xf32>
    %183 = vector.multi_reduction <add>, %182, %cst_87 [1] : vector<5x5xf32> to vector<5xf32>
    %184 = vector.shape_cast %183 : vector<5xf32> to vector<5x1xf32>
    %185 = tpu.reciprocal %184 {approx = true} : vector<5x1xf32> -> vector<5x1xf32>
    %186 = vector.broadcast %185 : vector<5x1xf32> to vector<5x5xf32>
    %187 = arith.mulf %182, %186 : vector<5x5xf32>
    %188 = arith.truncf %187 : vector<5x5xf32> to vector<5x5xbf16>
    %cst_88 = arith.constant dense<0.000000e+00> : vector<5x16xf32>
    %189 = tpu.matmul %188, %176, %cst_88 {dimension_numbers = #tpu.dot_dimension_numbers<[1], [0], [0], [1], [0, 0, 1, 1], [], []>} : vector<5x5xbf16>, vector<5x16xbf16>, vector<5x16xf32> -> vector<5x16xf32>
    %190 = arith.truncf %189 : vector<5x16xf32> to vector<5x16xbf16>
    %c0_89 = arith.constant 0 : index
    %c0_90 = arith.constant 0 : index
    %191 = vector.load %arg16[%c0_89, %c0_90] : memref<5x32xbf16, #tpu.memory_space<vmem>>, vector<5x16xbf16>
    tpu.vector_store %arg16[%c0_89, %c0_90], %190 {strides = array<i32>} : memref<5x32xbf16, #tpu.memory_space<vmem>>, vector<5x16xbf16>,
    %192 = vector.extract_strided_slice %173 {offsets = [0, 16], sizes = [5, 16], strides = [1, 1]} : vector<5x96xbf16> to vector<5x16xbf16>
    %193 = vector.extract_strided_slice %173 {offsets = [0, 48], sizes = [5, 16], strides = [1, 1]} : vector<5x96xbf16> to vector<5x16xbf16>
    %194 = vector.extract_strided_slice %173 {offsets = [0, 80], sizes = [5, 16], strides = [1, 1]} : vector<5x96xbf16> to vector<5x16xbf16>
    %cst_91 = arith.constant dense<0.000000e+00> : vector<5x5xf32>
    %195 = tpu.matmul %192, %193, %cst_91 {dimension_numbers = #tpu.dot_dimension_numbers<[1], [1], [0], [0], [0, 0, 1, 0], [], []>} : vector<5x16xbf16>, vector<5x16xbf16>, vector<5x5xf32> -> vector<5x5xf32>
    %cst_92 = arith.constant dense<0xFF800000> : vector<5xf32>
    %196 = vector.multi_reduction <maximumf>, %195, %cst_92 [1] : vector<5x5xf32> to vector<5xf32>
    %197 = vector.shape_cast %196 : vector<5xf32> to vector<5x1xf32>
    %198 = vector.broadcast %197 : vector<5x1xf32> to vector<5x5xf32>
    %199 = arith.subf %195, %198 : vector<5x5xf32>
    %200 = math.exp %199 : vector<5x5xf32>
    %cst_93 = arith.constant dense<0.000000e+00> : vector<5xf32>
    %201 = vector.multi_reduction <add>, %200, %cst_93 [1] : vector<5x5xf32> to vector<5xf32>
    %202 = vector.shape_cast %201 : vector<5xf32> to vector<5x1xf32>
    %203 = tpu.reciprocal %202 {approx = true} : vector<5x1xf32> -> vector<5x1xf32>
    %204 = vector.broadcast %203 : vector<5x1xf32> to vector<5x5xf32>
    %205 = arith.mulf %200, %204 : vector<5x5xf32>
    %206 = arith.truncf %205 : vector<5x5xf32> to vector<5x5xbf16>
    %cst_94 = arith.constant dense<0.000000e+00> : vector<5x16xf32>
    %207 = tpu.matmul %206, %194, %cst_94 {dimension_numbers = #tpu.dot_dimension_numbers<[1], [0], [0], [1], [0, 0, 1, 1], [], []>} : vector<5x5xbf16>, vector<5x16xbf16>, vector<5x16xf32> -> vector<5x16xf32>
    %208 = arith.truncf %207 : vector<5x16xf32> to vector<5x16xbf16>
    %c0_95 = arith.constant 0 : index
    %c16_96 = arith.constant 16 : index
    %209 = vector.load %arg16[%c0_95, %c16_96] : memref<5x32xbf16, #tpu.memory_space<vmem>>, vector<5x16xbf16>
    tpu.vector_store %arg16[%c0_95, %c16_96], %208 {strides = array<i32>} : memref<5x32xbf16, #tpu.memory_space<vmem>>, vector<5x16xbf16>,
    %c0_97 = arith.constant 0 : index
    %c0_98 = arith.constant 0 : index
    %210 = vector.load %arg16[%c0_97, %c0_98] : memref<5x32xbf16, #tpu.memory_space<vmem>>, vector<5x32xbf16>
    %c0_99 = arith.constant 0 : index
    %c0_100 = arith.constant 0 : index
    %c0_101 = arith.constant 0 : index
    %211 = vector.load %arg6[%c0_99, %c0_100, %c0_101] : memref<1x32x32xbf16, #tpu.memory_space<vmem>>, vector<1x32x32xbf16>
    %212 = vector.shape_cast %211 : vector<1x32x32xbf16> to vector<32x32xbf16>
    %cst_102 = arith.constant dense<0.000000e+00> : vector<5x32xf32>
    %213 = tpu.matmul %210, %212, %cst_102 {dimension_numbers = #tpu.dot_dimension_numbers<[1], [0], [0], [1], [0, 0, 1, 1], [], []>} : vector<5x32xbf16>, vector<32x32xbf16>, vector<5x32xf32> -> vector<5x32xf32>
    %c0_103 = arith.constant 0 : index
    %c0_104 = arith.constant 0 : index
    %c0_105 = arith.constant 0 : index
    %214 = vector.load %arg7[%c0_103, %c0_104, %c0_105] : memref<1x1x32xf32, #tpu.memory_space<vmem>>, vector<1x1x32xf32>
    %215 = vector.shape_cast %214 : vector<1x1x32xf32> to vector<1x32xf32>
    %216 = vector.broadcast %215 : vector<1x32xf32> to vector<5x32xf32>
    %217 = arith.addf %213, %216 : vector<5x32xf32>
    %218 = arith.addf %140, %217 : vector<5x32xf32>
    %c0_106 = arith.constant 0 : index
    %c0_107 = arith.constant 0 : index
    %c0_108 = arith.constant 0 : index
    %219 = vector.load %arg8[%c0_106, %c0_107, %c0_108] : memref<1x1x32xf32, #tpu.memory_space<vmem>>, vector<1x1x32xf32>
    %220 = vector.shape_cast %219 : vector<1x1x32xf32> to vector<1x32xf32>
    %c0_109 = arith.constant 0 : index
    %c0_110 = arith.constant 0 : index
    %c0_111 = arith.constant 0 : index
    %221 = vector.load %arg9[%c0_109, %c0_110, %c0_111] : memref<1x1x32xf32, #tpu.memory_space<vmem>>, vector<1x1x32xf32>
    %222 = vector.shape_cast %221 : vector<1x1x32xf32> to vector<1x32xf32>
    %cst_112 = arith.constant dense<0.000000e+00> : vector<5xf32>
    %223 = vector.multi_reduction <add>, %218, %cst_112 [1] : vector<5x32xf32> to vector<5xf32>
    %224 = vector.shape_cast %223 : vector<5xf32> to vector<5x1xf32>
    %cst_113 = arith.constant 3.200000e+01 : f32
    %225 = vector.broadcast %cst_113 : f32 to vector<5x1xf32>
    %226 = arith.divf %224, %225 : vector<5x1xf32>
    %227 = vector.broadcast %226 : vector<5x1xf32> to vector<5x32xf32>
    %228 = arith.subf %218, %227 : vector<5x32xf32>
    %229 = vector.broadcast %226 : vector<5x1xf32> to vector<5x32xf32>
    %230 = arith.subf %218, %229 : vector<5x32xf32>
    %231 = arith.mulf %228, %230 : vector<5x32xf32>
    %cst_114 = arith.constant dense<0.000000e+00> : vector<5xf32>
    %232 = vector.multi_reduction <add>, %231, %cst_114 [1] : vector<5x32xf32> to vector<5xf32>
    %233 = vector.shape_cast %232 : vector<5xf32> to vector<5x1xf32>
    %cst_115 = arith.constant 3.200000e+01 : f32
    %234 = vector.broadcast %cst_115 : f32 to vector<5x1xf32>
    %235 = arith.divf %233, %234 : vector<5x1xf32>
    %236 = vector.broadcast %226 : vector<5x1xf32> to vector<5x32xf32>
    %237 = arith.subf %218, %236 : vector<5x32xf32>
    %cst_116 = arith.constant 9.99999974E-6 : f32
    %238 = vector.broadcast %cst_116 : f32 to vector<5x1xf32>
    %239 = arith.addf %235, %238 : vector<5x1xf32>
    %240 = math.rsqrt %239 : vector<5x1xf32>
    %241 = vector.broadcast %240 : vector<5x1xf32> to vector<5x32xf32>
    %242 = arith.mulf %237, %241 : vector<5x32xf32>
    %243 = vector.broadcast %220 : vector<1x32xf32> to vector<5x32xf32>
    %244 = arith.mulf %242, %243 : vector<5x32xf32>
    %245 = vector.broadcast %222 : vector<1x32xf32> to vector<5x32xf32>
    %246 = arith.addf %244, %245 : vector<5x32xf32>
    %247 = arith.truncf %246 : vector<5x32xf32> to vector<5x32xbf16>
    %c0_117 = arith.constant 0 : index
    %c0_118 = arith.constant 0 : index
    %c0_119 = arith.constant 0 : index
    %248 = vector.load %arg10[%c0_117, %c0_118, %c0_119] : memref<1x32x64xbf16, #tpu.memory_space<vmem>>, vector<1x32x64xbf16>
    %249 = vector.shape_cast %248 : vector<1x32x64xbf16> to vector<32x64xbf16>
    %cst_120 = arith.constant dense<0.000000e+00> : vector<5x64xf32>
    %250 = tpu.matmul %247, %249, %cst_120 {dimension_numbers = #tpu.dot_dimension_numbers<[1], [0], [0], [1], [0, 0, 1, 1], [], []>} : vector<5x32xbf16>, vector<32x64xbf16>, vector<5x64xf32> -> vector<5x64xf32>
    %c0_121 = arith.constant 0 : index
    %c0_122 = arith.constant 0 : index
    %c0_123 = arith.constant 0 : index
    %251 = vector.load %arg11[%c0_121, %c0_122, %c0_123] : memref<1x1x64xf32, #tpu.memory_space<vmem>>, vector<1x1x64xf32>
    %252 = vector.shape_cast %251 : vector<1x1x64xf32> to vector<1x64xf32>
    %253 = vector.broadcast %252 : vector<1x64xf32> to vector<5x64xf32>
    %254 = arith.addf %250, %253 : vector<5x64xf32>
    %cst_124 = arith.constant 5.000000e-01 : f32
    %255 = vector.broadcast %cst_124 : f32 to vector<5x64xf32>
    %256 = arith.mulf %255, %254 : vector<5x64xf32>
    %cst_125 = arith.constant 0.707106769 : f32
    %257 = vector.broadcast %cst_125 : f32 to vector<5x64xf32>
    %258 = arith.mulf %254, %257 : vector<5x64xf32>
    %259 = math.erf %258 : vector<5x64xf32>
    %cst_126 = arith.constant 1.000000e+00 : f32
    %260 = vector.broadcast %cst_126 : f32 to vector<5x64xf32>
    %261 = arith.addf %260, %259 : vector<5x64xf32>
    %262 = arith.mulf %256, %261 : vector<5x64xf32>
    %263 = arith.truncf %262 : vector<5x64xf32> to vector<5x64xbf16>
    %c0_127 = arith.constant 0 : index
    %c0_128 = arith.constant 0 : index
    %c0_129 = arith.constant 0 : index
    %264 = vector.load %arg12[%c0_127, %c0_128, %c0_129] : memref<1x64x32xbf16, #tpu.memory_space<vmem>>, vector<1x64x32xbf16>
    %265 = vector.shape_cast %264 : vector<1x64x32xbf16> to vector<64x32xbf16>
    %cst_130 = arith.constant dense<0.000000e+00> : vector<5x32xf32>
    %266 = tpu.matmul %263, %265, %cst_130 {dimension_numbers = #tpu.dot_dimension_numbers<[1], [0], [0], [1], [0, 0, 1, 1], [], []>} : vector<5x64xbf16>, vector<64x32xbf16>, vector<5x32xf32> -> vector<5x32xf32>
    %c0_131 = arith.constant 0 : index
    %c0_132 = arith.constant 0 : index
    %c0_133 = arith.constant 0 : index
    %267 = vector.load %arg13[%c0_131, %c0_132, %c0_133] : memref<1x1x32xf32, #tpu.memory_space<vmem>>, vector<1x1x32xf32>
    %268 = vector.shape_cast %267 : vector<1x1x32xf32> to vector<1x32xf32>
    %269 = vector.broadcast %268 : vector<1x32xf32> to vector<5x32xf32>
    %270 = arith.addf %266, %269 : vector<5x32xf32>
    %271 = arith.addf %218, %270 : vector<5x32xf32>
    %c1_134 = arith.constant 1 : index
    %c0_135 = arith.constant 0 : index
    %c0_136 = arith.constant 0 : index
    %272 = vector.load %arg15[%c1_134, %c0_135, %c0_136] : memref<2x5x32xf32, #tpu.memory_space<vmem>>, vector<1x5x32xf32>
    %273 = vector.shape_cast %272 : vector<1x5x32xf32> to vector<5x32xf32>
    %274 = vector.shape_cast %271 : vector<5x32xf32> to vector<1x5x32xf32>
    tpu.vector_store %arg15[%c1_134, %c0_135, %c0_136], %274 {strides = array<i32>} : memref<2x5x32xf32, #tpu.memory_space<vmem>>, vector<1x5x32xf32>,
    %c1_i32 = arith.constant 1 : i32
    %275 = arith.cmpi eq, %arg1, %c1_i32 : i32
    %276 = arith.extui %275 : i1 to i32
    %c0_i32_137 = arith.constant 0 : i32
    %277 = arith.cmpi ne, %276, %c0_i32_137 : i32
    scf.if %277 {
      %c0_138 = arith.constant 0 : index
      %c0_139 = arith.constant 0 : index
      %c0_140 = arith.constant 0 : index
      %278 = vector.load %arg15[%c0_138, %c0_139, %c0_140] : memref<2x5x32xf32, #tpu.memory_space<vmem>>, vector<2x1x32xf32>
      %c0_141 = arith.constant 0 : index
      %c0_142 = arith.constant 0 : index
      %c0_143 = arith.constant 0 : index
      %279 = vector.load %arg14[%c0_141, %c0_142, %c0_143] : memref<2x1x32xf32, #tpu.memory_space<vmem>>, vector<2x1x32xf32>
      tpu.vector_store %arg14[%c0_141, %c0_142, %c0_143], %278 {strides = array<i32>} : memref<2x1x32xf32, #tpu.memory_space<vmem>>, vector<2x1x32xf32>,
    } else {
    }
    return
  }
  func.func @transform_0(%arg0: i32, %arg1: i32) -> (i32, i32, i32) {
    %c0_i32 = arith.constant 0 : i32
    %c0_i32_0 = arith.constant 0 : i32
    %c0_i32_1 = arith.constant 0 : i32
    return %arg0, %c0_i32, %c0_i32_0 : i32, i32, i32
  }
  func.func @transform_1(%arg0: i32, %arg1: i32) -> (i32, i32, i32) {
    %c0_i32 = arith.constant 0 : i32
    %c0_i32_0 = arith.constant 0 : i32
    %c0_i32_1 = arith.constant 0 : i32
    return %arg1, %c0_i32, %c0_i32_0 : i32, i32, i32
  }
  func.func @transform_2(%arg0: i32, %arg1: i32) -> (i32, i32, i32) {
    %c0_i32 = arith.constant 0 : i32
    %c0_i32_0 = arith.constant 0 : i32
    %c0_i32_1 = arith.constant 0 : i32
    return %arg1, %c0_i32, %c0_i32_0 : i32, i32, i32
  }
  func.func @transform_3(%arg0: i32, %arg1: i32) -> (i32, i32, i32) {
    %c0_i32 = arith.constant 0 : i32
    %c0_i32_0 = arith.constant 0 : i32
    %c0_i32_1 = arith.constant 0 : i32
    return %arg1, %c0_i32, %c0_i32_0 : i32, i32, i32
  }
  func.func @transform_4(%arg0: i32, %arg1: i32) -> (i32, i32, i32) {
    %c0_i32 = arith.constant 0 : i32
    %c0_i32_0 = arith.constant 0 : i32
    %c0_i32_1 = arith.constant 0 : i32
    return %arg1, %c0_i32, %c0_i32_0 : i32, i32, i32
  }
  func.func @transform_5(%arg0: i32, %arg1: i32) -> (i32, i32, i32) {
    %c0_i32 = arith.constant 0 : i32
    %c0_i32_0 = arith.constant 0 : i32
    %c0_i32_1 = arith.constant 0 : i32
    return %arg1, %c0_i32, %c0_i32_0 : i32, i32, i32
  }
  func.func @transform_6(%arg0: i32, %arg1: i32) -> (i32, i32, i32) {
    %c0_i32 = arith.constant 0 : i32
    %c0_i32_0 = arith.constant 0 : i32
    %c0_i32_1 = arith.constant 0 : i32
    return %arg1, %c0_i32, %c0_i32_0 : i32, i32, i32
  }
  func.func @transform_7(%arg0: i32, %arg1: i32) -> (i32, i32, i32) {
    %c0_i32 = arith.constant 0 : i32
    %c0_i32_0 = arith.constant 0 : i32
    %c0_i32_1 = arith.constant 0 : i32
    return %arg1, %c0_i32, %c0_i32_0 : i32, i32, i32
  }
  func.func @transform_8(%arg0: i32, %arg1: i32) -> (i32, i32, i32) {
    %c0_i32 = arith.constant 0 : i32
    %c0_i32_0 = arith.constant 0 : i32
    %c0_i32_1 = arith.constant 0 : i32
    return %arg1, %c0_i32, %c0_i32_0 : i32, i32, i32
  }
  func.func @transform_9(%arg0: i32, %arg1: i32) -> (i32, i32, i32) {
    %c0_i32 = arith.constant 0 : i32
    %c0_i32_0 = arith.constant 0 : i32
    %c0_i32_1 = arith.constant 0 : i32
    return %arg1, %c0_i32, %c0_i32_0 : i32, i32, i32
  }
  func.func @transform_10(%arg0: i32, %arg1: i32) -> (i32, i32, i32) {
    %c0_i32 = arith.constant 0 : i32
    %c0_i32_0 = arith.constant 0 : i32
    %c0_i32_1 = arith.constant 0 : i32
    return %arg1, %c0_i32, %c0_i32_0 : i32, i32, i32
  }
  func.func @transform_11(%arg0: i32, %arg1: i32) -> (i32, i32, i32) {
    %c0_i32 = arith.constant 0 : i32
    %c0_i32_0 = arith.constant 0 : i32
    %c0_i32_1 = arith.constant 0 : i32
    return %arg1, %c0_i32, %c0_i32_0 : i32, i32, i32
  }
  func.func @transform_12(%arg0: i32, %arg1: i32) -> (i32, i32, i32) {
    %c0_i32 = arith.constant 0 : i32
    %c0_i32_0 = arith.constant 0 : i32
    %c0_i32_1 = arith.constant 0 : i32
    return %arg0, %c0_i32, %c0_i32_0 : i32, i32, i32
  }
}

</mosaic_0001>

<llo_original>
// kernel: _lambda_.3
$region0: #{_lambda_.3}
  #allocation0 [shape = 'u32[]', space=smem, size = 0x4, offset = 0x4, fixed_abs, tag = 'smem constant byte address 0x4 - core index']
  #allocation1 [shape = 'u32[144,128]{1,0:T(1,128)}', space=vmem, size = 0x12000, scoped, tag = 'internal scratch']
  %s0 = inlined_call_operand.vmem [shape: bf16[2,5,256], index: 0, kind: input, shape index: {}]
  %s1 = inlined_call_operand.vmem [shape: bf16[256,32], index: 1, kind: input, shape index: {}]
  %s2 = inlined_call_operand.vmem [shape: f32[5,32], index: 2, kind: input, shape index: {}]
  %s3 = inlined_call_operand.vmem [shape: bf16[2,5,32], index: 3, kind: output, shape index: {}]
  %s4 = sld [smem:[#allocation0]]
  $region45: #{_lambda_.3} parent=0
    _
  %s6 = ssub.s32 1, %s4
  %s7 = scalar_select 0, %s6, %s4
  loop: start=0, step=1, limit=4
  $region2: #{_lambda_.3} parent=0 // loop_pre_header
    _
  $region3: #{_lambda_.3} parent=0 // loop_header
    %s9 = sphi 0, %s13
    %p10 = scmp.ge.s32.totalorder %s9, 4
    %s19 = sphi 0, %s21
    %s22 = sphi 0, %s19
    %s23 = sphi 0, %s22
    %s39 = sphi 0, %s23
    %s43 = sphi 0, %s43
    %s45 = sphi 0, %s43
    %s46 = sphi 0, %s45
    %s60 = sphi 0, %s46
    %s64 = sphi 0, %s64
    %s66 = sphi 0, %s64
    %s67 = sphi 0, %s66
    %s81 = sphi 0, %s67
    %s87 = sphi 0, %s89
    %s90 = sphi 0, %s87
    %s91 = sphi 0, %s90
    %s107 = sphi 0, %s91
  $region4: #{_lambda_.3} parent=0 // loop_header_branch
    %12 = sbr.rel (%p10) target = $region8
  $region5: #{_lambda_.3} parent=0 // loop_body
    %s14 = ssub.s32 %s9, 1
    %s15 = ssub.s32 %s9, 2
    %s16 = sadd.s32 %s9, 1
    %s17 = ssub.s32 %s9, %s16
    %p18 = scmp.eq.s32.totalorder %s17, 0
    %s20 = sadd.s32 %s19, 1
    %s21 = scalar_select %p18, %s19, %s20
    %p24 = pneg %p18
    %p25 = scmp.eq.s32.totalorder %s9, 1
    %p26 = por %p24, %p25
    %p27 = scmp.ne.s32.totalorder %s19, %s22
    %p28 = scmp.eq.s32.totalorder %s9, 0
    %p29 = por %p27, %p28
    %p30 = scmp.ne.s32.totalorder %s19, %s22
    %p31 = scmp.eq.s32.totalorder %s14, 1
    %p32 = por %p30, %p31
    %p33 = scmp.ne.s32.totalorder %s22, %s23
    %p34 = scmp.eq.s32.totalorder %s14, 0
    %p35 = por %p33, %p34
    %p36 = scmp.ne.s32.totalorder %s22, %s23
    %p37 = scmp.eq.s32.totalorder %s15, 1
    %p38 = por %p36, %p37
    %p40 = scmp.ne.s32.totalorder %s23, %s39
    %p41 = scmp.eq.s32.totalorder %s15, 0
    %p42 = por %p40, %p41
    %s44 = sadd.s32 %s43, 1
    %p47 = scmp.eq.s32.totalorder %s9, 1
    %p48 = scmp.ne.s32.totalorder %s43, %s45
    %p49 = scmp.eq.s32.totalorder %s9, 0
    %p50 = por %p48, %p49
    %p51 = scmp.ne.s32.totalorder %s43, %s45
    %p52 = scmp.eq.s32.totalorder %s14, 1
    %p53 = por %p51, %p52
    %p54 = scmp.ne.s32.totalorder %s45, %s46
    %p55 = scmp.eq.s32.totalorder %s14, 0
    %p56 = por %p54, %p55
    %p57 = scmp.ne.s32.totalorder %s45, %s46
    %p58 = scmp.eq.s32.totalorder %s15, 1
    %p59 = por %p57, %p58
    %p61 = scmp.ne.s32.totalorder %s46, %s60
    %p62 = scmp.eq.s32.totalorder %s15, 0
    %p63 = por %p61, %p62
    %s65 = sadd.s32 %s64, 1
    %p68 = scmp.eq.s32.totalorder %s9, 1
    %p69 = scmp.ne.s32.totalorder %s64, %s66
    %p70 = scmp.eq.s32.totalorder %s9, 0
    %p71 = por %p69, %p70
    %p72 = scmp.ne.s32.totalorder %s64, %s66
    %p73 = scmp.eq.s32.totalorder %s14, 1
    %p74 = por %p72, %p73
    %p75 = scmp.ne.s32.totalorder %s66, %s67
    %p76 = scmp.eq.s32.totalorder %s14, 0
    %p77 = por %p75, %p76
    %p78 = scmp.ne.s32.totalorder %s66, %s67
    %p79 = scmp.eq.s32.totalorder %s15, 1
    %p80 = por %p78, %p79
    %p82 = scmp.ne.s32.totalorder %s67, %s81
    %p83 = scmp.eq.s32.totalorder %s15, 0
    %p84 = por %p82, %p83
    %s85 = ssub.s32 %s9, %s16
    %p86 = scmp.eq.s32.totalorder %s85, 0
    %s88 = sadd.s32 %s87, 1
    %s89 = scalar_select %p86, %s87, %s88
    %p92 = pneg %p86
    %p93 = scmp.eq.s32.totalorder %s9, 1
    %p94 = por %p92, %p93
    %p95 = scmp.ne.s32.totalorder %s87, %s90
    %p96 = scmp.eq.s32.totalorder %s9, 0
    %p97 = por %p95, %p96
    %p98 = scmp.ne.s32.totalorder %s87, %s90
    %p99 = scmp.eq.s32.totalorder %s14, 1
    %p100 = por %p98, %p99
    %p101 = scmp.ne.s32.totalorder %s90, %s91
    %p102 = scmp.eq.s32.totalorder %s14, 0
    %p103 = por %p101, %p102
    %p104 = scmp.ne.s32.totalorder %s90, %s91
    %p105 = scmp.eq.s32.totalorder %s15, 1
    %p106 = por %p104, %p105
    %p108 = scmp.ne.s32.totalorder %s91, %s107
    %p109 = scmp.eq.s32.totalorder %s15, 0
    %p110 = por %p108, %p109
    %p111 = scmp.le.s32.totalorder 1, %s9
    %p112 = scmp.lt.s32.totalorder %s9, 3
    %p113 = pnand %p111, %p112
    %p114 = pneg %p113
    // Predicated region
    $region9: #{_lambda_.3} parent=5 // pred_check
      _
    $region10: #{_lambda_.3} parent=5 // pred_check_branch
      %116 = sbr.rel (%p113) target = $region12
    $region11: #{_lambda_.3} parent=5 // pred_region
      %s117 = ssub.s32 %s9, 1
      // Predicated region
      $region13: #{_lambda_.3} parent=11 // pred_check
        %p118 = pneg %p56
      $region14: #{_lambda_.3} parent=11 // pred_check_branch
        %120 = sbr.rel (%p118) target = $region16
      $region15: #{_lambda_.3} parent=11 // pred_region
        _
      $region16: #{_lambda_.3} parent=11 // pred_fallthru
        _
      // Predicated region
      $region17: #{_lambda_.3} parent=11 // pred_check
        %p121 = pneg %p77
      $region18: #{_lambda_.3} parent=11 // pred_check_branch
        %123 = sbr.rel (%p121) target = $region20
      $region19: #{_lambda_.3} parent=11 // pred_region
        _
      $region20: #{_lambda_.3} parent=11 // pred_fallthru
        _
    $region12: #{_lambda_.3} parent=5 // pred_fallthru
      _
    %p124 = scmp.lt.s32.totalorder %s9, 2
    // Predicated region
    $region21: #{_lambda_.3} parent=5 // pred_check
      %p125 = pneg %p124
    $region22: #{_lambda_.3} parent=5 // pred_check_branch
      %127 = sbr.rel (%p125) target = $region24
    $region23: #{_lambda_.3} parent=5 // pred_region
      // Predicated region
      $region25: #{_lambda_.3} parent=23 // pred_check
        %p128 = pneg %p29
      $region26: #{_lambda_.3} parent=23 // pred_check_branch
        %130 = sbr.rel (%p128) target = $region28
      $region27: #{_lambda_.3} parent=23 // pred_region
        %p131 = scmp.lt.s32.totalorder %s9, 1
        %s132 = scalar_select %p131, %s9, 1
        %s133 = smul.addr %s132, 2
        %s134 = smul.addr %s133, 4
        %s135 = scalar_lea.vmem %s0, %s134
      $region28: #{_lambda_.3} parent=23 // pred_fallthru
        _
    $region24: #{_lambda_.3} parent=5 // pred_fallthru
      _
    %p136 = scmp.le.s32.totalorder 1, %s9
    %p137 = scmp.lt.s32.totalorder %s9, 3
    %p138 = pnand %p136, %p137
    %p139 = pneg %p138
    // Predicated region
    $region29: #{_lambda_.3} parent=5 // pred_check
      _
    $region30: #{_lambda_.3} parent=5 // pred_check_branch
      %141 = sbr.rel (%p138) target = $region32
    $region31: #{_lambda_.3} parent=5 // pred_region
      %s142 = ssub.s32 %s9, 1
      %p143 = scmp.lt.s32.totalorder %s14, 1
      %s144 = scalar_select %p143, %s14, 1
      %s145 = smul.addr %s144, 2
      %s146 = smul.addr %s145, 4
      %s147 = scalar_lea.vmem %s0, %s146
      %p148 = pneg %p35
      %p149 = pneg %p32
      %p150 = pneg %p56
      %p151 = pneg %p53
      %p152 = pneg %p77
      %p153 = pneg %p74
      %p154 = pneg %p103
      %p155 = pneg %p100
      %p156 = scmp.lt.s32.totalorder %s14, 1
      %s157 = scalar_select %p156, %s14, 1
      %s158 = smul.addr %s157, 4
      %s159 = scalar_lea.vmem %s3, %s158
      %p160 = scmp.lt.s32.totalorder %s14, 1
      %s161 = scalar_select %p160, %s14, 1
      %s162 = smul.addr %s161, 2
      %s163 = smul.addr %s162, 4
      %s164 = scalar_lea.vmem %s0, %s163
      %p165 = scmp.lt.s32.totalorder %s14, 1
      %s166 = scalar_select %p165, %s14, 1
      %s167 = smul.addr %s166, 4
      %s168 = scalar_lea.vmem %s3, %s167
      %v170 = vld [vmem:[%s164] sm:$0x77]
      %v171 = vld [vmem:[%s1] sm:$0xf]
      %v172 = vld [vmem:[%s1 + $0x4] sm:$0xf]
      %v173 = vld [vmem:[%s1 + $0x8] sm:$0xf]
      %v174 = vld [vmem:[%s1 + $0xc] sm:$0xf]
      %v175 = vld [vmem:[%s1 + $0x10] sm:$0xf]
      %v176 = vld [vmem:[%s1 + $0x14] sm:$0xf]
      %v177 = vld [vmem:[%s1 + $0x18] sm:$0xf]
      %v178 = vld [vmem:[%s1 + $0x1c] sm:$0xf]
      %v179 = vld [vmem:[%s1 + $0x20] sm:$0xf]
      %v180 = vld [vmem:[%s1 + $0x24] sm:$0xf]
      %v181 = vld [vmem:[%s1 + $0x28] sm:$0xf]
      %v182 = vld [vmem:[%s1 + $0x2c] sm:$0xf]
      %v183 = vld [vmem:[%s1 + $0x30] sm:$0xf]
      %v184 = vld [vmem:[%s1 + $0x34] sm:$0xf]
      %v185 = vld [vmem:[%s1 + $0x38] sm:$0xf]
      %v186 = vld [vmem:[%s1 + $0x3c] sm:$0xf]
      %v187 = vld [vmem:[%s1 + $0x40] sm:$0xf]
      %v188 = vld [vmem:[%s1 + $0x44] sm:$0xf]
      %v189 = vld [vmem:[%s1 + $0x48] sm:$0xf]
      %v190 = vld [vmem:[%s1 + $0x4c] sm:$0xf]
      %v191 = vld [vmem:[%s1 + $0x50] sm:$0xf]
      %v192 = vld [vmem:[%s1 + $0x54] sm:$0xf]
      %v193 = vld [vmem:[%s1 + $0x58] sm:$0xf]
      %v194 = vld [vmem:[%s1 + $0x5c] sm:$0xf]
      %v195 = vld [vmem:[%s1 + $0x60] sm:$0xf]
      %v196 = vld [vmem:[%s1 + $0x64] sm:$0xf]
      %v197 = vld [vmem:[%s1 + $0x68] sm:$0xf]
      %v198 = vld [vmem:[%s1 + $0x6c] sm:$0xf]
      %v199 = vld [vmem:[%s1 + $0x70] sm:$0xf]
      %v200 = vld [vmem:[%s1 + $0x74] sm:$0xf]
      %v201 = vld [vmem:[%s1 + $0x78] sm:$0xf]
      %v202 = vld [vmem:[%s1 + $0x7c] sm:$0xf]
      %v203 = vld [vmem:[%s2] sm:$0x1f]
      %v205 = vunpack.c.l.b16 %v170
      %v206 = vunpack.c.h.b16 %v170
      %v207 = vpack.c.b16 %v205, %v205
      %v208 = vpack.c.b16 %v206, %v206
      %v243 = vunpack.c.l.b16 %v171
      %v244 = vunpack.c.l.b16 %v172
      %v245 = vunpack.c.l.b16 %v173
      %v246 = vunpack.c.l.b16 %v174
      %v247 = vunpack.c.l.b16 %v175
      %v248 = vunpack.c.l.b16 %v176
      %v249 = vunpack.c.l.b16 %v177
      %v250 = vunpack.c.l.b16 %v178
      %v251 = vunpack.c.l.b16 %v179
      %v252 = vunpack.c.l.b16 %v180
      %v253 = vunpack.c.l.b16 %v181
      %v254 = vunpack.c.l.b16 %v182
      %v255 = vunpack.c.l.b16 %v183
      %v256 = vunpack.c.l.b16 %v184
      %v257 = vunpack.c.l.b16 %v185
      %v258 = vunpack.c.l.b16 %v186
      %v259 = vunpack.c.l.b16 %v187
      %v260 = vunpack.c.l.b16 %v188
      %v261 = vunpack.c.l.b16 %v189
      %v262 = vunpack.c.l.b16 %v190
      %v263 = vunpack.c.l.b16 %v191
      %v264 = vunpack.c.l.b16 %v192
      %v265 = vunpack.c.l.b16 %v193
      %v266 = vunpack.c.l.b16 %v194
      %v267 = vunpack.c.l.b16 %v195
      %v268 = vunpack.c.l.b16 %v196
      %v269 = vunpack.c.l.b16 %v197
      %v270 = vunpack.c.l.b16 %v198
      %v271 = vunpack.c.l.b16 %v199
      %v272 = vunpack.c.l.b16 %v200
      %v273 = vunpack.c.l.b16 %v201
      %v274 = vunpack.c.l.b16 %v202
      %v275 = vpack.c.b16 %v244, %v243
      %v276 = vpack.c.b16 %v246, %v245
      %v277 = vpack.c.b16 %v248, %v247
      %v278 = vpack.c.b16 %v250, %v249
      %v279 = vpack.c.b16 %v252, %v251
      %v280 = vpack.c.b16 %v254, %v253
      %v281 = vpack.c.b16 %v256, %v255
      %v282 = vpack.c.b16 %v258, %v257
      %v283 = vpack.c.b16 %v260, %v259
      %v284 = vpack.c.b16 %v262, %v261
      %v285 = vpack.c.b16 %v264, %v263
      %v286 = vpack.c.b16 %v266, %v265
      %v287 = vpack.c.b16 %v268, %v267
      %v288 = vpack.c.b16 %v270, %v269
      %v289 = vpack.c.b16 %v272, %v271
      %v290 = vpack.c.b16 %v274, %v273
      %307 = vmatprep.subr.bf16.mxu0 0
      %308 = vmatpush1.bf16.msra.mxu0 %v275
      %309 = vmatprep.subr.bf16.mxu0 0
      %310 = vmatpush1.bf16.msra.mxu0 %v276
      %311 = vmatprep.subr.bf16.mxu0 0
      %312 = vmatpush1.bf16.msra.mxu0 %v277
      %313 = vmatprep.subr.bf16.mxu0 0
      %314 = vmatpush1.bf16.msra.mxu0 %v278
      %315 = vmatprep.subr.bf16.mxu0 0
      %316 = vmatpush1.bf16.msra.mxu0 %v279
      %317 = vmatprep.subr.bf16.mxu0 0
      %318 = vmatpush1.bf16.msra.mxu0 %v280
      %319 = vmatprep.subr.bf16.mxu0 0
      %320 = vmatpush1.bf16.msra.mxu0 %v281
      %321 = vmatprep.subr.bf16.mxu0 0
      %322 = vmatpush1.bf16.msra.mxu0 %v282
      %323 = vmatprep.subr.bf16.mxu0 0
      %324 = vmatpush1.bf16.msra.mxu0 %v283
      %325 = vmatprep.subr.bf16.mxu0 0
      %326 = vmatpush1.bf16.msra.mxu0 %v284
      %327 = vmatprep.subr.bf16.mxu0 0
      %328 = vmatpush1.bf16.msra.mxu0 %v285
      %329 = vmatprep.subr.bf16.mxu0 0
      %330 = vmatpush1.bf16.msra.mxu0 %v286
      %331 = vmatprep.subr.bf16.mxu0 0
      %332 = vmatpush1.bf16.msra.mxu0 %v287
      %333 = vmatprep.subr.bf16.mxu0 0
      %334 = vmatpush1.bf16.msra.mxu0 %v288
      %335 = vmatprep.subr.bf16.mxu0 0
      %336 = vmatpush1.bf16.msra.mxu0 %v289
      %337 = vmatprep.subr.bf16.mxu0 0
      %338 = vmatpush1.bf16.msra.mxu0 %v290
      %339 = vmatprep.mubr.bf16.mxu0 %v208
      %340 = vmatmul.mubr.bf16.gmra.mrb[0].mxu0 %v207
      %v341 = vpop.f32.mrb[0].mxu0
      %v342 = vadd.f32 %v203, %v341
      %v343 = vpop.f32.mrb[0].mxu0
      %v344 = vpop.f32.mrb[0].mxu0
      %v345 = vpop.f32.mrb[0].mxu0
      %346 = vdwg.mxu0
      %v347 = vpack.c.bf16 %v342, %v342
      %vm348 = vcmask 256000
      %vm349 = vsmask.f32 2304
      %vm350 = vmand %vm348, %vm349
      %v351 = vld [vmem:[%s168] sm:$0x7]
      %v352 = vsel %vm350, %v347, %v351
      %353 = vst [vmem:[%s168] sm:$0x7] %v352
      %p354 = scmp.lt.s32.totalorder %s14, 1
      %s355 = scalar_select %p354, %s14, 1
      %s356 = smul.addr %s355, 4
      %s357 = scalar_lea.vmem %s3, %s356
      // Predicated region
      $region33: #{_lambda_.3} parent=31 // pred_check
        %p358 = pneg %p100
      $region34: #{_lambda_.3} parent=31 // pred_check_branch
        %360 = sbr.rel (%p358) target = $region36
      $region35: #{_lambda_.3} parent=31 // pred_region
        _
      $region36: #{_lambda_.3} parent=31 // pred_fallthru
        _
    $region32: #{_lambda_.3} parent=5 // pred_fallthru
      _
    %p361 = scmp.le.s32.totalorder 2, %s9
    // Predicated region
    $region37: #{_lambda_.3} parent=5 // pred_check
      %p362 = pneg %p361
    $region38: #{_lambda_.3} parent=5 // pred_check_branch
      %364 = sbr.rel (%p362) target = $region40
    $region39: #{_lambda_.3} parent=5 // pred_region
      %s365 = ssub.s32 %s9, 2
      // Predicated region
      $region41: #{_lambda_.3} parent=39 // pred_check
        %p366 = pneg %p106
      $region42: #{_lambda_.3} parent=39 // pred_check_branch
        %368 = sbr.rel (%p366) target = $region44
      $region43: #{_lambda_.3} parent=39 // pred_region
        %p369 = scmp.lt.s32.totalorder %s15, 1
        %s370 = scalar_select %p369, %s15, 1
        %s371 = smul.addr %s370, 4
        %s372 = scalar_lea.vmem %s3, %s371
      $region44: #{_lambda_.3} parent=39 // pred_fallthru
        _
    $region40: #{_lambda_.3} parent=5 // pred_fallthru
      _
  $region6: #{_lambda_.3} parent=0 // loop_footer
    %s13 = sadd.s32 1, %s9
  $region7: #{_lambda_.3} parent=0 // loop_footer_branch
    %8 = sbr.rel target = $region3
  $region8: #{_lambda_.3} parent=0 // loop_exit
    _

// kernel: _lambda_.5
$region0: #{_lambda_.5}
  #allocation0 [shape = 'u32[]', space=smem, size = 0x4, offset = 0x4, fixed_abs, tag = 'smem constant byte address 0x4 - core index']
  #allocation1 [shape = 'u32[144,128]{1,0:T(1,128)}', space=vmem, size = 0x12000, scoped, tag = 'internal scratch']
  %s0 = inlined_call_operand.vmem [shape: f32[2,32], index: 0, kind: input, shape index: {}]
  %s1 = inlined_call_operand.vmem [shape: f32[1,32], index: 1, kind: input, shape index: {}]
  %s2 = inlined_call_operand.vmem [shape: f32[1,32], index: 2, kind: input, shape index: {}]
  %s3 = inlined_call_operand.vmem [shape: bf16[32,128], index: 3, kind: input, shape index: {}]
  %s4 = inlined_call_operand.vmem [shape: f32[1,128], index: 4, kind: input, shape index: {}]
  %s5 = inlined_call_operand.hbm [shape: f32[2,128], index: 5, kind: output, shape index: {}]
  %s6 = sld [smem:[#allocation0]]
  $region30: #{_lambda_.5} parent=0
    _
  %s8 = ssub.s32 1, %s6
  %s9 = scalar_select 0, %s8, %s6
  $region1: #{_lambda_.5} parent=0
    #allocation2 [shape = 'u8[1024]{0}', space=vmem, size = 0x400, scoped, tag = 'output window, operand 0, single buffered']
    #allocation3 [shape = 's32[1]{0}', space=sflag, size = 0x4, scoped, tag = 'scoped memory for _lambda_.5']
    %10 = vsyncpa [#allocation3], 0
    // Predicated region
    $region2: #{_lambda_.5} parent=1 // pred_check
      _
    $region3: #{_lambda_.5} parent=1 // pred_check_branch
      %12 = sbr.rel (0) target = $region5
    $region4: #{_lambda_.5} parent=1 // pred_region
      _
    $region5: #{_lambda_.5} parent=1 // pred_fallthru
      _
    // Predicated region
    $region6: #{_lambda_.5} parent=1 // pred_check
      _
    $region7: #{_lambda_.5} parent=1 // pred_check_branch
      %14 = sbr.rel (0) target = $region9
    $region8: #{_lambda_.5} parent=1 // pred_region
      _
    $region9: #{_lambda_.5} parent=1 // pred_fallthru
      _
    // Predicated region
    $region10: #{_lambda_.5} parent=1 // pred_check
      _
    $region11: #{_lambda_.5} parent=1 // pred_check_branch
      %16 = sbr.rel (0) target = $region13
    $region12: #{_lambda_.5} parent=1 // pred_region
      _
    $region13: #{_lambda_.5} parent=1 // pred_fallthru
      _
    // Predicated region
    $region14: #{_lambda_.5} parent=1 // pred_check
      _
    $region15: #{_lambda_.5} parent=1 // pred_check_branch
      %18 = sbr.rel (0) target = $region17
    $region16: #{_lambda_.5} parent=1 // pred_region
      _
    $region17: #{_lambda_.5} parent=1 // pred_fallthru
      _
    // Predicated region
    $region18: #{_lambda_.5} parent=1 // pred_check
      _
    $region19: #{_lambda_.5} parent=1 // pred_check_branch
      %20 = sbr.rel (0) target = $region21
    $region20: #{_lambda_.5} parent=1 // pred_region
      _
    $region21: #{_lambda_.5} parent=1 // pred_fallthru
      _
    %v22 = vld [vmem:[%s0] sm:$0x3]
    %v23 = vld [vmem:[%s1] sm:$0x1]
    %v24 = vld [vmem:[%s2] sm:$0x1]
    %vm25 = vcmask 254976
    %v26 = vsel %vm25, %v22, 0.0
    %27 = vadd.xlane.f32.xlu0 %v26
    %v28 = vpop.xlane.xlu0 %27
    %v29 = vrcp.pop 32.0
    %v30 = vmul.f32 %v28, %v29
    %v31 = vsub.f32 %v22, %v30
    %v32 = vmul.f32 %v31, %v31
    %v33 = vsel %vm25, %v32, 0.0
    %34 = vadd.xlane.f32.xlu0 %v33
    %v35 = vpop.xlane.xlu0 %34
    %v36 = vmul.f32 %v35, %v29
    %v37 = vadd.f32 %v36, 1e-05
    %v38 = vrsqrt.pop %v37
    %v39 = vmul.f32 %v31, %v38
    %v41 = vlaneseq
    %v42 = vshrl.u32 %v41, 7
    %v43 = vsub.s32 0, %v42
    %v44 = vrot.slane %v23, %v43
    %v46 = vmul.f32 %v39, %v44
    %v48 = vlaneseq
    %v49 = vshrl.u32 %v48, 7
    %v50 = vsub.s32 0, %v49
    %v51 = vrot.slane %v24, %v50
    %v53 = vadd.f32 %v46, %v51
    %v54 = vpack.c.bf16 %v53, %v53
    %v55 = vld [vmem:[%s3] sm:$0xf]
    %v56 = vld [vmem:[%s3 + $0x4] sm:$0xf]
    %v57 = vld [vmem:[%s3 + $0x8] sm:$0xf]
    %v58 = vld [vmem:[%s3 + $0xc] sm:$0xf]
    %v59 = vld [vmem:[%s4] sm:$0x1]
    %v61 = vlaneseq
    %v62 = vshrl.u32 %v61, 7
    %v63 = vsub.s32 0, %v62
    %v64 = vrot.slane %v59, %v63
    %v70 = vunpack.c.l.b16 %v55
    %v71 = vunpack.c.l.b16 %v56
    %v72 = vunpack.c.l.b16 %v57
    %v73 = vunpack.c.l.b16 %v58
    %v74 = vpack.c.b16 %v71, %v70
    %v75 = vpack.c.b16 %v73, %v72
    %vm78 = vcmask 261120
    %v80 = vsel %vm78, %v54, 0
    %82 = vmatprep.subr.bf16.mxu0 0
    %83 = vmatpush1.bf16.msra.mxu0 %v74
    %84 = vmatprep.subr.bf16.mxu0 0
    %85 = vmatpush1.bf16.msra.mxu0 %v75
    %86 = vmatprep.subr.bf16.mxu0 0
    %87 = vmatpush1.bf16.msra.mxu0 0
    %88 = vmatprep.subr.bf16.mxu0 0
    %89 = vmatpush1.bf16.msra.mxu0 0
    %90 = vmatprep.subr.bf16.mxu0 0
    %91 = vmatpush1.bf16.msra.mxu0 0
    %92 = vmatprep.subr.bf16.mxu0 0
    %93 = vmatpush1.bf16.msra.mxu0 0
    %94 = vmatprep.subr.bf16.mxu0 0
    %95 = vmatpush1.bf16.msra.mxu0 0
    %96 = vmatprep.subr.bf16.mxu0 0
    %97 = vmatpush1.bf16.msra.mxu0 0
    %98 = vmatprep.subr.bf16.mxu0 0
    %99 = vmatpush1.bf16.msra.mxu0 0
    %100 = vmatprep.subr.bf16.mxu0 0
    %101 = vmatpush1.bf16.msra.mxu0 0
    %102 = vmatprep.subr.bf16.mxu0 0
    %103 = vmatpush1.bf16.msra.mxu0 0
    %104 = vmatprep.subr.bf16.mxu0 0
    %105 = vmatpush1.bf16.msra.mxu0 0
    %106 = vmatprep.subr.bf16.mxu0 0
    %107 = vmatpush1.bf16.msra.mxu0 0
    %108 = vmatprep.subr.bf16.mxu0 0
    %109 = vmatpush1.bf16.msra.mxu0 0
    %110 = vmatprep.subr.bf16.mxu0 0
    %111 = vmatpush1.bf16.msra.mxu0 0
    %112 = vmatprep.subr.bf16.mxu0 0
    %113 = vmatpush1.bf16.msra.mxu0 0
    %114 = vmatprep.mubr.bf16.mxu0 0
    %115 = vmatmul.mubr.bf16.gmra.mrb[0].mxu0 %v80
    %v116 = vpop.f32.mrb[0].mxu0
    %v117 = vadd.f32 %v64, %v116
    %v118 = vpop.f32.mrb[0].mxu0
    %v119 = vpop.f32.mrb[0].mxu0
    %v120 = vpop.f32.mrb[0].mxu0
    %121 = vdwg.mxu0
    %122 = vst [vmem:[#allocation2] sm:$0x3] %v117
    // Predicated region
    $region22: #{_lambda_.5} parent=1 // pred_check
      _
    $region23: #{_lambda_.5} parent=1 // pred_check_branch
      %124 = sbr.rel (0) target = $region25
    $region24: #{_lambda_.5} parent=1 // pred_region
      %s126 = ssub.s32 32, 32
      %127 = vsyncadd [#allocation3], %s126
      %s129 = sshll.u32 [#allocation2], 4
      %s130 = int_to_ptr.vmem [resolvable:$true] %s129
      %132 = dma.vmem_to_hbm [thread:$0]  %s130, 32, %s5, [#allocation3]
    $region25: #{_lambda_.5} parent=1 // pred_fallthru
      _
    // Predicated region
    $region26: #{_lambda_.5} parent=1 // pred_check
      _
    $region27: #{_lambda_.5} parent=1 // pred_check_branch
      %134 = sbr.rel (0) target = $region29
    $region28: #{_lambda_.5} parent=1 // pred_region
      %135 = dma.done [#allocation3], 32
    $region29: #{_lambda_.5} parent=1 // pred_fallthru
      _
    %136 = vsyncpa [#allocation3], 1

// kernel: _lambda_.4
$region0: #{_lambda_.4}
  #allocation0 [shape = 'u32[]', space=smem, size = 0x4, offset = 0x4, fixed_abs, tag = 'smem constant byte address 0x4 - core index']
  #allocation1 [shape = 'u32[144,128]{1,0:T(1,128)}', space=vmem, size = 0x12000, scoped, tag = 'internal scratch']
  #allocation2 [shape = 'f32[2,5,32]{2,1,0:T(8,128)}', space=vmem, size = 0x2000, scoped, tag = 'scratch operand']
  #allocation3 [shape = 'bf16[5,32]{1,0:T(8,128)(2,1)}', space=vmem, size = 0x800, scoped, tag = 'scratch operand']
  %s0 = inlined_call_operand.vmem [shape: bf16[2,5,32], index: 0, kind: input, shape index: {}]
  %s1 = inlined_call_operand.vmem [shape: f32[2,1,32], index: 1, kind: input, shape index: {}]
  %s2 = inlined_call_operand.vmem [shape: f32[2,1,32], index: 2, kind: input, shape index: {}]
  %s3 = inlined_call_operand.vmem [shape: bf16[2,32,96], index: 3, kind: input, shape index: {}]
  %s4 = inlined_call_operand.vmem [shape: bf16[2,32,32], index: 4, kind: input, shape index: {}]
  %s5 = inlined_call_operand.vmem [shape: f32[2,1,32], index: 5, kind: input, shape index: {}]
  %s6 = inlined_call_operand.vmem [shape: f32[2,1,32], index: 6, kind: input, shape index: {}]
  %s7 = inlined_call_operand.vmem [shape: f32[2,1,32], index: 7, kind: input, shape index: {}]
  %s8 = inlined_call_operand.vmem [shape: bf16[2,32,64], index: 8, kind: input, shape index: {}]
  %s9 = inlined_call_operand.vmem [shape: f32[2,1,64], index: 9, kind: input, shape index: {}]
  %s10 = inlined_call_operand.vmem [shape: bf16[2,64,32], index: 10, kind: input, shape index: {}]
  %s11 = inlined_call_operand.vmem [shape: f32[2,1,32], index: 11, kind: input, shape index: {}]
  %s12 = inlined_call_operand.vmem [shape: f32[2,1,32], index: 12, kind: output, shape index: {}]
  %s13 = sld [smem:[#allocation0]]
  $region89: #{_lambda_.4} parent=0
    _
  %s15 = ssub.s32 1, %s13
  %s16 = scalar_select 0, %s15, %s13
  loop: start=0, step=1, limit=4
  $region2: #{_lambda_.4} parent=0 // loop_pre_header
    _
  $region3: #{_lambda_.4} parent=0 // loop_header
    %s18 = sphi 0, %s22
    %p19 = scmp.ge.s32.totalorder %s18, 4
    %s25 = sphi 0, %s37
    %s26 = sphi 0, %s33
    %s27 = sphi 0, %s25
    %s28 = sphi 0, %s26
    %s29 = sphi 0, %s27
    %s30 = sphi 0, %s28
    %s40 = sphi 0, %s42
    %s43 = sphi 0, %s40
    %s44 = sphi 0, %s43
    %s60 = sphi 0, %s44
    %s66 = sphi 0, %s68
    %s69 = sphi 0, %s66
    %s70 = sphi 0, %s69
    %s86 = sphi 0, %s70
    %s92 = sphi 0, %s94
    %s95 = sphi 0, %s92
    %s96 = sphi 0, %s95
    %s112 = sphi 0, %s96
    %s118 = sphi 0, %s120
    %s121 = sphi 0, %s118
    %s122 = sphi 0, %s121
    %s138 = sphi 0, %s122
    %s144 = sphi 0, %s146
    %s147 = sphi 0, %s144
    %s148 = sphi 0, %s147
    %s164 = sphi 0, %s148
    %s170 = sphi 0, %s172
    %s173 = sphi 0, %s170
    %s174 = sphi 0, %s173
    %s190 = sphi 0, %s174
    %s196 = sphi 0, %s198
    %s199 = sphi 0, %s196
    %s200 = sphi 0, %s199
    %s216 = sphi 0, %s200
    %s222 = sphi 0, %s224
    %s225 = sphi 0, %s222
    %s226 = sphi 0, %s225
    %s242 = sphi 0, %s226
    %s248 = sphi 0, %s250
    %s251 = sphi 0, %s248
    %s252 = sphi 0, %s251
    %s268 = sphi 0, %s252
    %s274 = sphi 0, %s276
    %s277 = sphi 0, %s274
    %s278 = sphi 0, %s277
    %s294 = sphi 0, %s278
    %s300 = sphi 0, %s302
    %s303 = sphi 0, %s300
    %s304 = sphi 0, %s303
    %s320 = sphi 0, %s304
    %s326 = sphi 0, %s328
    %s329 = sphi 0, %s326
    %s330 = sphi 0, %s329
    %s346 = sphi 0, %s330
    %s352 = sphi 0, %s354
    %s355 = sphi 0, %s352
    %s356 = sphi 0, %s355
    %s372 = sphi 0, %s356
  $region4: #{_lambda_.4} parent=0 // loop_header_branch
    %21 = sbr.rel (%p19) target = $region8
  $region5: #{_lambda_.4} parent=0 // loop_body
    %s23 = ssub.s32 %s18, 1
    %s24 = ssub.s32 %s18, 2
    %s31 = sadd.s32 1, %s26
    %p32 = scmp.ge.s32.totalorder %s31, 2
    %s33 = scalar_select %p32, 0, %s31
    %s34 = sadd.s32 1, %s25
    %s35 = scalar_select %p32, %s34, %s25
    %p36 = scmp.ge.s32.totalorder %s35, 1
    %s37 = scalar_select %p36, 0, %s35
    %s38 = ssub.s32 %s25, %s37
    %p39 = scmp.eq.s32.totalorder %s38, 0
    %s41 = sadd.s32 %s40, 1
    %s42 = scalar_select %p39, %s40, %s41
    %p45 = pneg %p39
    %p46 = scmp.eq.s32.totalorder %s18, 1
    %p47 = por %p45, %p46
    %p48 = scmp.ne.s32.totalorder %s40, %s43
    %p49 = scmp.eq.s32.totalorder %s18, 0
    %p50 = por %p48, %p49
    %p51 = scmp.ne.s32.totalorder %s40, %s43
    %p52 = scmp.eq.s32.totalorder %s23, 1
    %p53 = por %p51, %p52
    %p54 = scmp.ne.s32.totalorder %s43, %s44
    %p55 = scmp.eq.s32.totalorder %s23, 0
    %p56 = por %p54, %p55
    %p57 = scmp.ne.s32.totalorder %s43, %s44
    %p58 = scmp.eq.s32.totalorder %s24, 1
    %p59 = por %p57, %p58
    %p61 = scmp.ne.s32.totalorder %s44, %s60
    %p62 = scmp.eq.s32.totalorder %s24, 0
    %p63 = por %p61, %p62
    %s64 = ssub.s32 %s26, %s33
    %p65 = scmp.eq.s32.totalorder %s64, 0
    %s67 = sadd.s32 %s66, 1
    %s68 = scalar_select %p65, %s66, %s67
    %p71 = pneg %p65
    %p72 = scmp.eq.s32.totalorder %s18, 1
    %p73 = por %p71, %p72
    %p74 = scmp.ne.s32.totalorder %s66, %s69
    %p75 = scmp.eq.s32.totalorder %s18, 0
    %p76 = por %p74, %p75
    %p77 = scmp.ne.s32.totalorder %s66, %s69
    %p78 = scmp.eq.s32.totalorder %s23, 1
    %p79 = por %p77, %p78
    %p80 = scmp.ne.s32.totalorder %s69, %s70
    %p81 = scmp.eq.s32.totalorder %s23, 0
    %p82 = por %p80, %p81
    %p83 = scmp.ne.s32.totalorder %s69, %s70
    %p84 = scmp.eq.s32.totalorder %s24, 1
    %p85 = por %p83, %p84
    %p87 = scmp.ne.s32.totalorder %s70, %s86
    %p88 = scmp.eq.s32.totalorder %s24, 0
    %p89 = por %p87, %p88
    %s90 = ssub.s32 %s26, %s33
    %p91 = scmp.eq.s32.totalorder %s90, 0
    %s93 = sadd.s32 %s92, 1
    %s94 = scalar_select %p91, %s92, %s93
    %p97 = pneg %p91
    %p98 = scmp.eq.s32.totalorder %s18, 1
    %p99 = por %p97, %p98
    %p100 = scmp.ne.s32.totalorder %s92, %s95
    %p101 = scmp.eq.s32.totalorder %s18, 0
    %p102 = por %p100, %p101
    %p103 = scmp.ne.s32.totalorder %s92, %s95
    %p104 = scmp.eq.s32.totalorder %s23, 1
    %p105 = por %p103, %p104
    %p106 = scmp.ne.s32.totalorder %s95, %s96
    %p107 = scmp.eq.s32.totalorder %s23, 0
    %p108 = por %p106, %p107
    %p109 = scmp.ne.s32.totalorder %s95, %s96
    %p110 = scmp.eq.s32.totalorder %s24, 1
    %p111 = por %p109, %p110
    %p113 = scmp.ne.s32.totalorder %s96, %s112
    %p114 = scmp.eq.s32.totalorder %s24, 0
    %p115 = por %p113, %p114
    %s116 = ssub.s32 %s26, %s33
    %p117 = scmp.eq.s32.totalorder %s116, 0
    %s119 = sadd.s32 %s118, 1
    %s120 = scalar_select %p117, %s118, %s119
    %p123 = pneg %p117
    %p124 = scmp.eq.s32.totalorder %s18, 1
    %p125 = por %p123, %p124
    %p126 = scmp.ne.s32.totalorder %s118, %s121
    %p127 = scmp.eq.s32.totalorder %s18, 0
    %p128 = por %p126, %p127
    %p129 = scmp.ne.s32.totalorder %s118, %s121
    %p130 = scmp.eq.s32.totalorder %s23, 1
    %p131 = por %p129, %p130
    %p132 = scmp.ne.s32.totalorder %s121, %s122
    %p133 = scmp.eq.s32.totalorder %s23, 0
    %p134 = por %p132, %p133
    %p135 = scmp.ne.s32.totalorder %s121, %s122
    %p136 = scmp.eq.s32.totalorder %s24, 1
    %p137 = por %p135, %p136
    %p139 = scmp.ne.s32.totalorder %s122, %s138
    %p140 = scmp.eq.s32.totalorder %s24, 0
    %p141 = por %p139, %p140
    %s142 = ssub.s32 %s26, %s33
    %p143 = scmp.eq.s32.totalorder %s142, 0
    %s145 = sadd.s32 %s144, 1
    %s146 = scalar_select %p143, %s144, %s145
    %p149 = pneg %p143
    %p150 = scmp.eq.s32.totalorder %s18, 1
    %p151 = por %p149, %p150
    %p152 = scmp.ne.s32.totalorder %s144, %s147
    %p153 = scmp.eq.s32.totalorder %s18, 0
    %p154 = por %p152, %p153
    %p155 = scmp.ne.s32.totalorder %s144, %s147
    %p156 = scmp.eq.s32.totalorder %s23, 1
    %p157 = por %p155, %p156
    %p158 = scmp.ne.s32.totalorder %s147, %s148
    %p159 = scmp.eq.s32.totalorder %s23, 0
    %p160 = por %p158, %p159
    %p161 = scmp.ne.s32.totalorder %s147, %s148
    %p162 = scmp.eq.s32.totalorder %s24, 1
    %p163 = por %p161, %p162
    %p165 = scmp.ne.s32.totalorder %s148, %s164
    %p166 = scmp.eq.s32.totalorder %s24, 0
    %p167 = por %p165, %p166
    %s168 = ssub.s32 %s26, %s33
    %p169 = scmp.eq.s32.totalorder %s168, 0
    %s171 = sadd.s32 %s170, 1
    %s172 = scalar_select %p169, %s170, %s171
    %p175 = pneg %p169
    %p176 = scmp.eq.s32.totalorder %s18, 1
    %p177 = por %p175, %p176
    %p178 = scmp.ne.s32.totalorder %s170, %s173
    %p179 = scmp.eq.s32.totalorder %s18, 0
    %p180 = por %p178, %p179
    %p181 = scmp.ne.s32.totalorder %s170, %s173
    %p182 = scmp.eq.s32.totalorder %s23, 1
    %p183 = por %p181, %p182
    %p184 = scmp.ne.s32.totalorder %s173, %s174
    %p185 = scmp.eq.s32.totalorder %s23, 0
    %p186 = por %p184, %p185
    %p187 = scmp.ne.s32.totalorder %s173, %s174
    %p188 = scmp.eq.s32.totalorder %s24, 1
    %p189 = por %p187, %p188
    %p191 = scmp.ne.s32.totalorder %s174, %s190
    %p192 = scmp.eq.s32.totalorder %s24, 0
    %p193 = por %p191, %p192
    %s194 = ssub.s32 %s26, %s33
    %p195 = scmp.eq.s32.totalorder %s194, 0
    %s197 = sadd.s32 %s196, 1
    %s198 = scalar_select %p195, %s196, %s197
    %p201 = pneg %p195
    %p202 = scmp.eq.s32.totalorder %s18, 1
    %p203 = por %p201, %p202
    %p204 = scmp.ne.s32.totalorder %s196, %s199
    %p205 = scmp.eq.s32.totalorder %s18, 0
    %p206 = por %p204, %p205
    %p207 = scmp.ne.s32.totalorder %s196, %s199
    %p208 = scmp.eq.s32.totalorder %s23, 1
    %p209 = por %p207, %p208
    %p210 = scmp.ne.s32.totalorder %s199, %s200
    %p211 = scmp.eq.s32.totalorder %s23, 0
    %p212 = por %p210, %p211
    %p213 = scmp.ne.s32.totalorder %s199, %s200
    %p214 = scmp.eq.s32.totalorder %s24, 1
    %p215 = por %p213, %p214
    %p217 = scmp.ne.s32.totalorder %s200, %s216
    %p218 = scmp.eq.s32.totalorder %s24, 0
    %p219 = por %p217, %p218
    %s220 = ssub.s32 %s26, %s33
    %p221 = scmp.eq.s32.totalorder %s220, 0
    %s223 = sadd.s32 %s222, 1
    %s224 = scalar_select %p221, %s222, %s223
    %p227 = pneg %p221
    %p228 = scmp.eq.s32.totalorder %s18, 1
    %p229 = por %p227, %p228
    %p230 = scmp.ne.s32.totalorder %s222, %s225
    %p231 = scmp.eq.s32.totalorder %s18, 0
    %p232 = por %p230, %p231
    %p233 = scmp.ne.s32.totalorder %s222, %s225
    %p234 = scmp.eq.s32.totalorder %s23, 1
    %p235 = por %p233, %p234
    %p236 = scmp.ne.s32.totalorder %s225, %s226
    %p237 = scmp.eq.s32.totalorder %s23, 0
    %p238 = por %p236, %p237
    %p239 = scmp.ne.s32.totalorder %s225, %s226
    %p240 = scmp.eq.s32.totalorder %s24, 1
    %p241 = por %p239, %p240
    %p243 = scmp.ne.s32.totalorder %s226, %s242
    %p244 = scmp.eq.s32.totalorder %s24, 0
    %p245 = por %p243, %p244
    %s246 = ssub.s32 %s26, %s33
    %p247 = scmp.eq.s32.totalorder %s246, 0
    %s249 = sadd.s32 %s248, 1
    %s250 = scalar_select %p247, %s248, %s249
    %p253 = pneg %p247
    %p254 = scmp.eq.s32.totalorder %s18, 1
    %p255 = por %p253, %p254
    %p256 = scmp.ne.s32.totalorder %s248, %s251
    %p257 = scmp.eq.s32.totalorder %s18, 0
    %p258 = por %p256, %p257
    %p259 = scmp.ne.s32.totalorder %s248, %s251
    %p260 = scmp.eq.s32.totalorder %s23, 1
    %p261 = por %p259, %p260
    %p262 = scmp.ne.s32.totalorder %s251, %s252
    %p263 = scmp.eq.s32.totalorder %s23, 0
    %p264 = por %p262, %p263
    %p265 = scmp.ne.s32.totalorder %s251, %s252
    %p266 = scmp.eq.s32.totalorder %s24, 1
    %p267 = por %p265, %p266
    %p269 = scmp.ne.s32.totalorder %s252, %s268
    %p270 = scmp.eq.s32.totalorder %s24, 0
    %p271 = por %p269, %p270
    %s272 = ssub.s32 %s26, %s33
    %p273 = scmp.eq.s32.totalorder %s272, 0
    %s275 = sadd.s32 %s274, 1
    %s276 = scalar_select %p273, %s274, %s275
    %p279 = pneg %p273
    %p280 = scmp.eq.s32.totalorder %s18, 1
    %p281 = por %p279, %p280
    %p282 = scmp.ne.s32.totalorder %s274, %s277
    %p283 = scmp.eq.s32.totalorder %s18, 0
    %p284 = por %p282, %p283
    %p285 = scmp.ne.s32.totalorder %s274, %s277
    %p286 = scmp.eq.s32.totalorder %s23, 1
    %p287 = por %p285, %p286
    %p288 = scmp.ne.s32.totalorder %s277, %s278
    %p289 = scmp.eq.s32.totalorder %s23, 0
    %p290 = por %p288, %p289
    %p291 = scmp.ne.s32.totalorder %s277, %s278
    %p292 = scmp.eq.s32.totalorder %s24, 1
    %p293 = por %p291, %p292
    %p295 = scmp.ne.s32.totalorder %s278, %s294
    %p296 = scmp.eq.s32.totalorder %s24, 0
    %p297 = por %p295, %p296
    %s298 = ssub.s32 %s26, %s33
    %p299 = scmp.eq.s32.totalorder %s298, 0
    %s301 = sadd.s32 %s300, 1
    %s302 = scalar_select %p299, %s300, %s301
    %p305 = pneg %p299
    %p306 = scmp.eq.s32.totalorder %s18, 1
    %p307 = por %p305, %p306
    %p308 = scmp.ne.s32.totalorder %s300, %s303
    %p309 = scmp.eq.s32.totalorder %s18, 0
    %p310 = por %p308, %p309
    %p311 = scmp.ne.s32.totalorder %s300, %s303
    %p312 = scmp.eq.s32.totalorder %s23, 1
    %p313 = por %p311, %p312
    %p314 = scmp.ne.s32.totalorder %s303, %s304
    %p315 = scmp.eq.s32.totalorder %s23, 0
    %p316 = por %p314, %p315
    %p317 = scmp.ne.s32.totalorder %s303, %s304
    %p318 = scmp.eq.s32.totalorder %s24, 1
    %p319 = por %p317, %p318
    %p321 = scmp.ne.s32.totalorder %s304, %s320
    %p322 = scmp.eq.s32.totalorder %s24, 0
    %p323 = por %p321, %p322
    %s324 = ssub.s32 %s26, %s33
    %p325 = scmp.eq.s32.totalorder %s324, 0
    %s327 = sadd.s32 %s326, 1
    %s328 = scalar_select %p325, %s326, %s327
    %p331 = pneg %p325
    %p332 = scmp.eq.s32.totalorder %s18, 1
    %p333 = por %p331, %p332
    %p334 = scmp.ne.s32.totalorder %s326, %s329
    %p335 = scmp.eq.s32.totalorder %s18, 0
    %p336 = por %p334, %p335
    %p337 = scmp.ne.s32.totalorder %s326, %s329
    %p338 = scmp.eq.s32.totalorder %s23, 1
    %p339 = por %p337, %p338
    %p340 = scmp.ne.s32.totalorder %s329, %s330
    %p341 = scmp.eq.s32.totalorder %s23, 0
    %p342 = por %p340, %p341
    %p343 = scmp.ne.s32.totalorder %s329, %s330
    %p344 = scmp.eq.s32.totalorder %s24, 1
    %p345 = por %p343, %p344
    %p347 = scmp.ne.s32.totalorder %s330, %s346
    %p348 = scmp.eq.s32.totalorder %s24, 0
    %p349 = por %p347, %p348
    %s350 = ssub.s32 %s25, %s37
    %p351 = scmp.eq.s32.totalorder %s350, 0
    %s353 = sadd.s32 %s352, 1
    %s354 = scalar_select %p351, %s352, %s353
    %p357 = pneg %p351
    %p358 = scmp.eq.s32.totalorder %s18, 1
    %p359 = por %p357, %p358
    %p360 = scmp.ne.s32.totalorder %s352, %s355
    %p361 = scmp.eq.s32.totalorder %s18, 0
    %p362 = por %p360, %p361
    %p363 = scmp.ne.s32.totalorder %s352, %s355
    %p364 = scmp.eq.s32.totalorder %s23, 1
    %p365 = por %p363, %p364
    %p366 = scmp.ne.s32.totalorder %s355, %s356
    %p367 = scmp.eq.s32.totalorder %s23, 0
    %p368 = por %p366, %p367
    %p369 = scmp.ne.s32.totalorder %s355, %s356
    %p370 = scmp.eq.s32.totalorder %s24, 1
    %p371 = por %p369, %p370
    %p373 = scmp.ne.s32.totalorder %s356, %s372
    %p374 = scmp.eq.s32.totalorder %s24, 0
    %p375 = por %p373, %p374
    %p376 = scmp.le.s32.totalorder 1, %s18
    %p377 = scmp.lt.s32.totalorder %s18, 3
    %p378 = pnand %p376, %p377
    %p379 = pneg %p378
    // Predicated region
    $region9: #{_lambda_.4} parent=5 // pred_check
      _
    $region10: #{_lambda_.4} parent=5 // pred_check_branch
      %381 = sbr.rel (%p378) target = $region12
    $region11: #{_lambda_.4} parent=5 // pred_region
      %s382 = ssub.s32 %s18, 1
      // Predicated region
      $region13: #{_lambda_.4} parent=11 // pred_check
        %p383 = pneg %p56
      $region14: #{_lambda_.4} parent=11 // pred_check_branch
        %385 = sbr.rel (%p383) target = $region16
      $region15: #{_lambda_.4} parent=11 // pred_region
        %s386 = smul.u32 2, %s27
        %p387 = scmp.lt.s32.totalorder %s386, 1
        %s388 = scalar_select %p387, %s386, 1
        %s389 = smul.addr %s388, 4
        %s390 = scalar_lea.vmem %s0, %s389
        %s391 = smul.u32 2, %s27
      $region16: #{_lambda_.4} parent=11 // pred_fallthru
        _
    $region12: #{_lambda_.4} parent=5 // pred_fallthru
      _
    %p392 = scmp.lt.s32.totalorder %s18, 2
    // Predicated region
    $region17: #{_lambda_.4} parent=5 // pred_check
      %p393 = pneg %p392
    $region18: #{_lambda_.4} parent=5 // pred_check_branch
      %395 = sbr.rel (%p393) target = $region20
    $region19: #{_lambda_.4} parent=5 // pred_region
      // Predicated region
      $region21: #{_lambda_.4} parent=19 // pred_check
        %p396 = pneg %p76
      $region22: #{_lambda_.4} parent=19 // pred_check_branch
        %398 = sbr.rel (%p396) target = $region24
      $region23: #{_lambda_.4} parent=19 // pred_region
        %p399 = scmp.lt.s32.totalorder %s26, 1
        %s400 = scalar_select %p399, %s26, 1
        %s401 = scalar_lea.vmem %s1, %s400
      $region24: #{_lambda_.4} parent=19 // pred_fallthru
        _
      // Predicated region
      $region25: #{_lambda_.4} parent=19 // pred_check
        %p402 = pneg %p102
      $region26: #{_lambda_.4} parent=19 // pred_check_branch
        %404 = sbr.rel (%p402) target = $region28
      $region27: #{_lambda_.4} parent=19 // pred_region
        %p405 = scmp.lt.s32.totalorder %s26, 1
        %s406 = scalar_select %p405, %s26, 1
        %s407 = scalar_lea.vmem %s2, %s406
      $region28: #{_lambda_.4} parent=19 // pred_fallthru
        _
      // Predicated region
      $region29: #{_lambda_.4} parent=19 // pred_check
        %p408 = pneg %p128
      $region30: #{_lambda_.4} parent=19 // pred_check_branch
        %410 = sbr.rel (%p408) target = $region32
      $region31: #{_lambda_.4} parent=19 // pred_region
        %p411 = scmp.lt.s32.totalorder %s26, 1
        %s412 = scalar_select %p411, %s26, 1
        %s413 = smul.addr %s412, 4
        %s414 = smul.addr %s413, 4
        %s415 = scalar_lea.vmem %s3, %s414
      $region32: #{_lambda_.4} parent=19 // pred_fallthru
        _
      // Predicated region
      $region33: #{_lambda_.4} parent=19 // pred_check
        %p416 = pneg %p154
      $region34: #{_lambda_.4} parent=19 // pred_check_branch
        %418 = sbr.rel (%p416) target = $region36
      $region35: #{_lambda_.4} parent=19 // pred_region
        %p419 = scmp.lt.s32.totalorder %s26, 1
        %s420 = scalar_select %p419, %s26, 1
        %s421 = smul.addr %s420, 4
        %s422 = smul.addr %s421, 4
        %s423 = scalar_lea.vmem %s4, %s422
      $region36: #{_lambda_.4} parent=19 // pred_fallthru
        _
      // Predicated region
      $region37: #{_lambda_.4} parent=19 // pred_check
        %p424 = pneg %p180
      $region38: #{_lambda_.4} parent=19 // pred_check_branch
        %426 = sbr.rel (%p424) target = $region40
      $region39: #{_lambda_.4} parent=19 // pred_region
        %p427 = scmp.lt.s32.totalorder %s26, 1
        %s428 = scalar_select %p427, %s26, 1
        %s429 = scalar_lea.vmem %s5, %s428
      $region40: #{_lambda_.4} parent=19 // pred_fallthru
        _
      // Predicated region
      $region41: #{_lambda_.4} parent=19 // pred_check
        %p430 = pneg %p206
      $region42: #{_lambda_.4} parent=19 // pred_check_branch
        %432 = sbr.rel (%p430) target = $region44
      $region43: #{_lambda_.4} parent=19 // pred_region
        %p433 = scmp.lt.s32.totalorder %s26, 1
        %s434 = scalar_select %p433, %s26, 1
        %s435 = scalar_lea.vmem %s6, %s434
      $region44: #{_lambda_.4} parent=19 // pred_fallthru
        _
      // Predicated region
      $region45: #{_lambda_.4} parent=19 // pred_check
        %p436 = pneg %p232
      $region46: #{_lambda_.4} parent=19 // pred_check_branch
        %438 = sbr.rel (%p436) target = $region48
      $region47: #{_lambda_.4} parent=19 // pred_region
        %p439 = scmp.lt.s32.totalorder %s26, 1
        %s440 = scalar_select %p439, %s26, 1
        %s441 = scalar_lea.vmem %s7, %s440
      $region48: #{_lambda_.4} parent=19 // pred_fallthru
        _
      // Predicated region
      $region49: #{_lambda_.4} parent=19 // pred_check
        %p442 = pneg %p258
      $region50: #{_lambda_.4} parent=19 // pred_check_branch
        %444 = sbr.rel (%p442) target = $region52
      $region51: #{_lambda_.4} parent=19 // pred_region
        %p445 = scmp.lt.s32.totalorder %s26, 1
        %s446 = scalar_select %p445, %s26, 1
        %s447 = smul.addr %s446, 4
        %s448 = smul.addr %s447, 4
        %s449 = scalar_lea.vmem %s8, %s448
      $region52: #{_lambda_.4} parent=19 // pred_fallthru
        _
      // Predicated region
      $region53: #{_lambda_.4} parent=19 // pred_check
        %p450 = pneg %p284
      $region54: #{_lambda_.4} parent=19 // pred_check_branch
        %452 = sbr.rel (%p450) target = $region56
      $region55: #{_lambda_.4} parent=19 // pred_region
        %p453 = scmp.lt.s32.totalorder %s26, 1
        %s454 = scalar_select %p453, %s26, 1
        %s455 = scalar_lea.vmem %s9, %s454
      $region56: #{_lambda_.4} parent=19 // pred_fallthru
        _
      // Predicated region
      $region57: #{_lambda_.4} parent=19 // pred_check
        %p456 = pneg %p310
      $region58: #{_lambda_.4} parent=19 // pred_check_branch
        %458 = sbr.rel (%p456) target = $region60
      $region59: #{_lambda_.4} parent=19 // pred_region
        %p459 = scmp.lt.s32.totalorder %s26, 1
        %s460 = scalar_select %p459, %s26, 1
        %s461 = smul.addr %s460, 8
        %s462 = smul.addr %s461, 4
        %s463 = scalar_lea.vmem %s10, %s462
      $region60: #{_lambda_.4} parent=19 // pred_fallthru
        _
      // Predicated region
      $region61: #{_lambda_.4} parent=19 // pred_check
        %p464 = pneg %p336
      $region62: #{_lambda_.4} parent=19 // pred_check_branch
        %466 = sbr.rel (%p464) target = $region64
      $region63: #{_lambda_.4} parent=19 // pred_region
        %p467 = scmp.lt.s32.totalorder %s26, 1
        %s468 = scalar_select %p467, %s26, 1
        %s469 = scalar_lea.vmem %s11, %s468
      $region64: #{_lambda_.4} parent=19 // pred_fallthru
        _
    $region20: #{_lambda_.4} parent=5 // pred_fallthru
      _
    %p470 = scmp.le.s32.totalorder 1, %s18
    %p471 = scmp.lt.s32.totalorder %s18, 3
    %p472 = pnand %p470, %p471
    %p473 = pneg %p472
    // Predicated region
    $region65: #{_lambda_.4} parent=5 // pred_check
      _
    $region66: #{_lambda_.4} parent=5 // pred_check_branch
      %475 = sbr.rel (%p472) target = $region68
    $region67: #{_lambda_.4} parent=5 // pred_region
      %s476 = ssub.s32 %s18, 1
      %s477 = smul.u32 2, %s27
      %p478 = scmp.lt.s32.totalorder %s477, 1
      %s479 = scalar_select %p478, %s477, 1
      %s480 = smul.addr %s479, 4
      %s481 = scalar_lea.vmem %s0, %s480
      %p482 = pneg %p56
      %p483 = pneg %p53
      %p484 = scmp.lt.s32.totalorder %s28, 1
      %s485 = scalar_select %p484, %s28, 1
      %s486 = scalar_lea.vmem %s1, %s485
      %p487 = pneg %p82
      %p488 = pneg %p79
      %p489 = scmp.lt.s32.totalorder %s28, 1
      %s490 = scalar_select %p489, %s28, 1
      %s491 = scalar_lea.vmem %s2, %s490
      %p492 = pneg %p108
      %p493 = pneg %p105
      %p494 = scmp.lt.s32.totalorder %s28, 1
      %s495 = scalar_select %p494, %s28, 1
      %s496 = smul.addr %s495, 4
      %s497 = smul.addr %s496, 4
      %s498 = scalar_lea.vmem %s3, %s497
      %p499 = pneg %p134
      %p500 = pneg %p131
      %p501 = scmp.lt.s32.totalorder %s28, 1
      %s502 = scalar_select %p501, %s28, 1
      %s503 = smul.addr %s502, 4
      %s504 = smul.addr %s503, 4
      %s505 = scalar_lea.vmem %s4, %s504
      %p506 = pneg %p160
      %p507 = pneg %p157
      %p508 = scmp.lt.s32.totalorder %s28, 1
      %s509 = scalar_select %p508, %s28, 1
      %s510 = scalar_lea.vmem %s5, %s509
      %p511 = pneg %p186
      %p512 = pneg %p183
      %p513 = scmp.lt.s32.totalorder %s28, 1
      %s514 = scalar_select %p513, %s28, 1
      %s515 = scalar_lea.vmem %s6, %s514
      %p516 = pneg %p212
      %p517 = pneg %p209
      %p518 = scmp.lt.s32.totalorder %s28, 1
      %s519 = scalar_select %p518, %s28, 1
      %s520 = scalar_lea.vmem %s7, %s519
      %p521 = pneg %p238
      %p522 = pneg %p235
      %p523 = scmp.lt.s32.totalorder %s28, 1
      %s524 = scalar_select %p523, %s28, 1
      %s525 = smul.addr %s524, 4
      %s526 = smul.addr %s525, 4
      %s527 = scalar_lea.vmem %s8, %s526
      %p528 = pneg %p264
      %p529 = pneg %p261
      %p530 = scmp.lt.s32.totalorder %s28, 1
      %s531 = scalar_select %p530, %s28, 1
      %s532 = scalar_lea.vmem %s9, %s531
      %p533 = pneg %p290
      %p534 = pneg %p287
      %p535 = scmp.lt.s32.totalorder %s28, 1
      %s536 = scalar_select %p535, %s28, 1
      %s537 = smul.addr %s536, 8
      %s538 = smul.addr %s537, 4
      %s539 = scalar_lea.vmem %s10, %s538
      %p540 = pneg %p316
      %p541 = pneg %p313
      %p542 = scmp.lt.s32.totalorder %s28, 1
      %s543 = scalar_select %p542, %s28, 1
      %s544 = scalar_lea.vmem %s11, %s543
      %p545 = pneg %p342
      %p546 = pneg %p339
      %p547 = pneg %p368
      %p548 = pneg %p365
      %s549 = smul.u32 2, %s27
      %p550 = scmp.lt.s32.totalorder %s549, 1
      %s551 = scalar_select %p550, %s549, 1
      %s552 = scalar_lea.vmem %s12, %s551
      %s553 = smul.u32 2, %s27
      %p554 = scmp.lt.s32.totalorder %s553, 1
      %s555 = scalar_select %p554, %s553, 1
      %s556 = smul.addr %s555, 4
      %s557 = scalar_lea.vmem %s0, %s556
      %s558 = smul.u32 2, %s27
      %p559 = scmp.lt.s32.totalorder %s28, 1
      %s560 = scalar_select %p559, %s28, 1
      %s561 = scalar_lea.vmem %s1, %s560
      %p562 = scmp.lt.s32.totalorder %s28, 1
      %s563 = scalar_select %p562, %s28, 1
      %s564 = scalar_lea.vmem %s2, %s563
      %p565 = scmp.lt.s32.totalorder %s28, 1
      %s566 = scalar_select %p565, %s28, 1
      %s567 = smul.addr %s566, 4
      %s568 = smul.addr %s567, 4
      %s569 = scalar_lea.vmem %s3, %s568
      %p570 = scmp.lt.s32.totalorder %s28, 1
      %s571 = scalar_select %p570, %s28, 1
      %s572 = smul.addr %s571, 4
      %s573 = smul.addr %s572, 4
      %s574 = scalar_lea.vmem %s4, %s573
      %p575 = scmp.lt.s32.totalorder %s28, 1
      %s576 = scalar_select %p575, %s28, 1
      %s577 = scalar_lea.vmem %s5, %s576
      %p578 = scmp.lt.s32.totalorder %s28, 1
      %s579 = scalar_select %p578, %s28, 1
      %s580 = scalar_lea.vmem %s6, %s579
      %p581 = scmp.lt.s32.totalorder %s28, 1
      %s582 = scalar_select %p581, %s28, 1
      %s583 = scalar_lea.vmem %s7, %s582
      %p584 = scmp.lt.s32.totalorder %s28, 1
      %s585 = scalar_select %p584, %s28, 1
      %s586 = smul.addr %s585, 4
      %s587 = smul.addr %s586, 4
      %s588 = scalar_lea.vmem %s8, %s587
      %p589 = scmp.lt.s32.totalorder %s28, 1
      %s590 = scalar_select %p589, %s28, 1
      %s591 = scalar_lea.vmem %s9, %s590
      %p592 = scmp.lt.s32.totalorder %s28, 1
      %s593 = scalar_select %p592, %s28, 1
      %s594 = smul.addr %s593, 8
      %s595 = smul.addr %s594, 4
      %s596 = scalar_lea.vmem %s10, %s595
      %p597 = scmp.lt.s32.totalorder %s28, 1
      %s598 = scalar_select %p597, %s28, 1
      %s599 = scalar_lea.vmem %s11, %s598
      %s600 = smul.u32 2, %s27
      %p601 = scmp.lt.s32.totalorder %s600, 1
      %s602 = scalar_select %p601, %s600, 1
      %s603 = scalar_lea.vmem %s12, %s602
      %s604 = smul.u32 2, %s27
      %p606 = scmp.eq.s32.totalorder %s28, 0
      // Predicated region
      $region69: #{_lambda_.4} parent=67 // pred_check
        %p607 = pneg %p606
      $region70: #{_lambda_.4} parent=67 // pred_check_branch
        %609 = sbr.rel (%p607) target = $region72
      $region71: #{_lambda_.4} parent=67 // pred_region
        %v610 = vld [vmem:[%s557] sm:$0x7]
        %v611 = vld [vmem:[%s557 + $0x4] sm:$0x7]
        %v612 = vunpack.c.l.bf16 %v610
        %v613 = vunpack.c.l.bf16 %v611
        %vm614 = vcmask 258048
        %615 = vst.msk [vmem:[#allocation2] sm:$0x1f] %vm614, %v612
        %616 = vst.msk [vmem:[#allocation2 + $0x8] sm:$0x1f] %vm614, %v613
      $region72: #{_lambda_.4} parent=67 // pred_fallthru
        _
      %v617 = vld [vmem:[#allocation2] sm:$0x1f]
      %v618 = vld [vmem:[%s561] sm:$0x1]
      %v619 = vld [vmem:[%s564] sm:$0x1]
      %vm620 = vcmask 258048
      %v621 = vsel %vm620, %v617, 0.0
      %622 = vadd.xlane.f32.xlu0 %v621
      %v623 = vpop.xlane.xlu0 %622
      %v624 = vrcp.pop 32.0
      %v625 = vmul.f32 %v623, %v624
      %v626 = vsub.f32 %v617, %v625
      %v627 = vmul.f32 %v626, %v626
      %v628 = vsel %vm620, %v627, 0.0
      %629 = vadd.xlane.f32.xlu0 %v628
      %v630 = vpop.xlane.xlu0 %629
      %v631 = vmul.f32 %v630, %v624
      %v632 = vadd.f32 %v631, 1e-05
      %v633 = vrsqrt.pop %v632
      %v634 = vmul.f32 %v626, %v633
      %v636 = vlaneseq
      %v637 = vshrl.u32 %v636, 7
      %v638 = vsub.s32 0, %v637
      %v639 = vrot.slane %v618, %v638
      %v641 = vmul.f32 %v634, %v639
      %v643 = vlaneseq
      %v644 = vshrl.u32 %v643, 7
      %v645 = vsub.s32 0, %v644
      %v646 = vrot.slane %v619, %v645
      %v648 = vadd.f32 %v641, %v646
      %v649 = vpack.c.bf16 %v648, %v648
      %v650 = vld [vmem:[%s569] sm:$0xf]
      %v651 = vld [vmem:[%s569 + $0x4] sm:$0xf]
      %v652 = vld [vmem:[%s569 + $0x8] sm:$0xf]
      %v653 = vld [vmem:[%s569 + $0xc] sm:$0xf]
      %v658 = vunpack.c.l.b16 %v650
      %v659 = vunpack.c.l.b16 %v651
      %v660 = vunpack.c.l.b16 %v652
      %v661 = vunpack.c.l.b16 %v653
      %v662 = vpack.c.b16 %v659, %v658
      %v663 = vpack.c.b16 %v661, %v660
      %vm666 = vcmask 261120
      %v668 = vsel %vm666, %v649, 0
      %670 = vmatprep.subr.bf16.mxu0 0
      %671 = vmatpush1.bf16.msra.mxu0 %v662
      %672 = vmatprep.subr.bf16.mxu0 0
      %673 = vmatpush1.bf16.msra.mxu0 %v663
      %674 = vmatprep.subr.bf16.mxu0 0
      %675 = vmatpush1.bf16.msra.mxu0 0
      %676 = vmatprep.subr.bf16.mxu0 0
      %677 = vmatpush1.bf16.msra.mxu0 0
      %678 = vmatprep.subr.bf16.mxu0 0
      %679 = vmatpush1.bf16.msra.mxu0 0
      %680 = vmatprep.subr.bf16.mxu0 0
      %681 = vmatpush1.bf16.msra.mxu0 0
      %682 = vmatprep.subr.bf16.mxu0 0
      %683 = vmatpush1.bf16.msra.mxu0 0
      %684 = vmatprep.subr.bf16.mxu0 0
      %685 = vmatpush1.bf16.msra.mxu0 0
      %686 = vmatprep.subr.bf16.mxu0 0
      %687 = vmatpush1.bf16.msra.mxu0 0
      %688 = vmatprep.subr.bf16.mxu0 0
      %689 = vmatpush1.bf16.msra.mxu0 0
      %690 = vmatprep.subr.bf16.mxu0 0
      %691 = vmatpush1.bf16.msra.mxu0 0
      %692 = vmatprep.subr.bf16.mxu0 0
      %693 = vmatpush1.bf16.msra.mxu0 0
      %694 = vmatprep.subr.bf16.mxu0 0
      %695 = vmatpush1.bf16.msra.mxu0 0
      %696 = vmatprep.subr.bf16.mxu0 0
      %697 = vmatpush1.bf16.msra.mxu0 0
      %698 = vmatprep.subr.bf16.mxu0 0
      %699 = vmatpush1.bf16.msra.mxu0 0
      %700 = vmatprep.subr.bf16.mxu0 0
      %701 = vmatpush1.bf16.msra.mxu0 0
      %702 = vmatprep.mubr.bf16.mxu0 0
      %703 = vmatmul.mubr.bf16.gmra.mrb[0].mxu0 %v668
      %v704 = vpop.f32.mrb[0].mxu0
      %v705 = vadd.f32 0.0, %v704
      %v706 = vpop.f32.mrb[0].mxu0
      %v707 = vpop.f32.mrb[0].mxu0
      %v708 = vpop.f32.mrb[0].mxu0
      %709 = vdwg.mxu0
      %v710 = vpack.c.bf16 %v705, %v705
      %712 = vrot.lane.b32.xlu0 %v710, 96
      %v713 = vpop.permute.xlu0 %712
      %vm714 = vcmask 130048
      %v716 = vsel %vm714, %v710, 0
      %v719 = vsel %vm714, %v713, 0
      %721 = vmatprep.subr.bf16.mxu0 0
      %722 = vmatpush1.bf16.xpose.msra.mxu0 %v719
      %723 = vmatprep.subr.bf16.mxu0 0
      %724 = vmatpush1.bf16.xpose.msra.mxu0 0
      %725 = vmatprep.subr.bf16.mxu0 0
      %726 = vmatpush1.bf16.xpose.msra.mxu0 0
      %727 = vmatprep.subr.bf16.mxu0 0
      %728 = vmatpush1.bf16.xpose.msra.mxu0 0
      %729 = vmatprep.subr.bf16.mxu0 0
      %730 = vmatpush1.bf16.xpose.msra.mxu0 0
      %731 = vmatprep.subr.bf16.mxu0 0
      %732 = vmatpush1.bf16.xpose.msra.mxu0 0
      %733 = vmatprep.subr.bf16.mxu0 0
      %734 = vmatpush1.bf16.xpose.msra.mxu0 0
      %735 = vmatprep.subr.bf16.mxu0 0
      %736 = vmatpush1.bf16.xpose.msra.mxu0 0
      %737 = vmatprep.subr.bf16.mxu0 0
      %738 = vmatpush1.bf16.xpose.msra.mxu0 0
      %739 = vmatprep.subr.bf16.mxu0 0
      %740 = vmatpush1.bf16.xpose.msra.mxu0 0
      %741 = vmatprep.subr.bf16.mxu0 0
      %742 = vmatpush1.bf16.xpose.msra.mxu0 0
      %743 = vmatprep.subr.bf16.mxu0 0
      %744 = vmatpush1.bf16.xpose.msra.mxu0 0
      %745 = vmatprep.subr.bf16.mxu0 0
      %746 = vmatpush1.bf16.xpose.msra.mxu0 0
      %747 = vmatprep.subr.bf16.mxu0 0
      %748 = vmatpush1.bf16.xpose.msra.mxu0 0
      %749 = vmatprep.subr.bf16.mxu0 0
      %750 = vmatpush1.bf16.xpose.msra.mxu0 0
      %751 = vmatprep.subr.bf16.mxu0 0
      %752 = vmatpush1.bf16.xpose.msra.mxu0 0
      %753 = vmatprep.mubr.bf16.mxu0 0
      %754 = vmatmul.mubr.bf16.gmra.mrb[0].mxu0 %v716
      %v755 = vpop.f32.mrb[0].mxu0
      %v756 = vadd.f32 0.0, %v755
      %v757 = vpop.f32.mrb[0].mxu0
      %v758 = vpop.f32.mrb[0].mxu0
      %v759 = vpop.f32.mrb[0].mxu0
      %760 = vdwg.mxu0
      %vm761 = vcmask 36864
      %v762 = vsel %vm761, %v756, -inf
      %763 = vmax.xlane.f32.xlu0 %v762
      %v764 = vpop.xlane.xlu0 %763
      %v765 = vsub.f32 %v756, %v764
      %v766 = vmul.f32 %v765, 1.442695
      %v767 = vpow.pop %v766
      %v768 = vsel %vm761, %v767, 0.0
      %769 = vadd.xlane.f32.xlu0 %v768
      %v770 = vpop.xlane.xlu0 %769
      %v771 = vrcp.pop %v770
      %v772 = vmul.f32 %v767, %v771
      %v773 = vpack.c.bf16 %v772, %v772
      %774 = vrot.lane.b32.xlu0 %v710, 64
      %v775 = vpop.permute.xlu0 %774
      %vm776 = vcmask 39936
      %v778 = vsel %vm776, %v773, 0
      %vm780 = vcmask 1041408
      %vm781 = vcmask 1042432
      %v782 = vsel %vm780, 4294967295, 65535
      %v783 = vsel %vm781, %v782, 0
      %v785 = vand.u32 %v775, %v783
      %787 = vmatprep.subr.bf16.mxu0 0
      %788 = vmatpush1.bf16.msra.mxu0 %v785
      %789 = vmatprep.subr.bf16.mxu0 0
      %790 = vmatpush1.bf16.msra.mxu0 0
      %791 = vmatprep.subr.bf16.mxu0 0
      %792 = vmatpush1.bf16.msra.mxu0 0
      %793 = vmatprep.subr.bf16.mxu0 0
      %794 = vmatpush1.bf16.msra.mxu0 0
      %795 = vmatprep.subr.bf16.mxu0 0
      %796 = vmatpush1.bf16.msra.mxu0 0
      %797 = vmatprep.subr.bf16.mxu0 0
      %798 = vmatpush1.bf16.msra.mxu0 0
      %799 = vmatprep.subr.bf16.mxu0 0
      %800 = vmatpush1.bf16.msra.mxu0 0
      %801 = vmatprep.subr.bf16.mxu0 0
      %802 = vmatpush1.bf16.msra.mxu0 0
      %803 = vmatprep.subr.bf16.mxu0 0
      %804 = vmatpush1.bf16.msra.mxu0 0
      %805 = vmatprep.subr.bf16.mxu0 0
      %806 = vmatpush1.bf16.msra.mxu0 0
      %807 = vmatprep.subr.bf16.mxu0 0
      %808 = vmatpush1.bf16.msra.mxu0 0
      %809 = vmatprep.subr.bf16.mxu0 0
      %810 = vmatpush1.bf16.msra.mxu0 0
      %811 = vmatprep.subr.bf16.mxu0 0
      %812 = vmatpush1.bf16.msra.mxu0 0
      %813 = vmatprep.subr.bf16.mxu0 0
      %814 = vmatpush1.bf16.msra.mxu0 0
      %815 = vmatprep.subr.bf16.mxu0 0
      %816 = vmatpush1.bf16.msra.mxu0 0
      %817 = vmatprep.subr.bf16.mxu0 0
      %818 = vmatpush1.bf16.msra.mxu0 0
      %819 = vmatprep.mubr.bf16.mxu0 0
      %820 = vmatmul.mubr.bf16.gmra.mrb[0].mxu0 %v778
      %v821 = vpop.f32.mrb[0].mxu0
      %v822 = vadd.f32 0.0, %v821
      %v823 = vpop.f32.mrb[0].mxu0
      %v824 = vpop.f32.mrb[0].mxu0
      %v825 = vpop.f32.mrb[0].mxu0
      %826 = vdwg.mxu0
      %v827 = vpack.c.bf16 %v822, %v822
      %vm828 = vcmask 124928
      %vm829 = vsmask.f32 2304
      %vm830 = vmand %vm828, %vm829
      %v831 = vld [vmem:[#allocation3] sm:$0x7]
      %v832 = vsel %vm830, %v827, %v831
      %833 = vst [vmem:[#allocation3] sm:$0x7] %v832
      %834 = vrot.lane.b32.xlu0 %v710, 112
      %v835 = vpop.permute.xlu0 %834
      %836 = vrot.lane.b32.xlu0 %v710, 80
      %v837 = vpop.permute.xlu0 %836
      %v839 = vsel %vm714, %v835, 0
      %v842 = vsel %vm714, %v837, 0
      %844 = vmatprep.subr.bf16.mxu0 0
      %845 = vmatpush1.bf16.xpose.msra.mxu0 %v842
      %846 = vmatprep.subr.bf16.mxu0 0
      %847 = vmatpush1.bf16.xpose.msra.mxu0 0
      %848 = vmatprep.subr.bf16.mxu0 0
      %849 = vmatpush1.bf16.xpose.msra.mxu0 0
      %850 = vmatprep.subr.bf16.mxu0 0
      %851 = vmatpush1.bf16.xpose.msra.mxu0 0
      %852 = vmatprep.subr.bf16.mxu0 0
      %853 = vmatpush1.bf16.xpose.msra.mxu0 0
      %854 = vmatprep.subr.bf16.mxu0 0
      %855 = vmatpush1.bf16.xpose.msra.mxu0 0
      %856 = vmatprep.subr.bf16.mxu0 0
      %857 = vmatpush1.bf16.xpose.msra.mxu0 0
      %858 = vmatprep.subr.bf16.mxu0 0
      %859 = vmatpush1.bf16.xpose.msra.mxu0 0
      %860 = vmatprep.subr.bf16.mxu0 0
      %861 = vmatpush1.bf16.xpose.msra.mxu0 0
      %862 = vmatprep.subr.bf16.mxu0 0
      %863 = vmatpush1.bf16.xpose.msra.mxu0 0
      %864 = vmatprep.subr.bf16.mxu0 0
      %865 = vmatpush1.bf16.xpose.msra.mxu0 0
      %866 = vmatprep.subr.bf16.mxu0 0
      %867 = vmatpush1.bf16.xpose.msra.mxu0 0
      %868 = vmatprep.subr.bf16.mxu0 0
      %869 = vmatpush1.bf16.xpose.msra.mxu0 0
      %870 = vmatprep.subr.bf16.mxu0 0
      %871 = vmatpush1.bf16.xpose.msra.mxu0 0
      %872 = vmatprep.subr.bf16.mxu0 0
      %873 = vmatpush1.bf16.xpose.msra.mxu0 0
      %874 = vmatprep.subr.bf16.mxu0 0
      %875 = vmatpush1.bf16.xpose.msra.mxu0 0
      %876 = vmatprep.mubr.bf16.mxu0 0
      %877 = vmatmul.mubr.bf16.gmra.mrb[0].mxu0 %v839
      %v878 = vpop.f32.mrb[0].mxu0
      %v879 = vadd.f32 0.0, %v878
      %v880 = vpop.f32.mrb[0].mxu0
      %v881 = vpop.f32.mrb[0].mxu0
      %v882 = vpop.f32.mrb[0].mxu0
      %883 = vdwg.mxu0
      %v884 = vsel %vm761, %v879, -inf
      %885 = vmax.xlane.f32.xlu0 %v884
      %v886 = vpop.xlane.xlu0 %885
      %v887 = vsub.f32 %v879, %v886
      %v888 = vmul.f32 %v887, 1.442695
      %v889 = vpow.pop %v888
      %v890 = vsel %vm761, %v889, 0.0
      %891 = vadd.xlane.f32.xlu0 %v890
      %v892 = vpop.xlane.xlu0 %891
      %v893 = vrcp.pop %v892
      %v894 = vmul.f32 %v889, %v893
      %v895 = vpack.c.bf16 %v894, %v894
      %896 = vrot.lane.b32.xlu0 %v710, 48
      %v897 = vpop.permute.xlu0 %896
      %v899 = vsel %vm776, %v895, 0
      %v902 = vand.u32 %v897, %v783
      %904 = vmatprep.subr.bf16.mxu0 0
      %905 = vmatpush1.bf16.msra.mxu0 %v902
      %906 = vmatprep.subr.bf16.mxu0 0
      %907 = vmatpush1.bf16.msra.mxu0 0
      %908 = vmatprep.subr.bf16.mxu0 0
      %909 = vmatpush1.bf16.msra.mxu0 0
      %910 = vmatprep.subr.bf16.mxu0 0
      %911 = vmatpush1.bf16.msra.mxu0 0
      %912 = vmatprep.subr.bf16.mxu0 0
      %913 = vmatpush1.bf16.msra.mxu0 0
      %914 = vmatprep.subr.bf16.mxu0 0
      %915 = vmatpush1.bf16.msra.mxu0 0
      %916 = vmatprep.subr.bf16.mxu0 0
      %917 = vmatpush1.bf16.msra.mxu0 0
      %918 = vmatprep.subr.bf16.mxu0 0
      %919 = vmatpush1.bf16.msra.mxu0 0
      %920 = vmatprep.subr.bf16.mxu0 0
      %921 = vmatpush1.bf16.msra.mxu0 0
      %922 = vmatprep.subr.bf16.mxu0 0
      %923 = vmatpush1.bf16.msra.mxu0 0
      %924 = vmatprep.subr.bf16.mxu0 0
      %925 = vmatpush1.bf16.msra.mxu0 0
      %926 = vmatprep.subr.bf16.mxu0 0
      %927 = vmatpush1.bf16.msra.mxu0 0
      %928 = vmatprep.subr.bf16.mxu0 0
      %929 = vmatpush1.bf16.msra.mxu0 0
      %930 = vmatprep.subr.bf16.mxu0 0
      %931 = vmatpush1.bf16.msra.mxu0 0
      %932 = vmatprep.subr.bf16.mxu0 0
      %933 = vmatpush1.bf16.msra.mxu0 0
      %934 = vmatprep.subr.bf16.mxu0 0
      %935 = vmatpush1.bf16.msra.mxu0 0
      %936 = vmatprep.mubr.bf16.mxu0 0
      %937 = vmatmul.mubr.bf16.gmra.mrb[0].mxu0 %v899
      %v938 = vpop.f32.mrb[0].mxu0
      %v939 = vadd.f32 0.0, %v938
      %v940 = vpop.f32.mrb[0].mxu0
      %v941 = vpop.f32.mrb[0].mxu0
      %v942 = vpop.f32.mrb[0].mxu0
      %943 = vdwg.mxu0
      %v944 = vpack.c.bf16 %v939, %v939
      %v946 = vunpack.c.l.b16 %v944
      %v947 = vpack.c.b16 %v946, %v946
      %948 = vrot.lane.b32.xlu0 %v947, 16
      %v949 = vpop.permute.xlu0 %948
      %vm951 = vcmask 256128
      %vm952 = vmand %vm951, %vm829
      %v953 = vld [vmem:[#allocation3] sm:$0x7]
      %v954 = vsel %vm952, %v949, %v953
      %955 = vst [vmem:[#allocation3] sm:$0x7] %v954
      %v956 = vld [vmem:[#allocation3] sm:$0x7]
      %v957 = vld [vmem:[%s574] sm:$0xf]
      %v958 = vld [vmem:[%s574 + $0x4] sm:$0xf]
      %v959 = vld [vmem:[%s574 + $0x8] sm:$0xf]
      %v960 = vld [vmem:[%s574 + $0xc] sm:$0xf]
      %v961 = vld [vmem:[%s577] sm:$0x1]
      %v963 = vlaneseq
      %v964 = vshrl.u32 %v963, 7
      %v965 = vsub.s32 0, %v964
      %v966 = vrot.slane %v961, %v965
      %v972 = vunpack.c.l.b16 %v957
      %v973 = vunpack.c.l.b16 %v958
      %v974 = vunpack.c.l.b16 %v959
      %v975 = vunpack.c.l.b16 %v960
      %v976 = vpack.c.b16 %v973, %v972
      %v977 = vpack.c.b16 %v975, %v974
      %v981 = vsel %vm666, %v956, 0
      %983 = vmatprep.subr.bf16.mxu0 0
      %984 = vmatpush1.bf16.msra.mxu0 %v976
      %985 = vmatprep.subr.bf16.mxu0 0
      %986 = vmatpush1.bf16.msra.mxu0 %v977
      %987 = vmatprep.subr.bf16.mxu0 0
      %988 = vmatpush1.bf16.msra.mxu0 0
      %989 = vmatprep.subr.bf16.mxu0 0
      %990 = vmatpush1.bf16.msra.mxu0 0
      %991 = vmatprep.subr.bf16.mxu0 0
      %992 = vmatpush1.bf16.msra.mxu0 0
      %993 = vmatprep.subr.bf16.mxu0 0
      %994 = vmatpush1.bf16.msra.mxu0 0
      %995 = vmatprep.subr.bf16.mxu0 0
      %996 = vmatpush1.bf16.msra.mxu0 0
      %997 = vmatprep.subr.bf16.mxu0 0
      %998 = vmatpush1.bf16.msra.mxu0 0
      %999 = vmatprep.subr.bf16.mxu0 0
      %1000 = vmatpush1.bf16.msra.mxu0 0
      %1001 = vmatprep.subr.bf16.mxu0 0
      %1002 = vmatpush1.bf16.msra.mxu0 0
      %1003 = vmatprep.subr.bf16.mxu0 0
      %1004 = vmatpush1.bf16.msra.mxu0 0
      %1005 = vmatprep.subr.bf16.mxu0 0
      %1006 = vmatpush1.bf16.msra.mxu0 0
      %1007 = vmatprep.subr.bf16.mxu0 0
      %1008 = vmatpush1.bf16.msra.mxu0 0
      %1009 = vmatprep.subr.bf16.mxu0 0
      %1010 = vmatpush1.bf16.msra.mxu0 0
      %1011 = vmatprep.subr.bf16.mxu0 0
      %1012 = vmatpush1.bf16.msra.mxu0 0
      %1013 = vmatprep.subr.bf16.mxu0 0
      %1014 = vmatpush1.bf16.msra.mxu0 0
      %1015 = vmatprep.mubr.bf16.mxu0 0
      %1016 = vmatmul.mubr.bf16.gmra.mrb[0].mxu0 %v981
      %v1017 = vpop.f32.mrb[0].mxu0
      %v1018 = vadd.f32 %v966, %v1017
      %v1019 = vpop.f32.mrb[0].mxu0
      %v1020 = vpop.f32.mrb[0].mxu0
      %v1021 = vpop.f32.mrb[0].mxu0
      %1022 = vdwg.mxu0
      %v1023 = vadd.f32 %v617, %v1018
      %v1024 = vld [vmem:[%s580] sm:$0x1]
      %v1025 = vld [vmem:[%s583] sm:$0x1]
      %v1026 = vsel %vm620, %v1023, 0.0
      %1027 = vadd.xlane.f32.xlu0 %v1026
      %v1028 = vpop.xlane.xlu0 %1027
      %v1029 = vmul.f32 %v1028, %v624
      %v1030 = vsub.f32 %v1023, %v1029
      %v1031 = vmul.f32 %v1030, %v1030
      %v1032 = vsel %vm620, %v1031, 0.0
      %1033 = vadd.xlane.f32.xlu0 %v1032
      %v1034 = vpop.xlane.xlu0 %1033
      %v1035 = vmul.f32 %v1034, %v624
      %v1036 = vadd.f32 %v1035, 1e-05
      %v1037 = vrsqrt.pop %v1036
      %v1038 = vmul.f32 %v1030, %v1037
      %v1040 = vlaneseq
      %v1041 = vshrl.u32 %v1040, 7
      %v1042 = vsub.s32 0, %v1041
      %v1043 = vrot.slane %v1024, %v1042
      %v1045 = vmul.f32 %v1038, %v1043
      %v1047 = vlaneseq
      %v1048 = vshrl.u32 %v1047, 7
      %v1049 = vsub.s32 0, %v1048
      %v1050 = vrot.slane %v1025, %v1049
      %v1052 = vadd.f32 %v1045, %v1050
      %v1053 = vpack.c.bf16 %v1052, %v1052
      %v1054 = vld [vmem:[%s588] sm:$0xf]
      %v1055 = vld [vmem:[%s588 + $0x4] sm:$0xf]
      %v1056 = vld [vmem:[%s588 + $0x8] sm:$0xf]
      %v1057 = vld [vmem:[%s588 + $0xc] sm:$0xf]
      %v1058 = vld [vmem:[%s591] sm:$0x1]
      %v1060 = vlaneseq
      %v1061 = vshrl.u32 %v1060, 7
      %v1062 = vsub.s32 0, %v1061
      %v1063 = vrot.slane %v1058, %v1062
      %v1069 = vunpack.c.l.b16 %v1054
      %v1070 = vunpack.c.l.b16 %v1055
      %v1071 = vunpack.c.l.b16 %v1056
      %v1072 = vunpack.c.l.b16 %v1057
      %v1073 = vpack.c.b16 %v1070, %v1069
      %v1074 = vpack.c.b16 %v1072, %v1071
      %v1078 = vsel %vm666, %v1053, 0
      %1080 = vmatprep.subr.bf16.mxu0 0
      %1081 = vmatpush1.bf16.msra.mxu0 %v1073
      %1082 = vmatprep.subr.bf16.mxu0 0
      %1083 = vmatpush1.bf16.msra.mxu0 %v1074
      %1084 = vmatprep.subr.bf16.mxu0 0
      %1085 = vmatpush1.bf16.msra.mxu0 0
      %1086 = vmatprep.subr.bf16.mxu0 0
      %1087 = vmatpush1.bf16.msra.mxu0 0
      %1088 = vmatprep.subr.bf16.mxu0 0
      %1089 = vmatpush1.bf16.msra.mxu0 0
      %1090 = vmatprep.subr.bf16.mxu0 0
      %1091 = vmatpush1.bf16.msra.mxu0 0
      %1092 = vmatprep.subr.bf16.mxu0 0
      %1093 = vmatpush1.bf16.msra.mxu0 0
      %1094 = vmatprep.subr.bf16.mxu0 0
      %1095 = vmatpush1.bf16.msra.mxu0 0
      %1096 = vmatprep.subr.bf16.mxu0 0
      %1097 = vmatpush1.bf16.msra.mxu0 0
      %1098 = vmatprep.subr.bf16.mxu0 0
      %1099 = vmatpush1.bf16.msra.mxu0 0
      %1100 = vmatprep.subr.bf16.mxu0 0
      %1101 = vmatpush1.bf16.msra.mxu0 0
      %1102 = vmatprep.subr.bf16.mxu0 0
      %1103 = vmatpush1.bf16.msra.mxu0 0
      %1104 = vmatprep.subr.bf16.mxu0 0
      %1105 = vmatpush1.bf16.msra.mxu0 0
      %1106 = vmatprep.subr.bf16.mxu0 0
      %1107 = vmatpush1.bf16.msra.mxu0 0
      %1108 = vmatprep.subr.bf16.mxu0 0
      %1109 = vmatpush1.bf16.msra.mxu0 0
      %1110 = vmatprep.subr.bf16.mxu0 0
      %1111 = vmatpush1.bf16.msra.mxu0 0
      %1112 = vmatprep.mubr.bf16.mxu0 0
      %1113 = vmatmul.mubr.bf16.gmra.mrb[0].mxu0 %v1078
      %v1114 = vpop.f32.mrb[0].mxu0
      %v1115 = vadd.f32 %v1063, %v1114
      %v1116 = vpop.f32.mrb[0].mxu0
      %v1117 = vpop.f32.mrb[0].mxu0
      %v1118 = vpop.f32.mrb[0].mxu0
      %1119 = vdwg.mxu0
      %v1120 = vmul.f32 %v1115, 0.5
      %v1121 = vmul.f32 %v1115, 0.70710677
      %v1122 = verf.f32.pop %v1121
      %v1123 = vadd.f32 %v1122, 1.0
      %v1124 = vmul.f32 %v1120, %v1123
      %v1125 = vpack.c.bf16 %v1124, %v1124
      %v1126 = vld [vmem:[%s596] sm:$0xf]
      %v1127 = vld [vmem:[%s596 + $0x4] sm:$0xf]
      %v1128 = vld [vmem:[%s596 + $0x8] sm:$0xf]
      %v1129 = vld [vmem:[%s596 + $0xc] sm:$0xf]
      %v1130 = vld [vmem:[%s596 + $0x10] sm:$0xf]
      %v1131 = vld [vmem:[%s596 + $0x14] sm:$0xf]
      %v1132 = vld [vmem:[%s596 + $0x18] sm:$0xf]
      %v1133 = vld [vmem:[%s596 + $0x1c] sm:$0xf]
      %v1134 = vld [vmem:[%s599] sm:$0x1]
      %v1136 = vlaneseq
      %v1137 = vshrl.u32 %v1136, 7
      %v1138 = vsub.s32 0, %v1137
      %v1139 = vrot.slane %v1134, %v1138
      %v1149 = vunpack.c.l.b16 %v1126
      %v1150 = vunpack.c.l.b16 %v1127
      %v1151 = vunpack.c.l.b16 %v1128
      %v1152 = vunpack.c.l.b16 %v1129
      %v1153 = vunpack.c.l.b16 %v1130
      %v1154 = vunpack.c.l.b16 %v1131
      %v1155 = vunpack.c.l.b16 %v1132
      %v1156 = vunpack.c.l.b16 %v1133
      %v1157 = vpack.c.b16 %v1150, %v1149
      %v1158 = vpack.c.b16 %v1152, %v1151
      %v1159 = vpack.c.b16 %v1154, %v1153
      %v1160 = vpack.c.b16 %v1156, %v1155
      %vm1165 = vcmask 523264
      %v1167 = vsel %vm1165, %v1125, 0
      %1169 = vmatprep.subr.bf16.mxu0 0
      %1170 = vmatpush1.bf16.msra.mxu0 %v1157
      %1171 = vmatprep.subr.bf16.mxu0 0
      %1172 = vmatpush1.bf16.msra.mxu0 %v1158
      %1173 = vmatprep.subr.bf16.mxu0 0
      %1174 = vmatpush1.bf16.msra.mxu0 %v1159
      %1175 = vmatprep.subr.bf16.mxu0 0
      %1176 = vmatpush1.bf16.msra.mxu0 %v1160
      %1177 = vmatprep.subr.bf16.mxu0 0
      %1178 = vmatpush1.bf16.msra.mxu0 0
      %1179 = vmatprep.subr.bf16.mxu0 0
      %1180 = vmatpush1.bf16.msra.mxu0 0
      %1181 = vmatprep.subr.bf16.mxu0 0
      %1182 = vmatpush1.bf16.msra.mxu0 0
      %1183 = vmatprep.subr.bf16.mxu0 0
      %1184 = vmatpush1.bf16.msra.mxu0 0
      %1185 = vmatprep.subr.bf16.mxu0 0
      %1186 = vmatpush1.bf16.msra.mxu0 0
      %1187 = vmatprep.subr.bf16.mxu0 0
      %1188 = vmatpush1.bf16.msra.mxu0 0
      %1189 = vmatprep.subr.bf16.mxu0 0
      %1190 = vmatpush1.bf16.msra.mxu0 0
      %1191 = vmatprep.subr.bf16.mxu0 0
      %1192 = vmatpush1.bf16.msra.mxu0 0
      %1193 = vmatprep.subr.bf16.mxu0 0
      %1194 = vmatpush1.bf16.msra.mxu0 0
      %1195 = vmatprep.subr.bf16.mxu0 0
      %1196 = vmatpush1.bf16.msra.mxu0 0
      %1197 = vmatprep.subr.bf16.mxu0 0
      %1198 = vmatpush1.bf16.msra.mxu0 0
      %1199 = vmatprep.subr.bf16.mxu0 0
      %1200 = vmatpush1.bf16.msra.mxu0 0
      %1201 = vmatprep.mubr.bf16.mxu0 0
      %1202 = vmatmul.mubr.bf16.gmra.mrb[0].mxu0 %v1167
      %v1203 = vpop.f32.mrb[0].mxu0
      %v1204 = vadd.f32 %v1139, %v1203
      %v1205 = vpop.f32.mrb[0].mxu0
      %v1206 = vpop.f32.mrb[0].mxu0
      %v1207 = vpop.f32.mrb[0].mxu0
      %1208 = vdwg.mxu0
      %v1209 = vadd.f32 %v1023, %v1204
      %1210 = vst.msk [vmem:[#allocation2] sm:$0x1f] %vm620, %v1209
      %s1211 = scalar_lea.vmem [#allocation2], 8
      %v1212 = vld [vmem:[%s1211] sm:$0x1f]
      %v1213 = vld [vmem:[%s561] sm:$0x1]
      %v1214 = vld [vmem:[%s564] sm:$0x1]
      %v1215 = vsel %vm620, %v1212, 0.0
      %1216 = vadd.xlane.f32.xlu0 %v1215
      %v1217 = vpop.xlane.xlu0 %1216
      %v1218 = vmul.f32 %v1217, %v624
      %v1219 = vsub.f32 %v1212, %v1218
      %v1220 = vmul.f32 %v1219, %v1219
      %v1221 = vsel %vm620, %v1220, 0.0
      %1222 = vadd.xlane.f32.xlu0 %v1221
      %v1223 = vpop.xlane.xlu0 %1222
      %v1224 = vmul.f32 %v1223, %v624
      %v1225 = vadd.f32 %v1224, 1e-05
      %v1226 = vrsqrt.pop %v1225
      %v1227 = vmul.f32 %v1219, %v1226
      %v1229 = vlaneseq
      %v1230 = vshrl.u32 %v1229, 7
      %v1231 = vsub.s32 0, %v1230
      %v1232 = vrot.slane %v1213, %v1231
      %v1234 = vmul.f32 %v1227, %v1232
      %v1236 = vlaneseq
      %v1237 = vshrl.u32 %v1236, 7
      %v1238 = vsub.s32 0, %v1237
      %v1239 = vrot.slane %v1214, %v1238
      %v1241 = vadd.f32 %v1234, %v1239
      %v1242 = vpack.c.bf16 %v1241, %v1241
      %v1243 = vld [vmem:[%s569] sm:$0xf]
      %v1244 = vld [vmem:[%s569 + $0x4] sm:$0xf]
      %v1245 = vld [vmem:[%s569 + $0x8] sm:$0xf]
      %v1246 = vld [vmem:[%s569 + $0xc] sm:$0xf]
      %v1251 = vunpack.c.l.b16 %v1243
      %v1252 = vunpack.c.l.b16 %v1244
      %v1253 = vunpack.c.l.b16 %v1245
      %v1254 = vunpack.c.l.b16 %v1246
      %v1255 = vpack.c.b16 %v1252, %v1251
      %v1256 = vpack.c.b16 %v1254, %v1253
      %v1260 = vsel %vm666, %v1242, 0
      %1262 = vmatprep.subr.bf16.mxu0 0
      %1263 = vmatpush1.bf16.msra.mxu0 %v1255
      %1264 = vmatprep.subr.bf16.mxu0 0
      %1265 = vmatpush1.bf16.msra.mxu0 %v1256
      %1266 = vmatprep.subr.bf16.mxu0 0
      %1267 = vmatpush1.bf16.msra.mxu0 0
      %1268 = vmatprep.subr.bf16.mxu0 0
      %1269 = vmatpush1.bf16.msra.mxu0 0
      %1270 = vmatprep.subr.bf16.mxu0 0
      %1271 = vmatpush1.bf16.msra.mxu0 0
      %1272 = vmatprep.subr.bf16.mxu0 0
      %1273 = vmatpush1.bf16.msra.mxu0 0
      %1274 = vmatprep.subr.bf16.mxu0 0
      %1275 = vmatpush1.bf16.msra.mxu0 0
      %1276 = vmatprep.subr.bf16.mxu0 0
      %1277 = vmatpush1.bf16.msra.mxu0 0
      %1278 = vmatprep.subr.bf16.mxu0 0
      %1279 = vmatpush1.bf16.msra.mxu0 0
      %1280 = vmatprep.subr.bf16.mxu0 0
      %1281 = vmatpush1.bf16.msra.mxu0 0
      %1282 = vmatprep.subr.bf16.mxu0 0
      %1283 = vmatpush1.bf16.msra.mxu0 0
      %1284 = vmatprep.subr.bf16.mxu0 0
      %1285 = vmatpush1.bf16.msra.mxu0 0
      %1286 = vmatprep.subr.bf16.mxu0 0
      %1287 = vmatpush1.bf16.msra.mxu0 0
      %1288 = vmatprep.subr.bf16.mxu0 0
      %1289 = vmatpush1.bf16.msra.mxu0 0
      %1290 = vmatprep.subr.bf16.mxu0 0
      %1291 = vmatpush1.bf16.msra.mxu0 0
      %1292 = vmatprep.subr.bf16.mxu0 0
      %1293 = vmatpush1.bf16.msra.mxu0 0
      %1294 = vmatprep.mubr.bf16.mxu0 0
      %1295 = vmatmul.mubr.bf16.gmra.mrb[0].mxu0 %v1260
      %v1296 = vpop.f32.mrb[0].mxu0
      %v1297 = vadd.f32 0.0, %v1296
      %v1298 = vpop.f32.mrb[0].mxu0
      %v1299 = vpop.f32.mrb[0].mxu0
      %v1300 = vpop.f32.mrb[0].mxu0
      %1301 = vdwg.mxu0
      %v1302 = vpack.c.bf16 %v1297, %v1297
      %1304 = vrot.lane.b32.xlu0 %v1302, 96
      %v1305 = vpop.permute.xlu0 %1304
      %v1307 = vsel %vm714, %v1302, 0
      %v1310 = vsel %vm714, %v1305, 0
      %1312 = vmatprep.subr.bf16.mxu0 0
      %1313 = vmatpush1.bf16.xpose.msra.mxu0 %v1310
      %1314 = vmatprep.subr.bf16.mxu0 0
      %1315 = vmatpush1.bf16.xpose.msra.mxu0 0
      %1316 = vmatprep.subr.bf16.mxu0 0
      %1317 = vmatpush1.bf16.xpose.msra.mxu0 0
      %1318 = vmatprep.subr.bf16.mxu0 0
      %1319 = vmatpush1.bf16.xpose.msra.mxu0 0
      %1320 = vmatprep.subr.bf16.mxu0 0
      %1321 = vmatpush1.bf16.xpose.msra.mxu0 0
      %1322 = vmatprep.subr.bf16.mxu0 0
      %1323 = vmatpush1.bf16.xpose.msra.mxu0 0
      %1324 = vmatprep.subr.bf16.mxu0 0
      %1325 = vmatpush1.bf16.xpose.msra.mxu0 0
      %1326 = vmatprep.subr.bf16.mxu0 0
      %1327 = vmatpush1.bf16.xpose.msra.mxu0 0
      %1328 = vmatprep.subr.bf16.mxu0 0
      %1329 = vmatpush1.bf16.xpose.msra.mxu0 0
      %1330 = vmatprep.subr.bf16.mxu0 0
      %1331 = vmatpush1.bf16.xpose.msra.mxu0 0
      %1332 = vmatprep.subr.bf16.mxu0 0
      %1333 = vmatpush1.bf16.xpose.msra.mxu0 0
      %1334 = vmatprep.subr.bf16.mxu0 0
      %1335 = vmatpush1.bf16.xpose.msra.mxu0 0
      %1336 = vmatprep.subr.bf16.mxu0 0
      %1337 = vmatpush1.bf16.xpose.msra.mxu0 0
      %1338 = vmatprep.subr.bf16.mxu0 0
      %1339 = vmatpush1.bf16.xpose.msra.mxu0 0
      %1340 = vmatprep.subr.bf16.mxu0 0
      %1341 = vmatpush1.bf16.xpose.msra.mxu0 0
      %1342 = vmatprep.subr.bf16.mxu0 0
      %1343 = vmatpush1.bf16.xpose.msra.mxu0 0
      %1344 = vmatprep.mubr.bf16.mxu0 0
      %1345 = vmatmul.mubr.bf16.gmra.mrb[0].mxu0 %v1307
      %v1346 = vpop.f32.mrb[0].mxu0
      %v1347 = vadd.f32 0.0, %v1346
      %v1348 = vpop.f32.mrb[0].mxu0
      %v1349 = vpop.f32.mrb[0].mxu0
      %v1350 = vpop.f32.mrb[0].mxu0
      %1351 = vdwg.mxu0
      %v1352 = vsel %vm761, %v1347, -inf
      %1353 = vmax.xlane.f32.xlu0 %v1352
      %v1354 = vpop.xlane.xlu0 %1353
      %v1355 = vsub.f32 %v1347, %v1354
      %v1356 = vmul.f32 %v1355, 1.442695
      %v1357 = vpow.pop %v1356
      %v1358 = vsel %vm761, %v1357, 0.0
      %1359 = vadd.xlane.f32.xlu0 %v1358
      %v1360 = vpop.xlane.xlu0 %1359
      %v1361 = vrcp.pop %v1360
      %v1362 = vmul.f32 %v1357, %v1361
      %v1363 = vpack.c.bf16 %v1362, %v1362
      %1364 = vrot.lane.b32.xlu0 %v1302, 64
      %v1365 = vpop.permute.xlu0 %1364
      %v1367 = vsel %vm776, %v1363, 0
      %v1370 = vand.u32 %v1365, %v783
      %1372 = vmatprep.subr.bf16.mxu0 0
      %1373 = vmatpush1.bf16.msra.mxu0 %v1370
      %1374 = vmatprep.subr.bf16.mxu0 0
      %1375 = vmatpush1.bf16.msra.mxu0 0
      %1376 = vmatprep.subr.bf16.mxu0 0
      %1377 = vmatpush1.bf16.msra.mxu0 0
      %1378 = vmatprep.subr.bf16.mxu0 0
      %1379 = vmatpush1.bf16.msra.mxu0 0
      %1380 = vmatprep.subr.bf16.mxu0 0
      %1381 = vmatpush1.bf16.msra.mxu0 0
      %1382 = vmatprep.subr.bf16.mxu0 0
      %1383 = vmatpush1.bf16.msra.mxu0 0
      %1384 = vmatprep.subr.bf16.mxu0 0
      %1385 = vmatpush1.bf16.msra.mxu0 0
      %1386 = vmatprep.subr.bf16.mxu0 0
      %1387 = vmatpush1.bf16.msra.mxu0 0
      %1388 = vmatprep.subr.bf16.mxu0 0
      %1389 = vmatpush1.bf16.msra.mxu0 0
      %1390 = vmatprep.subr.bf16.mxu0 0
      %1391 = vmatpush1.bf16.msra.mxu0 0
      %1392 = vmatprep.subr.bf16.mxu0 0
      %1393 = vmatpush1.bf16.msra.mxu0 0
      %1394 = vmatprep.subr.bf16.mxu0 0
      %1395 = vmatpush1.bf16.msra.mxu0 0
      %1396 = vmatprep.subr.bf16.mxu0 0
      %1397 = vmatpush1.bf16.msra.mxu0 0
      %1398 = vmatprep.subr.bf16.mxu0 0
      %1399 = vmatpush1.bf16.msra.mxu0 0
      %1400 = vmatprep.subr.bf16.mxu0 0
      %1401 = vmatpush1.bf16.msra.mxu0 0
      %1402 = vmatprep.subr.bf16.mxu0 0
      %1403 = vmatpush1.bf16.msra.mxu0 0
      %1404 = vmatprep.mubr.bf16.mxu0 0
      %1405 = vmatmul.mubr.bf16.gmra.mrb[0].mxu0 %v1367
      %v1406 = vpop.f32.mrb[0].mxu0
      %v1407 = vadd.f32 0.0, %v1406
      %v1408 = vpop.f32.mrb[0].mxu0
      %v1409 = vpop.f32.mrb[0].mxu0
      %v1410 = vpop.f32.mrb[0].mxu0
      %1411 = vdwg.mxu0
      %v1412 = vpack.c.bf16 %v1407, %v1407
      %v1413 = vld [vmem:[#allocation3] sm:$0x7]
      %v1414 = vsel %vm830, %v1412, %v1413
      %1415 = vst [vmem:[#allocation3] sm:$0x7] %v1414
      %1416 = vrot.lane.b32.xlu0 %v1302, 112
      %v1417 = vpop.permute.xlu0 %1416
      %1418 = vrot.lane.b32.xlu0 %v1302, 80
      %v1419 = vpop.permute.xlu0 %1418
      %v1421 = vsel %vm714, %v1417, 0
      %v1424 = vsel %vm714, %v1419, 0
      %1426 = vmatprep.subr.bf16.mxu0 0
      %1427 = vmatpush1.bf16.xpose.msra.mxu0 %v1424
      %1428 = vmatprep.subr.bf16.mxu0 0
      %1429 = vmatpush1.bf16.xpose.msra.mxu0 0
      %1430 = vmatprep.subr.bf16.mxu0 0
      %1431 = vmatpush1.bf16.xpose.msra.mxu0 0
      %1432 = vmatprep.subr.bf16.mxu0 0
      %1433 = vmatpush1.bf16.xpose.msra.mxu0 0
      %1434 = vmatprep.subr.bf16.mxu0 0
      %1435 = vmatpush1.bf16.xpose.msra.mxu0 0
      %1436 = vmatprep.subr.bf16.mxu0 0
      %1437 = vmatpush1.bf16.xpose.msra.mxu0 0
      %1438 = vmatprep.subr.bf16.mxu0 0
      %1439 = vmatpush1.bf16.xpose.msra.mxu0 0
      %1440 = vmatprep.subr.bf16.mxu0 0
      %1441 = vmatpush1.bf16.xpose.msra.mxu0 0
      %1442 = vmatprep.subr.bf16.mxu0 0
      %1443 = vmatpush1.bf16.xpose.msra.mxu0 0
      %1444 = vmatprep.subr.bf16.mxu0 0
      %1445 = vmatpush1.bf16.xpose.msra.mxu0 0
      %1446 = vmatprep.subr.bf16.mxu0 0
      %1447 = vmatpush1.bf16.xpose.msra.mxu0 0
      %1448 = vmatprep.subr.bf16.mxu0 0
      %1449 = vmatpush1.bf16.xpose.msra.mxu0 0
      %1450 = vmatprep.subr.bf16.mxu0 0
      %1451 = vmatpush1.bf16.xpose.msra.mxu0 0
      %1452 = vmatprep.subr.bf16.mxu0 0
      %1453 = vmatpush1.bf16.xpose.msra.mxu0 0
      %1454 = vmatprep.subr.bf16.mxu0 0
      %1455 = vmatpush1.bf16.xpose.msra.mxu0 0
      %1456 = vmatprep.subr.bf16.mxu0 0
      %1457 = vmatpush1.bf16.xpose.msra.mxu0 0
      %1458 = vmatprep.mubr.bf16.mxu0 0
      %1459 = vmatmul.mubr.bf16.gmra.mrb[0].mxu0 %v1421
      %v1460 = vpop.f32.mrb[0].mxu0
      %v1461 = vadd.f32 0.0, %v1460
      %v1462 = vpop.f32.mrb[0].mxu0
      %v1463 = vpop.f32.mrb[0].mxu0
      %v1464 = vpop.f32.mrb[0].mxu0
      %1465 = vdwg.mxu0
      %v1466 = vsel %vm761, %v1461, -inf
      %1467 = vmax.xlane.f32.xlu0 %v1466
      %v1468 = vpop.xlane.xlu0 %1467
      %v1469 = vsub.f32 %v1461, %v1468
      %v1470 = vmul.f32 %v1469, 1.442695
      %v1471 = vpow.pop %v1470
      %v1472 = vsel %vm761, %v1471, 0.0
      %1473 = vadd.xlane.f32.xlu0 %v1472
      %v1474 = vpop.xlane.xlu0 %1473
      %v1475 = vrcp.pop %v1474
      %v1476 = vmul.f32 %v1471, %v1475
      %v1477 = vpack.c.bf16 %v1476, %v1476
      %1478 = vrot.lane.b32.xlu0 %v1302, 48
      %v1479 = vpop.permute.xlu0 %1478
      %v1481 = vsel %vm776, %v1477, 0
      %v1484 = vand.u32 %v1479, %v783
      %1486 = vmatprep.subr.bf16.mxu0 0
      %1487 = vmatpush1.bf16.msra.mxu0 %v1484
      %1488 = vmatprep.subr.bf16.mxu0 0
      %1489 = vmatpush1.bf16.msra.mxu0 0
      %1490 = vmatprep.subr.bf16.mxu0 0
      %1491 = vmatpush1.bf16.msra.mxu0 0
      %1492 = vmatprep.subr.bf16.mxu0 0
      %1493 = vmatpush1.bf16.msra.mxu0 0
      %1494 = vmatprep.subr.bf16.mxu0 0
      %1495 = vmatpush1.bf16.msra.mxu0 0
      %1496 = vmatprep.subr.bf16.mxu0 0
      %1497 = vmatpush1.bf16.msra.mxu0 0
      %1498 = vmatprep.subr.bf16.mxu0 0
      %1499 = vmatpush1.bf16.msra.mxu0 0
      %1500 = vmatprep.subr.bf16.mxu0 0
      %1501 = vmatpush1.bf16.msra.mxu0 0
      %1502 = vmatprep.subr.bf16.mxu0 0
      %1503 = vmatpush1.bf16.msra.mxu0 0
      %1504 = vmatprep.subr.bf16.mxu0 0
      %1505 = vmatpush1.bf16.msra.mxu0 0
      %1506 = vmatprep.subr.bf16.mxu0 0
      %1507 = vmatpush1.bf16.msra.mxu0 0
      %1508 = vmatprep.subr.bf16.mxu0 0
      %1509 = vmatpush1.bf16.msra.mxu0 0
      %1510 = vmatprep.subr.bf16.mxu0 0
      %1511 = vmatpush1.bf16.msra.mxu0 0
      %1512 = vmatprep.subr.bf16.mxu0 0
      %1513 = vmatpush1.bf16.msra.mxu0 0
      %1514 = vmatprep.subr.bf16.mxu0 0
      %1515 = vmatpush1.bf16.msra.mxu0 0
      %1516 = vmatprep.subr.bf16.mxu0 0
      %1517 = vmatpush1.bf16.msra.mxu0 0
      %1518 = vmatprep.mubr.bf16.mxu0 0
      %1519 = vmatmul.mubr.bf16.gmra.mrb[0].mxu0 %v1481
      %v1520 = vpop.f32.mrb[0].mxu0
      %v1521 = vadd.f32 0.0, %v1520
      %v1522 = vpop.f32.mrb[0].mxu0
      %v1523 = vpop.f32.mrb[0].mxu0
      %v1524 = vpop.f32.mrb[0].mxu0
      %1525 = vdwg.mxu0
      %v1526 = vpack.c.bf16 %v1521, %v1521
      %v1528 = vunpack.c.l.b16 %v1526
      %v1529 = vpack.c.b16 %v1528, %v1528
      %1530 = vrot.lane.b32.xlu0 %v1529, 16
      %v1531 = vpop.permute.xlu0 %1530
      %v1533 = vld [vmem:[#allocation3] sm:$0x7]
      %v1534 = vsel %vm952, %v1531, %v1533
      %1535 = vst [vmem:[#allocation3] sm:$0x7] %v1534
      %v1536 = vld [vmem:[#allocation3] sm:$0x7]
      %v1537 = vld [vmem:[%s574] sm:$0xf]
      %v1538 = vld [vmem:[%s574 + $0x4] sm:$0xf]
      %v1539 = vld [vmem:[%s574 + $0x8] sm:$0xf]
      %v1540 = vld [vmem:[%s574 + $0xc] sm:$0xf]
      %v1541 = vld [vmem:[%s577] sm:$0x1]
      %v1543 = vlaneseq
      %v1544 = vshrl.u32 %v1543, 7
      %v1545 = vsub.s32 0, %v1544
      %v1546 = vrot.slane %v1541, %v1545
      %v1552 = vunpack.c.l.b16 %v1537
      %v1553 = vunpack.c.l.b16 %v1538
      %v1554 = vunpack.c.l.b16 %v1539
      %v1555 = vunpack.c.l.b16 %v1540
      %v1556 = vpack.c.b16 %v1553, %v1552
      %v1557 = vpack.c.b16 %v1555, %v1554
      %v1561 = vsel %vm666, %v1536, 0
      %1563 = vmatprep.subr.bf16.mxu0 0
      %1564 = vmatpush1.bf16.msra.mxu0 %v1556
      %1565 = vmatprep.subr.bf16.mxu0 0
      %1566 = vmatpush1.bf16.msra.mxu0 %v1557
      %1567 = vmatprep.subr.bf16.mxu0 0
      %1568 = vmatpush1.bf16.msra.mxu0 0
      %1569 = vmatprep.subr.bf16.mxu0 0
      %1570 = vmatpush1.bf16.msra.mxu0 0
      %1571 = vmatprep.subr.bf16.mxu0 0
      %1572 = vmatpush1.bf16.msra.mxu0 0
      %1573 = vmatprep.subr.bf16.mxu0 0
      %1574 = vmatpush1.bf16.msra.mxu0 0
      %1575 = vmatprep.subr.bf16.mxu0 0
      %1576 = vmatpush1.bf16.msra.mxu0 0
      %1577 = vmatprep.subr.bf16.mxu0 0
      %1578 = vmatpush1.bf16.msra.mxu0 0
      %1579 = vmatprep.subr.bf16.mxu0 0
      %1580 = vmatpush1.bf16.msra.mxu0 0
      %1581 = vmatprep.subr.bf16.mxu0 0
      %1582 = vmatpush1.bf16.msra.mxu0 0
      %1583 = vmatprep.subr.bf16.mxu0 0
      %1584 = vmatpush1.bf16.msra.mxu0 0
      %1585 = vmatprep.subr.bf16.mxu0 0
      %1586 = vmatpush1.bf16.msra.mxu0 0
      %1587 = vmatprep.subr.bf16.mxu0 0
      %1588 = vmatpush1.bf16.msra.mxu0 0
      %1589 = vmatprep.subr.bf16.mxu0 0
      %1590 = vmatpush1.bf16.msra.mxu0 0
      %1591 = vmatprep.subr.bf16.mxu0 0
      %1592 = vmatpush1.bf16.msra.mxu0 0
      %1593 = vmatprep.subr.bf16.mxu0 0
      %1594 = vmatpush1.bf16.msra.mxu0 0
      %1595 = vmatprep.mubr.bf16.mxu0 0
      %1596 = vmatmul.mubr.bf16.gmra.mrb[0].mxu0 %v1561
      %v1597 = vpop.f32.mrb[0].mxu0
      %v1598 = vadd.f32 %v1546, %v1597
      %v1599 = vpop.f32.mrb[0].mxu0
      %v1600 = vpop.f32.mrb[0].mxu0
      %v1601 = vpop.f32.mrb[0].mxu0
      %1602 = vdwg.mxu0
      %v1603 = vadd.f32 %v1212, %v1598
      %v1604 = vld [vmem:[%s580] sm:$0x1]
      %v1605 = vld [vmem:[%s583] sm:$0x1]
      %v1606 = vsel %vm620, %v1603, 0.0
      %1607 = vadd.xlane.f32.xlu0 %v1606
      %v1608 = vpop.xlane.xlu0 %1607
      %v1609 = vmul.f32 %v1608, %v624
      %v1610 = vsub.f32 %v1603, %v1609
      %v1611 = vmul.f32 %v1610, %v1610
      %v1612 = vsel %vm620, %v1611, 0.0
      %1613 = vadd.xlane.f32.xlu0 %v1612
      %v1614 = vpop.xlane.xlu0 %1613
      %v1615 = vmul.f32 %v1614, %v624
      %v1616 = vadd.f32 %v1615, 1e-05
      %v1617 = vrsqrt.pop %v1616
      %v1618 = vmul.f32 %v1610, %v1617
      %v1620 = vlaneseq
      %v1621 = vshrl.u32 %v1620, 7
      %v1622 = vsub.s32 0, %v1621
      %v1623 = vrot.slane %v1604, %v1622
      %v1625 = vmul.f32 %v1618, %v1623
      %v1627 = vlaneseq
      %v1628 = vshrl.u32 %v1627, 7
      %v1629 = vsub.s32 0, %v1628
      %v1630 = vrot.slane %v1605, %v1629
      %v1632 = vadd.f32 %v1625, %v1630
      %v1633 = vpack.c.bf16 %v1632, %v1632
      %v1634 = vld [vmem:[%s588] sm:$0xf]
      %v1635 = vld [vmem:[%s588 + $0x4] sm:$0xf]
      %v1636 = vld [vmem:[%s588 + $0x8] sm:$0xf]
      %v1637 = vld [vmem:[%s588 + $0xc] sm:$0xf]
      %v1638 = vld [vmem:[%s591] sm:$0x1]
      %v1640 = vlaneseq
      %v1641 = vshrl.u32 %v1640, 7
      %v1642 = vsub.s32 0, %v1641
      %v1643 = vrot.slane %v1638, %v1642
      %v1649 = vunpack.c.l.b16 %v1634
      %v1650 = vunpack.c.l.b16 %v1635
      %v1651 = vunpack.c.l.b16 %v1636
      %v1652 = vunpack.c.l.b16 %v1637
      %v1653 = vpack.c.b16 %v1650, %v1649
      %v1654 = vpack.c.b16 %v1652, %v1651
      %v1658 = vsel %vm666, %v1633, 0
      %1660 = vmatprep.subr.bf16.mxu0 0
      %1661 = vmatpush1.bf16.msra.mxu0 %v1653
      %1662 = vmatprep.subr.bf16.mxu0 0
      %1663 = vmatpush1.bf16.msra.mxu0 %v1654
      %1664 = vmatprep.subr.bf16.mxu0 0
      %1665 = vmatpush1.bf16.msra.mxu0 0
      %1666 = vmatprep.subr.bf16.mxu0 0
      %1667 = vmatpush1.bf16.msra.mxu0 0
      %1668 = vmatprep.subr.bf16.mxu0 0
      %1669 = vmatpush1.bf16.msra.mxu0 0
      %1670 = vmatprep.subr.bf16.mxu0 0
      %1671 = vmatpush1.bf16.msra.mxu0 0
      %1672 = vmatprep.subr.bf16.mxu0 0
      %1673 = vmatpush1.bf16.msra.mxu0 0
      %1674 = vmatprep.subr.bf16.mxu0 0
      %1675 = vmatpush1.bf16.msra.mxu0 0
      %1676 = vmatprep.subr.bf16.mxu0 0
      %1677 = vmatpush1.bf16.msra.mxu0 0
      %1678 = vmatprep.subr.bf16.mxu0 0
      %1679 = vmatpush1.bf16.msra.mxu0 0
      %1680 = vmatprep.subr.bf16.mxu0 0
      %1681 = vmatpush1.bf16.msra.mxu0 0
      %1682 = vmatprep.subr.bf16.mxu0 0
      %1683 = vmatpush1.bf16.msra.mxu0 0
      %1684 = vmatprep.subr.bf16.mxu0 0
      %1685 = vmatpush1.bf16.msra.mxu0 0
      %1686 = vmatprep.subr.bf16.mxu0 0
      %1687 = vmatpush1.bf16.msra.mxu0 0
      %1688 = vmatprep.subr.bf16.mxu0 0
      %1689 = vmatpush1.bf16.msra.mxu0 0
      %1690 = vmatprep.subr.bf16.mxu0 0
      %1691 = vmatpush1.bf16.msra.mxu0 0
      %1692 = vmatprep.mubr.bf16.mxu0 0
      %1693 = vmatmul.mubr.bf16.gmra.mrb[0].mxu0 %v1658
      %v1694 = vpop.f32.mrb[0].mxu0
      %v1695 = vadd.f32 %v1643, %v1694
      %v1696 = vpop.f32.mrb[0].mxu0
      %v1697 = vpop.f32.mrb[0].mxu0
      %v1698 = vpop.f32.mrb[0].mxu0
      %1699 = vdwg.mxu0
      %v1700 = vmul.f32 %v1695, 0.5
      %v1701 = vmul.f32 %v1695, 0.70710677
      %v1702 = verf.f32.pop %v1701
      %v1703 = vadd.f32 %v1702, 1.0
      %v1704 = vmul.f32 %v1700, %v1703
      %v1705 = vpack.c.bf16 %v1704, %v1704
      %v1706 = vld [vmem:[%s596] sm:$0xf]
      %v1707 = vld [vmem:[%s596 + $0x4] sm:$0xf]
      %v1708 = vld [vmem:[%s596 + $0x8] sm:$0xf]
      %v1709 = vld [vmem:[%s596 + $0xc] sm:$0xf]
      %v1710 = vld [vmem:[%s596 + $0x10] sm:$0xf]
      %v1711 = vld [vmem:[%s596 + $0x14] sm:$0xf]
      %v1712 = vld [vmem:[%s596 + $0x18] sm:$0xf]
      %v1713 = vld [vmem:[%s596 + $0x1c] sm:$0xf]
      %v1714 = vld [vmem:[%s599] sm:$0x1]
      %v1716 = vlaneseq
      %v1717 = vshrl.u32 %v1716, 7
      %v1718 = vsub.s32 0, %v1717
      %v1719 = vrot.slane %v1714, %v1718
      %v1729 = vunpack.c.l.b16 %v1706
      %v1730 = vunpack.c.l.b16 %v1707
      %v1731 = vunpack.c.l.b16 %v1708
      %v1732 = vunpack.c.l.b16 %v1709
      %v1733 = vunpack.c.l.b16 %v1710
      %v1734 = vunpack.c.l.b16 %v1711
      %v1735 = vunpack.c.l.b16 %v1712
      %v1736 = vunpack.c.l.b16 %v1713
      %v1737 = vpack.c.b16 %v1730, %v1729
      %v1738 = vpack.c.b16 %v1732, %v1731
      %v1739 = vpack.c.b16 %v1734, %v1733
      %v1740 = vpack.c.b16 %v1736, %v1735
      %v1746 = vsel %vm1165, %v1705, 0
      %1748 = vmatprep.subr.bf16.mxu0 0
      %1749 = vmatpush1.bf16.msra.mxu0 %v1737
      %1750 = vmatprep.subr.bf16.mxu0 0
      %1751 = vmatpush1.bf16.msra.mxu0 %v1738
      %1752 = vmatprep.subr.bf16.mxu0 0
      %1753 = vmatpush1.bf16.msra.mxu0 %v1739
      %1754 = vmatprep.subr.bf16.mxu0 0
      %1755 = vmatpush1.bf16.msra.mxu0 %v1740
      %1756 = vmatprep.subr.bf16.mxu0 0
      %1757 = vmatpush1.bf16.msra.mxu0 0
      %1758 = vmatprep.subr.bf16.mxu0 0
      %1759 = vmatpush1.bf16.msra.mxu0 0
      %1760 = vmatprep.subr.bf16.mxu0 0
      %1761 = vmatpush1.bf16.msra.mxu0 0
      %1762 = vmatprep.subr.bf16.mxu0 0
      %1763 = vmatpush1.bf16.msra.mxu0 0
      %1764 = vmatprep.subr.bf16.mxu0 0
      %1765 = vmatpush1.bf16.msra.mxu0 0
      %1766 = vmatprep.subr.bf16.mxu0 0
      %1767 = vmatpush1.bf16.msra.mxu0 0
      %1768 = vmatprep.subr.bf16.mxu0 0
      %1769 = vmatpush1.bf16.msra.mxu0 0
      %1770 = vmatprep.subr.bf16.mxu0 0
      %1771 = vmatpush1.bf16.msra.mxu0 0
      %1772 = vmatprep.subr.bf16.mxu0 0
      %1773 = vmatpush1.bf16.msra.mxu0 0
      %1774 = vmatprep.subr.bf16.mxu0 0
      %1775 = vmatpush1.bf16.msra.mxu0 0
      %1776 = vmatprep.subr.bf16.mxu0 0
      %1777 = vmatpush1.bf16.msra.mxu0 0
      %1778 = vmatprep.subr.bf16.mxu0 0
      %1779 = vmatpush1.bf16.msra.mxu0 0
      %1780 = vmatprep.mubr.bf16.mxu0 0
      %1781 = vmatmul.mubr.bf16.gmra.mrb[0].mxu0 %v1746
      %v1782 = vpop.f32.mrb[0].mxu0
      %v1783 = vadd.f32 %v1719, %v1782
      %v1784 = vpop.f32.mrb[0].mxu0
      %v1785 = vpop.f32.mrb[0].mxu0
      %v1786 = vpop.f32.mrb[0].mxu0
      %1787 = vdwg.mxu0
      %v1788 = vadd.f32 %v1603, %v1783
      %1789 = vst.msk [vmem:[%s1211] sm:$0x1f] %vm620, %v1788
      %p1790 = scmp.eq.s32.totalorder %s28, 1
      // Predicated region
      $region73: #{_lambda_.4} parent=67 // pred_check
        %p1791 = pneg %p1790
      $region74: #{_lambda_.4} parent=67 // pred_check_branch
        %1793 = sbr.rel (%p1791) target = $region76
      $region75: #{_lambda_.4} parent=67 // pred_region
        %v1794 = vld [vmem:[#allocation2] sm:$0x1]
        %v1795 = vld [vmem:[#allocation2 + $0x8] sm:$0x1]
        %vm1796 = vcmask 253952
        %1797 = vst.msk [vmem:[%s603] sm:$0x1] %vm1796, %v1794
        %1798 = vst.msk [vmem:[%s603 + $0x1] sm:$0x1] %vm1796, %v1795
      $region76: #{_lambda_.4} parent=67 // pred_fallthru
        _
      %s1799 = smul.u32 2, %s27
      %p1800 = scmp.lt.s32.totalorder %s1799, 1
      %s1801 = scalar_select %p1800, %s1799, 1
      %s1802 = scalar_lea.vmem %s12, %s1801
      // Predicated region
      $region77: #{_lambda_.4} parent=67 // pred_check
        %p1803 = pneg %p365
      $region78: #{_lambda_.4} parent=67 // pred_check_branch
        %1805 = sbr.rel (%p1803) target = $region80
      $region79: #{_lambda_.4} parent=67 // pred_region
        %s1806 = smul.u32 2, %s27
      $region80: #{_lambda_.4} parent=67 // pred_fallthru
        _
      // Predicated region
      $region81: #{_lambda_.4} parent=67 // pred_check
        %p1807 = pneg %p365
      $region82: #{_lambda_.4} parent=67 // pred_check_branch
        %1809 = sbr.rel (%p1807) target = $region84
      $region83: #{_lambda_.4} parent=67 // pred_region
        %s1810 = smul.u32 2, %s27
        %p1811 = scmp.lt.s32.totalorder %s1810, 1
        %s1812 = scalar_select %p1811, %s1810, 1
        %s1813 = scalar_lea.vmem %s12, %s1812
      $region84: #{_lambda_.4} parent=67 // pred_fallthru
        _
    $region68: #{_lambda_.4} parent=5 // pred_fallthru
      _
    %p1814 = scmp.le.s32.totalorder 2, %s18
    // Predicated region
    $region85: #{_lambda_.4} parent=5 // pred_check
      %p1815 = pneg %p1814
    $region86: #{_lambda_.4} parent=5 // pred_check_branch
      %1817 = sbr.rel (%p1815) target = $region88
    $region87: #{_lambda_.4} parent=5 // pred_region
      %s1818 = ssub.s32 %s18, 2
    $region88: #{_lambda_.4} parent=5 // pred_fallthru
      _
  $region6: #{_lambda_.4} parent=0 // loop_footer
    %s22 = sadd.s32 1, %s18
  $region7: #{_lambda_.4} parent=0 // loop_footer_branch
    %17 = sbr.rel target = $region3
  $region8: #{_lambda_.4} parent=0 // loop_exit
    _

</llo_original>
